<compile_context>
chip_gen: v6e
topology: v6e:2x2x1
jax: 0.10.0
libtpu: 0.0.40
codegen_flags: <defaults>
</compile_context>

<pallas_src>
import functools

import jax
import jax.numpy as jnp
from jax.experimental import pallas as pl
from jax.experimental.pallas import tpu as pltpu  # noqa: F401  (TPU backend)

EPS = 1e-5


# --------------------------- in-kernel helpers ------------------------------

def _bn_train(x):
    """Train-mode BatchNorm over rows (rows = N*H*W), gamma=1, beta=0.

    Single-pass sum / sum-of-squares; biased variance (PyTorch train mode)."""
    inv_m = 1.0 / float(x.shape[0])
    s = jnp.sum(x, axis=0, keepdims=True)
    ss = jnp.sum(x * x, axis=0, keepdims=True)
    mean = s * inv_m
    var = jnp.maximum(ss * inv_m - mean * mean, 0.0)
    return (x - mean) * jax.lax.rsqrt(var + EPS)


# ----------------------------- Pallas kernels -------------------------------

def _conv1_bn_kernel(x_ref, w_ref, o_ref):
    # 1x1 conv fused with bn1.  conv1's bias is dropped: it is a per-channel
    # constant that the immediately following train-mode BN cancels exactly.
    v = jnp.dot(x_ref[...], w_ref[...], preferred_element_type=jnp.float32)
    o_ref[...] = _bn_train(v)


def _matmul_bias_kernel(x_ref, w_ref, b_ref, o_ref):
    # conv2 hot path (after im2col): o = x @ w + b
    o_ref[...] = (
        jnp.dot(x_ref[...], w_ref[...], preferred_element_type=jnp.float32)
        + b_ref[...]
    )


def _block_kernel(p_ref, w_ref, v_ref, o_ref, *, final_add):
    # Fused residual block:
    #   conv  = patches @ W_sum              (branch convs algebraically fused,
    #                                          biases dropped: BN cancels them)
    #   t     = v + BN(conv)                 (v8 / v15 / v23)
    #   bn_t  = BN(t)                        (v9 / v16 / v24)
    #   out   = bn_t            (block 1)  or  t + bn_t   (blocks 2 and 3)
    conv = jnp.dot(p_ref[...], w_ref[...], preferred_element_type=jnp.float32)
    t = v_ref[...] + _bn_train(conv)
    bn_t = _bn_train(t)
    o_ref[...] = (t + bn_t) if final_add else bn_t


# ------------------------------- JAX glue -----------------------------------

def _im2col(x_nhwc, kh, kw, pad):
    n, h, w, c = x_nhwc.shape
    xp = jnp.pad(x_nhwc, ((0, 0), (pad, pad), (pad, pad), (0, 0)))
    ho = h + 2 * pad - kh + 1
    wo = w + 2 * pad - kw + 1
    cols = [xp[:, dy:dy + ho, dx:dx + wo, :]
            for dy in range(kh) for dx in range(kw)]
    patches = jnp.concatenate(cols, axis=-1)            # (N, Ho, Wo, kh*kw*C)
    return patches.reshape(n * ho * wo, kh * kw * c), (n, ho, wo)


def conv1_bn(x_nhwc, w_hwio):
    n, h, w, cin = x_nhwc.shape
    cout = w_hwio.shape[-1]
    y = pl.pallas_call(
        _conv1_bn_kernel,
        out_shape=jax.ShapeDtypeStruct((n * h * w, cout), jnp.float32),
    )(x_nhwc.reshape(n * h * w, cin), w_hwio.reshape(cin, cout))
    return y.reshape(n, h, w, cout)


def conv2d_bias(x_nhwc, w_hwio, b, pad):
    kh, kw, cin, cout = w_hwio.shape
    patches, (n, ho, wo) = _im2col(x_nhwc, kh, kw, pad)
    y = pl.pallas_call(
        _matmul_bias_kernel,
        out_shape=jax.ShapeDtypeStruct((patches.shape[0], cout), jnp.float32),
    )(patches, w_hwio.reshape(kh * kw * cin, cout), b.reshape(1, cout))
    return y.reshape(n, ho, wo, cout)


def fused_block(v_nhwc, w_branch_flat, *, final_add):
    n, h, w, c = v_nhwc.shape
    patches, _ = _im2col(v_nhwc, 3, 3, 1)               # (M, 9*C)
    out = pl.pallas_call(
        functools.partial(_block_kernel, final_add=final_add),
        out_shape=jax.ShapeDtypeStruct((n * h * w, c), jnp.float32),
    )(patches, w_branch_flat, v_nhwc.reshape(n * h * w, c))
    return out.reshape(n, h, w, c)


# --------------------------------- Model ------------------------------------

def _init_conv(key, kh, kw, cin, cout):
    kw_key, kb_key = jax.random.split(key)
    fan_in = cin * kh * kw
    bound = 1.0 / float(fan_in) ** 0.5
    w = jax.random.uniform(kw_key, (kh, kw, cin, cout), jnp.float32,
                           -bound, bound)
    b = jax.random.uniform(kb_key, (cout,), jnp.float32, -bound, bound)
    return w, b


def init_params(key):
    keys = jax.random.split(key, 6)
    p = {}
    p["w1"], p["b1"] = _init_conv(keys[0], 1, 1, 3, 8)    # conv1: 1x1, 3->8
    p["w2"], p["b2"] = _init_conv(keys[1], 4, 4, 8, 16)   # conv2: 4x4, 8->16
    # conv3..conv6 sanitized to 16->16 3x3 (see header comment)
    for i in range(3, 7):
        p[f"w{i}"], p[f"b{i}"] = _init_conv(keys[i - 1], 3, 3, 16, 16)
    return p


def forward(x1_nchw, p):
    x = jnp.transpose(x1_nchw, (0, 2, 3, 1)).astype(jnp.float32)   # -> NHWC

    # conv1 (+ bn1) fused in one kernel; b1 dropped (cancelled by bn1).
    bn1 = conv1_bn(x, p["w1"])
    # conv2 keeps its bias (v2 participates in residual adds, not only BN).
    v2 = conv2d_bias(bn1, p["w2"], p["b2"], pad=1)

    # Algebraic branch fusion: sum_i conv_i(v) == conv(v, sum_i w_i).
    # Branch biases b3..b6 are dropped: the BN right after the sum cancels them.
    w_branch = (p["w3"] + p["w4"] + p["w5"] + p["w6"]).reshape(9 * 16, 16)

    v9 = fused_block(v2, w_branch, final_add=False)     # v3..v9
    v17 = fused_block(v9, w_branch, final_add=True)     # v10..v17
    v25 = fused_block(v17, w_branch, final_add=True)    # v18..v25 (sanitized)

    return jnp.transpose(v25, (0, 3, 1, 2))             # back to NCHW


if __name__ == "__main__":
    root = jax.random.PRNGKey(0)
    pkey, xkey = jax.random.split(root)
    params = init_params(pkey)

    # small input consistent with the module (original was (1, 3, 64, 64))
    x1 = jax.random.normal(xkey, (2, 3, 16, 16), jnp.float32)

    out = jax.block_until_ready(jax.jit(forward)(x1, params))

    # conv2 (4x4, pad 1) shrinks 16 -> 15 spatially; channels = 16
    assert out.shape == (2, 16, 15, 15), out.shape
    assert out.dtype == jnp.float32
    assert bool(jnp.all(jnp.isfinite(out)))
    print("KERNEL_OK")
</pallas_src>

<mosaic_0001>
module attributes {stable_mosaic.version = 11 : i64} {
  func.func @_conv1_bn_kernel(%arg0: memref<512x3xf32, #tpu.memory_space<vmem>>, %arg1: memref<3x8xf32, #tpu.memory_space<vmem>>, %arg2: memref<512x8xf32, #tpu.memory_space<vmem>>) attributes {dimension_semantics = [], scalar_prefetch = 0 : i64, scratch_operands = 0 : i64, tpu.core_type = #tpu.core_type<tc>} {
    %c0 = arith.constant 0 : index
    %c0_0 = arith.constant 0 : index
    %0 = vector.load %arg0[%c0, %c0_0] : memref<512x3xf32, #tpu.memory_space<vmem>>, vector<512x3xf32>
    %c0_1 = arith.constant 0 : index
    %c0_2 = arith.constant 0 : index
    %1 = vector.load %arg1[%c0_1, %c0_2] : memref<3x8xf32, #tpu.memory_space<vmem>>, vector<3x8xf32>
    %cst = arith.constant dense<0.000000e+00> : vector<512x8xf32>
    %2 = tpu.matmul %0, %1, %cst {dimension_numbers = #tpu.dot_dimension_numbers<[1], [0], [0], [1], [0, 0, 1, 1], [], []>} : vector<512x3xf32>, vector<3x8xf32>, vector<512x8xf32> -> vector<512x8xf32>
    %cst_3 = arith.constant dense<0.000000e+00> : vector<8xf32>
    %3 = vector.multi_reduction <add>, %2, %cst_3 [0] : vector<512x8xf32> to vector<8xf32>
    %4 = vector.shape_cast %3 : vector<8xf32> to vector<1x8xf32>
    %5 = arith.mulf %2, %2 : vector<512x8xf32>
    %cst_4 = arith.constant dense<0.000000e+00> : vector<8xf32>
    %6 = vector.multi_reduction <add>, %5, %cst_4 [0] : vector<512x8xf32> to vector<8xf32>
    %7 = vector.shape_cast %6 : vector<8xf32> to vector<1x8xf32>
    %cst_5 = arith.constant 0.001953125 : f32
    %8 = vector.broadcast %cst_5 : f32 to vector<1x8xf32>
    %9 = arith.mulf %4, %8 : vector<1x8xf32>
    %cst_6 = arith.constant 0.001953125 : f32
    %10 = vector.broadcast %cst_6 : f32 to vector<1x8xf32>
    %11 = arith.mulf %7, %10 : vector<1x8xf32>
    %12 = arith.mulf %9, %9 : vector<1x8xf32>
    %13 = arith.subf %11, %12 : vector<1x8xf32>
    %cst_7 = arith.constant 0.000000e+00 : f32
    %14 = vector.broadcast %cst_7 : f32 to vector<1x8xf32>
    %15 = arith.maximumf %13, %14 : vector<1x8xf32>
    %16 = vector.broadcast %9 : vector<1x8xf32> to vector<512x8xf32>
    %17 = arith.subf %2, %16 : vector<512x8xf32>
    %cst_8 = arith.constant 9.99999974E-6 : f32
    %18 = vector.broadcast %cst_8 : f32 to vector<1x8xf32>
    %19 = arith.addf %15, %18 : vector<1x8xf32>
    %20 = math.rsqrt %19 : vector<1x8xf32>
    %21 = vector.broadcast %20 : vector<1x8xf32> to vector<512x8xf32>
    %22 = arith.mulf %17, %21 : vector<512x8xf32>
    %c0_9 = arith.constant 0 : index
    %c0_10 = arith.constant 0 : index
    %23 = vector.load %arg2[%c0_9, %c0_10] : memref<512x8xf32, #tpu.memory_space<vmem>>, vector<512x8xf32>
    tpu.vector_store %arg2[%c0_9, %c0_10], %22 {strides = array<i32>} : memref<512x8xf32, #tpu.memory_space<vmem>>, vector<512x8xf32>,
    return
  }
}

module attributes {stable_mosaic.version = 11 : i64} {
  func.func @_matmul_bias_kernel(%arg0: memref<450x128xf32, #tpu.memory_space<vmem>>, %arg1: memref<128x16xf32, #tpu.memory_space<vmem>>, %arg2: memref<1x16xf32, #tpu.memory_space<vmem>>, %arg3: memref<450x16xf32, #tpu.memory_space<vmem>>) attributes {dimension_semantics = [], scalar_prefetch = 0 : i64, scratch_operands = 0 : i64, tpu.core_type = #tpu.core_type<tc>} {
    %c0 = arith.constant 0 : index
    %c0_0 = arith.constant 0 : index
    %0 = vector.load %arg0[%c0, %c0_0] : memref<450x128xf32, #tpu.memory_space<vmem>>, vector<450x128xf32>
    %c0_1 = arith.constant 0 : index
    %c0_2 = arith.constant 0 : index
    %1 = vector.load %arg1[%c0_1, %c0_2] : memref<128x16xf32, #tpu.memory_space<vmem>>, vector<128x16xf32>
    %cst = arith.constant dense<0.000000e+00> : vector<450x16xf32>
    %2 = tpu.matmul %0, %1, %cst {dimension_numbers = #tpu.dot_dimension_numbers<[1], [0], [0], [1], [0, 0, 1, 1], [], []>} : vector<450x128xf32>, vector<128x16xf32>, vector<450x16xf32> -> vector<450x16xf32>
    %c0_3 = arith.constant 0 : index
    %c0_4 = arith.constant 0 : index
    %3 = vector.load %arg2[%c0_3, %c0_4] : memref<1x16xf32, #tpu.memory_space<vmem>>, vector<1x16xf32>
    %4 = vector.broadcast %3 : vector<1x16xf32> to vector<450x16xf32>
    %5 = arith.addf %2, %4 : vector<450x16xf32>
    %c0_5 = arith.constant 0 : index
    %c0_6 = arith.constant 0 : index
    %6 = vector.load %arg3[%c0_5, %c0_6] : memref<450x16xf32, #tpu.memory_space<vmem>>, vector<450x16xf32>
    tpu.vector_store %arg3[%c0_5, %c0_6], %5 {strides = array<i32>} : memref<450x16xf32, #tpu.memory_space<vmem>>, vector<450x16xf32>,
    return
  }
}

module attributes {stable_mosaic.version = 11 : i64} {
  func.func @_block_kernel(%arg0: memref<450x144xf32, #tpu.memory_space<vmem>>, %arg1: memref<144x16xf32, #tpu.memory_space<vmem>>, %arg2: memref<450x16xf32, #tpu.memory_space<vmem>>, %arg3: memref<450x16xf32, #tpu.memory_space<vmem>>) attributes {dimension_semantics = [], scalar_prefetch = 0 : i64, scratch_operands = 0 : i64, tpu.core_type = #tpu.core_type<tc>} {
    %c0 = arith.constant 0 : index
    %c0_0 = arith.constant 0 : index
    %0 = vector.load %arg0[%c0, %c0_0] : memref<450x144xf32, #tpu.memory_space<vmem>>, vector<450x144xf32>
    %c0_1 = arith.constant 0 : index
    %c0_2 = arith.constant 0 : index
    %1 = vector.load %arg1[%c0_1, %c0_2] : memref<144x16xf32, #tpu.memory_space<vmem>>, vector<144x16xf32>
    %cst = arith.constant dense<0.000000e+00> : vector<450x16xf32>
    %2 = tpu.matmul %0, %1, %cst {dimension_numbers = #tpu.dot_dimension_numbers<[1], [0], [0], [1], [0, 0, 1, 1], [], []>} : vector<450x144xf32>, vector<144x16xf32>, vector<450x16xf32> -> vector<450x16xf32>
    %c0_3 = arith.constant 0 : index
    %c0_4 = arith.constant 0 : index
    %3 = vector.load %arg2[%c0_3, %c0_4] : memref<450x16xf32, #tpu.memory_space<vmem>>, vector<450x16xf32>
    %cst_5 = arith.constant dense<0.000000e+00> : vector<16xf32>
    %4 = vector.multi_reduction <add>, %2, %cst_5 [0] : vector<450x16xf32> to vector<16xf32>
    %5 = vector.shape_cast %4 : vector<16xf32> to vector<1x16xf32>
    %6 = arith.mulf %2, %2 : vector<450x16xf32>
    %cst_6 = arith.constant dense<0.000000e+00> : vector<16xf32>
    %7 = vector.multi_reduction <add>, %6, %cst_6 [0] : vector<450x16xf32> to vector<16xf32>
    %8 = vector.shape_cast %7 : vector<16xf32> to vector<1x16xf32>
    %cst_7 = arith.constant 0.00222222228 : f32
    %9 = vector.broadcast %cst_7 : f32 to vector<1x16xf32>
    %10 = arith.mulf %5, %9 : vector<1x16xf32>
    %cst_8 = arith.constant 0.00222222228 : f32
    %11 = vector.broadcast %cst_8 : f32 to vector<1x16xf32>
    %12 = arith.mulf %8, %11 : vector<1x16xf32>
    %13 = arith.mulf %10, %10 : vector<1x16xf32>
    %14 = arith.subf %12, %13 : vector<1x16xf32>
    %cst_9 = arith.constant 0.000000e+00 : f32
    %15 = vector.broadcast %cst_9 : f32 to vector<1x16xf32>
    %16 = arith.maximumf %14, %15 : vector<1x16xf32>
    %17 = vector.broadcast %10 : vector<1x16xf32> to vector<450x16xf32>
    %18 = arith.subf %2, %17 : vector<450x16xf32>
    %cst_10 = arith.constant 9.99999974E-6 : f32
    %19 = vector.broadcast %cst_10 : f32 to vector<1x16xf32>
    %20 = arith.addf %16, %19 : vector<1x16xf32>
    %21 = math.rsqrt %20 : vector<1x16xf32>
    %22 = vector.broadcast %21 : vector<1x16xf32> to vector<450x16xf32>
    %23 = arith.mulf %18, %22 : vector<450x16xf32>
    %24 = arith.addf %3, %23 : vector<450x16xf32>
    %cst_11 = arith.constant dense<0.000000e+00> : vector<16xf32>
    %25 = vector.multi_reduction <add>, %24, %cst_11 [0] : vector<450x16xf32> to vector<16xf32>
    %26 = vector.shape_cast %25 : vector<16xf32> to vector<1x16xf32>
    %27 = arith.mulf %24, %24 : vector<450x16xf32>
    %cst_12 = arith.constant dense<0.000000e+00> : vector<16xf32>
    %28 = vector.multi_reduction <add>, %27, %cst_12 [0] : vector<450x16xf32> to vector<16xf32>
    %29 = vector.shape_cast %28 : vector<16xf32> to vector<1x16xf32>
    %cst_13 = arith.constant 0.00222222228 : f32
    %30 = vector.broadcast %cst_13 : f32 to vector<1x16xf32>
    %31 = arith.mulf %26, %30 : vector<1x16xf32>
    %cst_14 = arith.constant 0.00222222228 : f32
    %32 = vector.broadcast %cst_14 : f32 to vector<1x16xf32>
    %33 = arith.mulf %29, %32 : vector<1x16xf32>
    %34 = arith.mulf %31, %31 : vector<1x16xf32>
    %35 = arith.subf %33, %34 : vector<1x16xf32>
    %cst_15 = arith.constant 0.000000e+00 : f32
    %36 = vector.broadcast %cst_15 : f32 to vector<1x16xf32>
    %37 = arith.maximumf %35, %36 : vector<1x16xf32>
    %38 = vector.broadcast %31 : vector<1x16xf32> to vector<450x16xf32>
    %39 = arith.subf %24, %38 : vector<450x16xf32>
    %cst_16 = arith.constant 9.99999974E-6 : f32
    %40 = vector.broadcast %cst_16 : f32 to vector<1x16xf32>
    %41 = arith.addf %37, %40 : vector<1x16xf32>
    %42 = math.rsqrt %41 : vector<1x16xf32>
    %43 = vector.broadcast %42 : vector<1x16xf32> to vector<450x16xf32>
    %44 = arith.mulf %39, %43 : vector<450x16xf32>
    %c0_17 = arith.constant 0 : index
    %c0_18 = arith.constant 0 : index
    %45 = vector.load %arg3[%c0_17, %c0_18] : memref<450x16xf32, #tpu.memory_space<vmem>>, vector<450x16xf32>
    tpu.vector_store %arg3[%c0_17, %c0_18], %44 {strides = array<i32>} : memref<450x16xf32, #tpu.memory_space<vmem>>, vector<450x16xf32>,
    return
  }
}

module attributes {stable_mosaic.version = 11 : i64} {
  func.func @_block_kernel(%arg0: memref<450x144xf32, #tpu.memory_space<vmem>>, %arg1: memref<144x16xf32, #tpu.memory_space<vmem>>, %arg2: memref<450x16xf32, #tpu.memory_space<vmem>>, %arg3: memref<450x16xf32, #tpu.memory_space<vmem>>) attributes {dimension_semantics = [], scalar_prefetch = 0 : i64, scratch_operands = 0 : i64, tpu.core_type = #tpu.core_type<tc>} {
    %c0 = arith.constant 0 : index
    %c0_0 = arith.constant 0 : index
    %0 = vector.load %arg0[%c0, %c0_0] : memref<450x144xf32, #tpu.memory_space<vmem>>, vector<450x144xf32>
    %c0_1 = arith.constant 0 : index
    %c0_2 = arith.constant 0 : index
    %1 = vector.load %arg1[%c0_1, %c0_2] : memref<144x16xf32, #tpu.memory_space<vmem>>, vector<144x16xf32>
    %cst = arith.constant dense<0.000000e+00> : vector<450x16xf32>
    %2 = tpu.matmul %0, %1, %cst {dimension_numbers = #tpu.dot_dimension_numbers<[1], [0], [0], [1], [0, 0, 1, 1], [], []>} : vector<450x144xf32>, vector<144x16xf32>, vector<450x16xf32> -> vector<450x16xf32>
    %c0_3 = arith.constant 0 : index
    %c0_4 = arith.constant 0 : index
    %3 = vector.load %arg2[%c0_3, %c0_4] : memref<450x16xf32, #tpu.memory_space<vmem>>, vector<450x16xf32>
    %cst_5 = arith.constant dense<0.000000e+00> : vector<16xf32>
    %4 = vector.multi_reduction <add>, %2, %cst_5 [0] : vector<450x16xf32> to vector<16xf32>
    %5 = vector.shape_cast %4 : vector<16xf32> to vector<1x16xf32>
    %6 = arith.mulf %2, %2 : vector<450x16xf32>
    %cst_6 = arith.constant dense<0.000000e+00> : vector<16xf32>
    %7 = vector.multi_reduction <add>, %6, %cst_6 [0] : vector<450x16xf32> to vector<16xf32>
    %8 = vector.shape_cast %7 : vector<16xf32> to vector<1x16xf32>
    %cst_7 = arith.constant 0.00222222228 : f32
    %9 = vector.broadcast %cst_7 : f32 to vector<1x16xf32>
    %10 = arith.mulf %5, %9 : vector<1x16xf32>
    %cst_8 = arith.constant 0.00222222228 : f32
    %11 = vector.broadcast %cst_8 : f32 to vector<1x16xf32>
    %12 = arith.mulf %8, %11 : vector<1x16xf32>
    %13 = arith.mulf %10, %10 : vector<1x16xf32>
    %14 = arith.subf %12, %13 : vector<1x16xf32>
    %cst_9 = arith.constant 0.000000e+00 : f32
    %15 = vector.broadcast %cst_9 : f32 to vector<1x16xf32>
    %16 = arith.maximumf %14, %15 : vector<1x16xf32>
    %17 = vector.broadcast %10 : vector<1x16xf32> to vector<450x16xf32>
    %18 = arith.subf %2, %17 : vector<450x16xf32>
    %cst_10 = arith.constant 9.99999974E-6 : f32
    %19 = vector.broadcast %cst_10 : f32 to vector<1x16xf32>
    %20 = arith.addf %16, %19 : vector<1x16xf32>
    %21 = math.rsqrt %20 : vector<1x16xf32>
    %22 = vector.broadcast %21 : vector<1x16xf32> to vector<450x16xf32>
    %23 = arith.mulf %18, %22 : vector<450x16xf32>
    %24 = arith.addf %3, %23 : vector<450x16xf32>
    %cst_11 = arith.constant dense<0.000000e+00> : vector<16xf32>
    %25 = vector.multi_reduction <add>, %24, %cst_11 [0] : vector<450x16xf32> to vector<16xf32>
    %26 = vector.shape_cast %25 : vector<16xf32> to vector<1x16xf32>
    %27 = arith.mulf %24, %24 : vector<450x16xf32>
    %cst_12 = arith.constant dense<0.000000e+00> : vector<16xf32>
    %28 = vector.multi_reduction <add>, %27, %cst_12 [0] : vector<450x16xf32> to vector<16xf32>
    %29 = vector.shape_cast %28 : vector<16xf32> to vector<1x16xf32>
    %cst_13 = arith.constant 0.00222222228 : f32
    %30 = vector.broadcast %cst_13 : f32 to vector<1x16xf32>
    %31 = arith.mulf %26, %30 : vector<1x16xf32>
    %cst_14 = arith.constant 0.00222222228 : f32
    %32 = vector.broadcast %cst_14 : f32 to vector<1x16xf32>
    %33 = arith.mulf %29, %32 : vector<1x16xf32>
    %34 = arith.mulf %31, %31 : vector<1x16xf32>
    %35 = arith.subf %33, %34 : vector<1x16xf32>
    %cst_15 = arith.constant 0.000000e+00 : f32
    %36 = vector.broadcast %cst_15 : f32 to vector<1x16xf32>
    %37 = arith.maximumf %35, %36 : vector<1x16xf32>
    %38 = vector.broadcast %31 : vector<1x16xf32> to vector<450x16xf32>
    %39 = arith.subf %24, %38 : vector<450x16xf32>
    %cst_16 = arith.constant 9.99999974E-6 : f32
    %40 = vector.broadcast %cst_16 : f32 to vector<1x16xf32>
    %41 = arith.addf %37, %40 : vector<1x16xf32>
    %42 = math.rsqrt %41 : vector<1x16xf32>
    %43 = vector.broadcast %42 : vector<1x16xf32> to vector<450x16xf32>
    %44 = arith.mulf %39, %43 : vector<450x16xf32>
    %45 = arith.addf %24, %44 : vector<450x16xf32>
    %c0_17 = arith.constant 0 : index
    %c0_18 = arith.constant 0 : index
    %46 = vector.load %arg3[%c0_17, %c0_18] : memref<450x16xf32, #tpu.memory_space<vmem>>, vector<450x16xf32>
    tpu.vector_store %arg3[%c0_17, %c0_18], %45 {strides = array<i32>} : memref<450x16xf32, #tpu.memory_space<vmem>>, vector<450x16xf32>,
    return
  }
}

</mosaic_0001>

<llo_original>
// kernel: forward.5
$region0: #{forward.5}
  #allocation0 [shape = 'u32[]', space=smem, size = 0x4, offset = 0x4, fixed_abs, tag = 'smem constant byte address 0x4 - core index']
  #allocation1 [shape = 'u32[144,128]{1,0:T(1,128)}', space=vmem, size = 0x12000, scoped, tag = 'internal scratch']
  %s0 = inlined_call_operand.vmem [shape: f32[512,3], index: 0, kind: input, shape index: {}]
  %s1 = inlined_call_operand.vmem [shape: f32[3,8], index: 1, kind: input, shape index: {}]
  %s2 = inlined_call_operand.vmem [shape: f32[512,8], index: 2, kind: output, shape index: {}]
  %s3 = sld [smem:[#allocation0]]
  $region18: #{forward.5} parent=0
    _
  %s5 = ssub.s32 1, %s3
  %s6 = scalar_select 0, %s5, %s3
  // Predicated region
  $region2: #{forward.5} parent=0 // pred_check
    _
  $region3: #{forward.5} parent=0 // pred_check_branch
    %8 = sbr.rel (0) target = $region5
  $region4: #{forward.5} parent=0 // pred_region
    _
  $region5: #{forward.5} parent=0 // pred_fallthru
    _
  // Predicated region
  $region6: #{forward.5} parent=0 // pred_check
    _
  $region7: #{forward.5} parent=0 // pred_check_branch
    %10 = sbr.rel (0) target = $region9
  $region8: #{forward.5} parent=0 // pred_region
    _
  $region9: #{forward.5} parent=0 // pred_fallthru
    _
  %v11 = vld [vmem:[%s0] sm:$0xff]
  %v12 = vld [vmem:[%s0 + $0x8] sm:$0xff]
  %v13 = vld [vmem:[%s0 + $0x10] sm:$0xff]
  %v14 = vld [vmem:[%s0 + $0x18] sm:$0xff]
  %v15 = vld [vmem:[%s0 + $0x20] sm:$0xff]
  %v16 = vld [vmem:[%s0 + $0x28] sm:$0xff]
  %v17 = vld [vmem:[%s0 + $0x30] sm:$0xff]
  %v18 = vld [vmem:[%s0 + $0x38] sm:$0xff]
  %v19 = vld [vmem:[%s0 + $0x40] sm:$0xff]
  %v20 = vld [vmem:[%s0 + $0x48] sm:$0xff]
  %v21 = vld [vmem:[%s0 + $0x50] sm:$0xff]
  %v22 = vld [vmem:[%s0 + $0x58] sm:$0xff]
  %v23 = vld [vmem:[%s0 + $0x60] sm:$0xff]
  %v24 = vld [vmem:[%s0 + $0x68] sm:$0xff]
  %v25 = vld [vmem:[%s0 + $0x70] sm:$0xff]
  %v26 = vld [vmem:[%s0 + $0x78] sm:$0xff]
  %v27 = vld [vmem:[%s0 + $0x80] sm:$0xff]
  %v28 = vld [vmem:[%s0 + $0x88] sm:$0xff]
  %v29 = vld [vmem:[%s0 + $0x90] sm:$0xff]
  %v30 = vld [vmem:[%s0 + $0x98] sm:$0xff]
  %v31 = vld [vmem:[%s0 + $0xa0] sm:$0xff]
  %v32 = vld [vmem:[%s0 + $0xa8] sm:$0xff]
  %v33 = vld [vmem:[%s0 + $0xb0] sm:$0xff]
  %v34 = vld [vmem:[%s0 + $0xb8] sm:$0xff]
  %v35 = vld [vmem:[%s0 + $0xc0] sm:$0xff]
  %v36 = vld [vmem:[%s0 + $0xc8] sm:$0xff]
  %v37 = vld [vmem:[%s0 + $0xd0] sm:$0xff]
  %v38 = vld [vmem:[%s0 + $0xd8] sm:$0xff]
  %v39 = vld [vmem:[%s0 + $0xe0] sm:$0xff]
  %v40 = vld [vmem:[%s0 + $0xe8] sm:$0xff]
  %v41 = vld [vmem:[%s0 + $0xf0] sm:$0xff]
  %v42 = vld [vmem:[%s0 + $0xf8] sm:$0xff]
  %v43 = vld [vmem:[%s0 + $0x100] sm:$0xff]
  %v44 = vld [vmem:[%s0 + $0x108] sm:$0xff]
  %v45 = vld [vmem:[%s0 + $0x110] sm:$0xff]
  %v46 = vld [vmem:[%s0 + $0x118] sm:$0xff]
  %v47 = vld [vmem:[%s0 + $0x120] sm:$0xff]
  %v48 = vld [vmem:[%s0 + $0x128] sm:$0xff]
  %v49 = vld [vmem:[%s0 + $0x130] sm:$0xff]
  %v50 = vld [vmem:[%s0 + $0x138] sm:$0xff]
  %v51 = vld [vmem:[%s0 + $0x140] sm:$0xff]
  %v52 = vld [vmem:[%s0 + $0x148] sm:$0xff]
  %v53 = vld [vmem:[%s0 + $0x150] sm:$0xff]
  %v54 = vld [vmem:[%s0 + $0x158] sm:$0xff]
  %v55 = vld [vmem:[%s0 + $0x160] sm:$0xff]
  %v56 = vld [vmem:[%s0 + $0x168] sm:$0xff]
  %v57 = vld [vmem:[%s0 + $0x170] sm:$0xff]
  %v58 = vld [vmem:[%s0 + $0x178] sm:$0xff]
  %v59 = vld [vmem:[%s0 + $0x180] sm:$0xff]
  %v60 = vld [vmem:[%s0 + $0x188] sm:$0xff]
  %v61 = vld [vmem:[%s0 + $0x190] sm:$0xff]
  %v62 = vld [vmem:[%s0 + $0x198] sm:$0xff]
  %v63 = vld [vmem:[%s0 + $0x1a0] sm:$0xff]
  %v64 = vld [vmem:[%s0 + $0x1a8] sm:$0xff]
  %v65 = vld [vmem:[%s0 + $0x1b0] sm:$0xff]
  %v66 = vld [vmem:[%s0 + $0x1b8] sm:$0xff]
  %v67 = vld [vmem:[%s0 + $0x1c0] sm:$0xff]
  %v68 = vld [vmem:[%s0 + $0x1c8] sm:$0xff]
  %v69 = vld [vmem:[%s0 + $0x1d0] sm:$0xff]
  %v70 = vld [vmem:[%s0 + $0x1d8] sm:$0xff]
  %v71 = vld [vmem:[%s0 + $0x1e0] sm:$0xff]
  %v72 = vld [vmem:[%s0 + $0x1e8] sm:$0xff]
  %v73 = vld [vmem:[%s0 + $0x1f0] sm:$0xff]
  %v74 = vld [vmem:[%s0 + $0x1f8] sm:$0xff]
  %v75 = vld [vmem:[%s1] sm:$0x7]
  %vm76 = vcmask 23552
  %v78 = vsel %vm76, %v11, 0
  %v81 = vsel %vm76, %v12, 0
  %v84 = vsel %vm76, %v13, 0
  %v87 = vsel %vm76, %v14, 0
  %v90 = vsel %vm76, %v15, 0
  %v93 = vsel %vm76, %v16, 0
  %v96 = vsel %vm76, %v17, 0
  %v99 = vsel %vm76, %v18, 0
  %v102 = vsel %vm76, %v19, 0
  %v105 = vsel %vm76, %v20, 0
  %v108 = vsel %vm76, %v21, 0
  %v111 = vsel %vm76, %v22, 0
  %v114 = vsel %vm76, %v23, 0
  %v117 = vsel %vm76, %v24, 0
  %v120 = vsel %vm76, %v25, 0
  %v123 = vsel %vm76, %v26, 0
  %v126 = vsel %vm76, %v27, 0
  %v129 = vsel %vm76, %v28, 0
  %v132 = vsel %vm76, %v29, 0
  %v135 = vsel %vm76, %v30, 0
  %v138 = vsel %vm76, %v31, 0
  %v141 = vsel %vm76, %v32, 0
  %v144 = vsel %vm76, %v33, 0
  %v147 = vsel %vm76, %v34, 0
  %v150 = vsel %vm76, %v35, 0
  %v153 = vsel %vm76, %v36, 0
  %v156 = vsel %vm76, %v37, 0
  %v159 = vsel %vm76, %v38, 0
  %v162 = vsel %vm76, %v39, 0
  %v165 = vsel %vm76, %v40, 0
  %v168 = vsel %vm76, %v41, 0
  %v171 = vsel %vm76, %v42, 0
  %v174 = vsel %vm76, %v43, 0
  %v177 = vsel %vm76, %v44, 0
  %v180 = vsel %vm76, %v45, 0
  %v183 = vsel %vm76, %v46, 0
  %v186 = vsel %vm76, %v47, 0
  %v189 = vsel %vm76, %v48, 0
  %v192 = vsel %vm76, %v49, 0
  %v195 = vsel %vm76, %v50, 0
  %v198 = vsel %vm76, %v51, 0
  %v201 = vsel %vm76, %v52, 0
  %v204 = vsel %vm76, %v53, 0
  %v207 = vsel %vm76, %v54, 0
  %v210 = vsel %vm76, %v55, 0
  %v213 = vsel %vm76, %v56, 0
  %v216 = vsel %vm76, %v57, 0
  %v219 = vsel %vm76, %v58, 0
  %v222 = vsel %vm76, %v59, 0
  %v225 = vsel %vm76, %v60, 0
  %v228 = vsel %vm76, %v61, 0
  %v231 = vsel %vm76, %v62, 0
  %v234 = vsel %vm76, %v63, 0
  %v237 = vsel %vm76, %v64, 0
  %v240 = vsel %vm76, %v65, 0
  %v243 = vsel %vm76, %v66, 0
  %v246 = vsel %vm76, %v67, 0
  %v249 = vsel %vm76, %v68, 0
  %v252 = vsel %vm76, %v69, 0
  %v255 = vsel %vm76, %v70, 0
  %v258 = vsel %vm76, %v71, 0
  %v261 = vsel %vm76, %v72, 0
  %v264 = vsel %vm76, %v73, 0
  %v267 = vsel %vm76, %v74, 0
  %vm269 = vcmask 1042432
  %v271 = vsel %vm269, %v75, 0
  %273 = vmatprep.subr.mxu0 0.0
  %274 = vmatpush1.msra.mxu0 0.0
  %275 = vmatprep.subr.mxu0 0.0
  %276 = vmatpush1.msra.mxu0 0.0
  %277 = vmatprep.subr.mxu0 0.0
  %278 = vmatpush1.msra.mxu0 0.0
  %279 = vmatprep.subr.mxu0 0.0
  %280 = vmatpush1.msra.mxu0 0.0
  %281 = vmatprep.subr.mxu0 0.0
  %282 = vmatpush1.msra.mxu0 0.0
  %283 = vmatprep.subr.mxu0 0.0
  %284 = vmatpush1.msra.mxu0 0.0
  %285 = vmatprep.subr.mxu0 0.0
  %286 = vmatpush1.msra.mxu0 0.0
  %287 = vmatprep.subr.mxu0 0.0
  %288 = vmatpush1.msra.mxu0 0.0
  %289 = vmatprep.subr.mxu0 0.0
  %290 = vmatpush1.msra.mxu0 0.0
  %291 = vmatprep.subr.mxu0 0.0
  %292 = vmatpush1.msra.mxu0 0.0
  %293 = vmatprep.subr.mxu0 0.0
  %294 = vmatpush1.msra.mxu0 0.0
  %295 = vmatprep.subr.mxu0 0.0
  %296 = vmatpush1.msra.mxu0 0.0
  %297 = vmatprep.subr.mxu0 0.0
  %298 = vmatpush1.msra.mxu0 0.0
  %299 = vmatprep.subr.mxu0 0.0
  %300 = vmatpush1.msra.mxu0 0.0
  %301 = vmatprep.subr.mxu0 0.0
  %302 = vmatpush1.msra.mxu0 0.0
  %303 = vmatprep.subr.mxu0 0.0
  %304 = vmatpush1.msra.mxu0 %v271
  %305 = vmatprep.subr.mxu0 0.0
  %306 = vmatpush2.msra.mxu0 0.0
  %307 = vmatprep.subr.mxu0 0.0
  %308 = vmatpush2.msra.mxu0 0.0
  %309 = vmatprep.subr.mxu0 0.0
  %310 = vmatpush2.msra.mxu0 0.0
  %311 = vmatprep.subr.mxu0 0.0
  %312 = vmatpush2.msra.mxu0 0.0
  %313 = vmatprep.subr.mxu0 0.0
  %314 = vmatpush2.msra.mxu0 0.0
  %315 = vmatprep.subr.mxu0 0.0
  %316 = vmatpush2.msra.mxu0 0.0
  %317 = vmatprep.subr.mxu0 0.0
  %318 = vmatpush2.msra.mxu0 0.0
  %319 = vmatprep.subr.mxu0 0.0
  %320 = vmatpush2.msra.mxu0 0.0
  %321 = vmatprep.subr.mxu0 0.0
  %322 = vmatpush2.msra.mxu0 0.0
  %323 = vmatprep.subr.mxu0 0.0
  %324 = vmatpush2.msra.mxu0 0.0
  %325 = vmatprep.subr.mxu0 0.0
  %326 = vmatpush2.msra.mxu0 0.0
  %327 = vmatprep.subr.mxu0 0.0
  %328 = vmatpush2.msra.mxu0 0.0
  %329 = vmatprep.subr.mxu0 0.0
  %330 = vmatpush2.msra.mxu0 0.0
  %331 = vmatprep.subr.mxu0 0.0
  %332 = vmatpush2.msra.mxu0 0.0
  %333 = vmatprep.subr.mxu0 0.0
  %334 = vmatpush2.msra.mxu0 0.0
  %335 = vmatprep.subr.mxu0 0.0
  %336 = vmatpush2.msra.mxu0 0.0
  %337 = vmatprep.mubr.f32.mxu0 0.0
  %338 = vmatmul.mubr.f32.gmra.mxu0 %v78
  %v339 = vpop.f32.mrf.mxu0
  %v340 = vadd.f32 0.0, %v339
  %v341 = vpop.f32.mrf.mxu0
  %342 = vmatprep.mubr.f32.mxu0 0.0
  %343 = vmatmul.mubr.f32.gmra.mxu0 %v81
  %v344 = vpop.f32.mrf.mxu0
  %v345 = vadd.f32 0.0, %v344
  %v346 = vpop.f32.mrf.mxu0
  %347 = vmatprep.mubr.f32.mxu0 0.0
  %348 = vmatmul.mubr.f32.gmra.mxu0 %v84
  %v349 = vpop.f32.mrf.mxu0
  %v350 = vadd.f32 0.0, %v349
  %v351 = vpop.f32.mrf.mxu0
  %352 = vmatprep.mubr.f32.mxu0 0.0
  %353 = vmatmul.mubr.f32.gmra.mxu0 %v87
  %v354 = vpop.f32.mrf.mxu0
  %v355 = vadd.f32 0.0, %v354
  %v356 = vpop.f32.mrf.mxu0
  %357 = vmatprep.mubr.f32.mxu0 0.0
  %358 = vmatmul.mubr.f32.gmra.mxu0 %v90
  %v359 = vpop.f32.mrf.mxu0
  %v360 = vadd.f32 0.0, %v359
  %v361 = vpop.f32.mrf.mxu0
  %362 = vmatprep.mubr.f32.mxu0 0.0
  %363 = vmatmul.mubr.f32.gmra.mxu0 %v93
  %v364 = vpop.f32.mrf.mxu0
  %v365 = vadd.f32 0.0, %v364
  %v366 = vpop.f32.mrf.mxu0
  %367 = vmatprep.mubr.f32.mxu0 0.0
  %368 = vmatmul.mubr.f32.gmra.mxu0 %v96
  %v369 = vpop.f32.mrf.mxu0
  %v370 = vadd.f32 0.0, %v369
  %v371 = vpop.f32.mrf.mxu0
  %372 = vmatprep.mubr.f32.mxu0 0.0
  %373 = vmatmul.mubr.f32.gmra.mxu0 %v99
  %v374 = vpop.f32.mrf.mxu0
  %v375 = vadd.f32 0.0, %v374
  %v376 = vpop.f32.mrf.mxu0
  %377 = vmatprep.mubr.f32.mxu0 0.0
  %378 = vmatmul.mubr.f32.gmra.mxu0 %v102
  %v379 = vpop.f32.mrf.mxu0
  %v380 = vadd.f32 0.0, %v379
  %v381 = vpop.f32.mrf.mxu0
  %382 = vmatprep.mubr.f32.mxu0 0.0
  %383 = vmatmul.mubr.f32.gmra.mxu0 %v105
  %v384 = vpop.f32.mrf.mxu0
  %v385 = vadd.f32 0.0, %v384
  %v386 = vpop.f32.mrf.mxu0
  %387 = vmatprep.mubr.f32.mxu0 0.0
  %388 = vmatmul.mubr.f32.gmra.mxu0 %v108
  %v389 = vpop.f32.mrf.mxu0
  %v390 = vadd.f32 0.0, %v389
  %v391 = vpop.f32.mrf.mxu0
  %392 = vmatprep.mubr.f32.mxu0 0.0
  %393 = vmatmul.mubr.f32.gmra.mxu0 %v111
  %v394 = vpop.f32.mrf.mxu0
  %v395 = vadd.f32 0.0, %v394
  %v396 = vpop.f32.mrf.mxu0
  %397 = vmatprep.mubr.f32.mxu0 0.0
  %398 = vmatmul.mubr.f32.gmra.mxu0 %v114
  %v399 = vpop.f32.mrf.mxu0
  %v400 = vadd.f32 0.0, %v399
  %v401 = vpop.f32.mrf.mxu0
  %402 = vmatprep.mubr.f32.mxu0 0.0
  %403 = vmatmul.mubr.f32.gmra.mxu0 %v117
  %v404 = vpop.f32.mrf.mxu0
  %v405 = vadd.f32 0.0, %v404
  %v406 = vpop.f32.mrf.mxu0
  %407 = vmatprep.mubr.f32.mxu0 0.0
  %408 = vmatmul.mubr.f32.gmra.mxu0 %v120
  %v409 = vpop.f32.mrf.mxu0
  %v410 = vadd.f32 0.0, %v409
  %v411 = vpop.f32.mrf.mxu0
  %412 = vmatprep.mubr.f32.mxu0 0.0
  %413 = vmatmul.mubr.f32.gmra.mxu0 %v123
  %v414 = vpop.f32.mrf.mxu0
  %v415 = vadd.f32 0.0, %v414
  %v416 = vpop.f32.mrf.mxu0
  %417 = vmatprep.mubr.f32.mxu0 0.0
  %418 = vmatmul.mubr.f32.gmra.mxu0 %v126
  %v419 = vpop.f32.mrf.mxu0
  %v420 = vadd.f32 0.0, %v419
  %v421 = vpop.f32.mrf.mxu0
  %422 = vmatprep.mubr.f32.mxu0 0.0
  %423 = vmatmul.mubr.f32.gmra.mxu0 %v129
  %v424 = vpop.f32.mrf.mxu0
  %v425 = vadd.f32 0.0, %v424
  %v426 = vpop.f32.mrf.mxu0
  %427 = vmatprep.mubr.f32.mxu0 0.0
  %428 = vmatmul.mubr.f32.gmra.mxu0 %v132
  %v429 = vpop.f32.mrf.mxu0
  %v430 = vadd.f32 0.0, %v429
  %v431 = vpop.f32.mrf.mxu0
  %432 = vmatprep.mubr.f32.mxu0 0.0
  %433 = vmatmul.mubr.f32.gmra.mxu0 %v135
  %v434 = vpop.f32.mrf.mxu0
  %v435 = vadd.f32 0.0, %v434
  %v436 = vpop.f32.mrf.mxu0
  %437 = vmatprep.mubr.f32.mxu0 0.0
  %438 = vmatmul.mubr.f32.gmra.mxu0 %v138
  %v439 = vpop.f32.mrf.mxu0
  %v440 = vadd.f32 0.0, %v439
  %v441 = vpop.f32.mrf.mxu0
  %442 = vmatprep.mubr.f32.mxu0 0.0
  %443 = vmatmul.mubr.f32.gmra.mxu0 %v141
  %v444 = vpop.f32.mrf.mxu0
  %v445 = vadd.f32 0.0, %v444
  %v446 = vpop.f32.mrf.mxu0
  %447 = vmatprep.mubr.f32.mxu0 0.0
  %448 = vmatmul.mubr.f32.gmra.mxu0 %v144
  %v449 = vpop.f32.mrf.mxu0
  %v450 = vadd.f32 0.0, %v449
  %v451 = vpop.f32.mrf.mxu0
  %452 = vmatprep.mubr.f32.mxu0 0.0
  %453 = vmatmul.mubr.f32.gmra.mxu0 %v147
  %v454 = vpop.f32.mrf.mxu0
  %v455 = vadd.f32 0.0, %v454
  %v456 = vpop.f32.mrf.mxu0
  %457 = vmatprep.mubr.f32.mxu0 0.0
  %458 = vmatmul.mubr.f32.gmra.mxu0 %v150
  %v459 = vpop.f32.mrf.mxu0
  %v460 = vadd.f32 0.0, %v459
  %v461 = vpop.f32.mrf.mxu0
  %462 = vmatprep.mubr.f32.mxu0 0.0
  %463 = vmatmul.mubr.f32.gmra.mxu0 %v153
  %v464 = vpop.f32.mrf.mxu0
  %v465 = vadd.f32 0.0, %v464
  %v466 = vpop.f32.mrf.mxu0
  %467 = vmatprep.mubr.f32.mxu0 0.0
  %468 = vmatmul.mubr.f32.gmra.mxu0 %v156
  %v469 = vpop.f32.mrf.mxu0
  %v470 = vadd.f32 0.0, %v469
  %v471 = vpop.f32.mrf.mxu0
  %472 = vmatprep.mubr.f32.mxu0 0.0
  %473 = vmatmul.mubr.f32.gmra.mxu0 %v159
  %v474 = vpop.f32.mrf.mxu0
  %v475 = vadd.f32 0.0, %v474
  %v476 = vpop.f32.mrf.mxu0
  %477 = vmatprep.mubr.f32.mxu0 0.0
  %478 = vmatmul.mubr.f32.gmra.mxu0 %v162
  %v479 = vpop.f32.mrf.mxu0
  %v480 = vadd.f32 0.0, %v479
  %v481 = vpop.f32.mrf.mxu0
  %482 = vmatprep.mubr.f32.mxu0 0.0
  %483 = vmatmul.mubr.f32.gmra.mxu0 %v165
  %v484 = vpop.f32.mrf.mxu0
  %v485 = vadd.f32 0.0, %v484
  %v486 = vpop.f32.mrf.mxu0
  %487 = vmatprep.mubr.f32.mxu0 0.0
  %488 = vmatmul.mubr.f32.gmra.mxu0 %v168
  %v489 = vpop.f32.mrf.mxu0
  %v490 = vadd.f32 0.0, %v489
  %v491 = vpop.f32.mrf.mxu0
  %492 = vmatprep.mubr.f32.mxu0 0.0
  %493 = vmatmul.mubr.f32.gmra.mxu0 %v171
  %v494 = vpop.f32.mrf.mxu0
  %v495 = vadd.f32 0.0, %v494
  %v496 = vpop.f32.mrf.mxu0
  %497 = vmatprep.mubr.f32.mxu0 0.0
  %498 = vmatmul.mubr.f32.gmra.mxu0 %v174
  %v499 = vpop.f32.mrf.mxu0
  %v500 = vadd.f32 0.0, %v499
  %v501 = vpop.f32.mrf.mxu0
  %502 = vmatprep.mubr.f32.mxu0 0.0
  %503 = vmatmul.mubr.f32.gmra.mxu0 %v177
  %v504 = vpop.f32.mrf.mxu0
  %v505 = vadd.f32 0.0, %v504
  %v506 = vpop.f32.mrf.mxu0
  %507 = vmatprep.mubr.f32.mxu0 0.0
  %508 = vmatmul.mubr.f32.gmra.mxu0 %v180
  %v509 = vpop.f32.mrf.mxu0
  %v510 = vadd.f32 0.0, %v509
  %v511 = vpop.f32.mrf.mxu0
  %512 = vmatprep.mubr.f32.mxu0 0.0
  %513 = vmatmul.mubr.f32.gmra.mxu0 %v183
  %v514 = vpop.f32.mrf.mxu0
  %v515 = vadd.f32 0.0, %v514
  %v516 = vpop.f32.mrf.mxu0
  %517 = vmatprep.mubr.f32.mxu0 0.0
  %518 = vmatmul.mubr.f32.gmra.mxu0 %v186
  %v519 = vpop.f32.mrf.mxu0
  %v520 = vadd.f32 0.0, %v519
  %v521 = vpop.f32.mrf.mxu0
  %522 = vmatprep.mubr.f32.mxu0 0.0
  %523 = vmatmul.mubr.f32.gmra.mxu0 %v189
  %v524 = vpop.f32.mrf.mxu0
  %v525 = vadd.f32 0.0, %v524
  %v526 = vpop.f32.mrf.mxu0
  %527 = vmatprep.mubr.f32.mxu0 0.0
  %528 = vmatmul.mubr.f32.gmra.mxu0 %v192
  %v529 = vpop.f32.mrf.mxu0
  %v530 = vadd.f32 0.0, %v529
  %v531 = vpop.f32.mrf.mxu0
  %532 = vmatprep.mubr.f32.mxu0 0.0
  %533 = vmatmul.mubr.f32.gmra.mxu0 %v195
  %v534 = vpop.f32.mrf.mxu0
  %v535 = vadd.f32 0.0, %v534
  %v536 = vpop.f32.mrf.mxu0
  %537 = vmatprep.mubr.f32.mxu0 0.0
  %538 = vmatmul.mubr.f32.gmra.mxu0 %v198
  %v539 = vpop.f32.mrf.mxu0
  %v540 = vadd.f32 0.0, %v539
  %v541 = vpop.f32.mrf.mxu0
  %542 = vmatprep.mubr.f32.mxu0 0.0
  %543 = vmatmul.mubr.f32.gmra.mxu0 %v201
  %v544 = vpop.f32.mrf.mxu0
  %v545 = vadd.f32 0.0, %v544
  %v546 = vpop.f32.mrf.mxu0
  %547 = vmatprep.mubr.f32.mxu0 0.0
  %548 = vmatmul.mubr.f32.gmra.mxu0 %v204
  %v549 = vpop.f32.mrf.mxu0
  %v550 = vadd.f32 0.0, %v549
  %v551 = vpop.f32.mrf.mxu0
  %552 = vmatprep.mubr.f32.mxu0 0.0
  %553 = vmatmul.mubr.f32.gmra.mxu0 %v207
  %v554 = vpop.f32.mrf.mxu0
  %v555 = vadd.f32 0.0, %v554
  %v556 = vpop.f32.mrf.mxu0
  %557 = vmatprep.mubr.f32.mxu0 0.0
  %558 = vmatmul.mubr.f32.gmra.mxu0 %v210
  %v559 = vpop.f32.mrf.mxu0
  %v560 = vadd.f32 0.0, %v559
  %v561 = vpop.f32.mrf.mxu0
  %562 = vmatprep.mubr.f32.mxu0 0.0
  %563 = vmatmul.mubr.f32.gmra.mxu0 %v213
  %v564 = vpop.f32.mrf.mxu0
  %v565 = vadd.f32 0.0, %v564
  %v566 = vpop.f32.mrf.mxu0
  %567 = vmatprep.mubr.f32.mxu0 0.0
  %568 = vmatmul.mubr.f32.gmra.mxu0 %v216
  %v569 = vpop.f32.mrf.mxu0
  %v570 = vadd.f32 0.0, %v569
  %v571 = vpop.f32.mrf.mxu0
  %572 = vmatprep.mubr.f32.mxu0 0.0
  %573 = vmatmul.mubr.f32.gmra.mxu0 %v219
  %v574 = vpop.f32.mrf.mxu0
  %v575 = vadd.f32 0.0, %v574
  %v576 = vpop.f32.mrf.mxu0
  %577 = vmatprep.mubr.f32.mxu0 0.0
  %578 = vmatmul.mubr.f32.gmra.mxu0 %v222
  %v579 = vpop.f32.mrf.mxu0
  %v580 = vadd.f32 0.0, %v579
  %v581 = vpop.f32.mrf.mxu0
  %582 = vmatprep.mubr.f32.mxu0 0.0
  %583 = vmatmul.mubr.f32.gmra.mxu0 %v225
  %v584 = vpop.f32.mrf.mxu0
  %v585 = vadd.f32 0.0, %v584
  %v586 = vpop.f32.mrf.mxu0
  %587 = vmatprep.mubr.f32.mxu0 0.0
  %588 = vmatmul.mubr.f32.gmra.mxu0 %v228
  %v589 = vpop.f32.mrf.mxu0
  %v590 = vadd.f32 0.0, %v589
  %v591 = vpop.f32.mrf.mxu0
  %592 = vmatprep.mubr.f32.mxu0 0.0
  %593 = vmatmul.mubr.f32.gmra.mxu0 %v231
  %v594 = vpop.f32.mrf.mxu0
  %v595 = vadd.f32 0.0, %v594
  %v596 = vpop.f32.mrf.mxu0
  %597 = vmatprep.mubr.f32.mxu0 0.0
  %598 = vmatmul.mubr.f32.gmra.mxu0 %v234
  %v599 = vpop.f32.mrf.mxu0
  %v600 = vadd.f32 0.0, %v599
  %v601 = vpop.f32.mrf.mxu0
  %602 = vmatprep.mubr.f32.mxu0 0.0
  %603 = vmatmul.mubr.f32.gmra.mxu0 %v237
  %v604 = vpop.f32.mrf.mxu0
  %v605 = vadd.f32 0.0, %v604
  %v606 = vpop.f32.mrf.mxu0
  %607 = vmatprep.mubr.f32.mxu0 0.0
  %608 = vmatmul.mubr.f32.gmra.mxu0 %v240
  %v609 = vpop.f32.mrf.mxu0
  %v610 = vadd.f32 0.0, %v609
  %v611 = vpop.f32.mrf.mxu0
  %612 = vmatprep.mubr.f32.mxu0 0.0
  %613 = vmatmul.mubr.f32.gmra.mxu0 %v243
  %v614 = vpop.f32.mrf.mxu0
  %v615 = vadd.f32 0.0, %v614
  %v616 = vpop.f32.mrf.mxu0
  %617 = vmatprep.mubr.f32.mxu0 0.0
  %618 = vmatmul.mubr.f32.gmra.mxu0 %v246
  %v619 = vpop.f32.mrf.mxu0
  %v620 = vadd.f32 0.0, %v619
  %v621 = vpop.f32.mrf.mxu0
  %622 = vmatprep.mubr.f32.mxu0 0.0
  %623 = vmatmul.mubr.f32.gmra.mxu0 %v249
  %v624 = vpop.f32.mrf.mxu0
  %v625 = vadd.f32 0.0, %v624
  %v626 = vpop.f32.mrf.mxu0
  %627 = vmatprep.mubr.f32.mxu0 0.0
  %628 = vmatmul.mubr.f32.gmra.mxu0 %v252
  %v629 = vpop.f32.mrf.mxu0
  %v630 = vadd.f32 0.0, %v629
  %v631 = vpop.f32.mrf.mxu0
  %632 = vmatprep.mubr.f32.mxu0 0.0
  %633 = vmatmul.mubr.f32.gmra.mxu0 %v255
  %v634 = vpop.f32.mrf.mxu0
  %v635 = vadd.f32 0.0, %v634
  %v636 = vpop.f32.mrf.mxu0
  %637 = vmatprep.mubr.f32.mxu0 0.0
  %638 = vmatmul.mubr.f32.gmra.mxu0 %v258
  %v639 = vpop.f32.mrf.mxu0
  %v640 = vadd.f32 0.0, %v639
  %v641 = vpop.f32.mrf.mxu0
  %642 = vmatprep.mubr.f32.mxu0 0.0
  %643 = vmatmul.mubr.f32.gmra.mxu0 %v261
  %v644 = vpop.f32.mrf.mxu0
  %v645 = vadd.f32 0.0, %v644
  %v646 = vpop.f32.mrf.mxu0
  %647 = vmatprep.mubr.f32.mxu0 0.0
  %648 = vmatmul.mubr.f32.gmra.mxu0 %v264
  %v649 = vpop.f32.mrf.mxu0
  %v650 = vadd.f32 0.0, %v649
  %v651 = vpop.f32.mrf.mxu0
  %652 = vmatprep.mubr.f32.mxu0 0.0
  %653 = vmatmul.mubr.f32.gmra.mxu0 %v267
  %v654 = vpop.f32.mrf.mxu0
  %v655 = vadd.f32 0.0, %v654
  %v656 = vpop.f32.mrf.mxu0
  %657 = vdwg.mxu0
  %vm658 = vcmask 64512
  %v659 = vsel %vm658, %v340, 0.0
  %v660 = vsel %vm658, %v345, 0.0
  %v661 = vadd.f32 %v659, %v660
  %v662 = vsel %vm658, %v350, 0.0
  %v663 = vadd.f32 %v661, %v662
  %v664 = vsel %vm658, %v355, 0.0
  %v665 = vadd.f32 %v663, %v664
  %v666 = vsel %vm658, %v360, 0.0
  %v667 = vadd.f32 %v665, %v666
  %v668 = vsel %vm658, %v365, 0.0
  %v669 = vadd.f32 %v667, %v668
  %v670 = vsel %vm658, %v370, 0.0
  %v671 = vadd.f32 %v669, %v670
  %v672 = vsel %vm658, %v375, 0.0
  %v673 = vadd.f32 %v671, %v672
  %v674 = vsel %vm658, %v380, 0.0
  %v675 = vadd.f32 %v673, %v674
  %v676 = vsel %vm658, %v385, 0.0
  %v677 = vadd.f32 %v675, %v676
  %v678 = vsel %vm658, %v390, 0.0
  %v679 = vadd.f32 %v677, %v678
  %v680 = vsel %vm658, %v395, 0.0
  %v681 = vadd.f32 %v679, %v680
  %v682 = vsel %vm658, %v400, 0.0
  %v683 = vadd.f32 %v681, %v682
  %v684 = vsel %vm658, %v405, 0.0
  %v685 = vadd.f32 %v683, %v684
  %v686 = vsel %vm658, %v410, 0.0
  %v687 = vadd.f32 %v685, %v686
  %v688 = vsel %vm658, %v415, 0.0
  %v689 = vadd.f32 %v687, %v688
  %v690 = vsel %vm658, %v420, 0.0
  %v691 = vadd.f32 %v689, %v690
  %v692 = vsel %vm658, %v425, 0.0
  %v693 = vadd.f32 %v691, %v692
  %v694 = vsel %vm658, %v430, 0.0
  %v695 = vadd.f32 %v693, %v694
  %v696 = vsel %vm658, %v435, 0.0
  %v697 = vadd.f32 %v695, %v696
  %v698 = vsel %vm658, %v440, 0.0
  %v699 = vadd.f32 %v697, %v698
  %v700 = vsel %vm658, %v445, 0.0
  %v701 = vadd.f32 %v699, %v700
  %v702 = vsel %vm658, %v450, 0.0
  %v703 = vadd.f32 %v701, %v702
  %v704 = vsel %vm658, %v455, 0.0
  %v705 = vadd.f32 %v703, %v704
  %v706 = vsel %vm658, %v460, 0.0
  %v707 = vadd.f32 %v705, %v706
  %v708 = vsel %vm658, %v465, 0.0
  %v709 = vadd.f32 %v707, %v708
  %v710 = vsel %vm658, %v470, 0.0
  %v711 = vadd.f32 %v709, %v710
  %v712 = vsel %vm658, %v475, 0.0
  %v713 = vadd.f32 %v711, %v712
  %v714 = vsel %vm658, %v480, 0.0
  %v715 = vadd.f32 %v713, %v714
  %v716 = vsel %vm658, %v485, 0.0
  %v717 = vadd.f32 %v715, %v716
  %v718 = vsel %vm658, %v490, 0.0
  %v719 = vadd.f32 %v717, %v718
  %v720 = vsel %vm658, %v495, 0.0
  %v721 = vadd.f32 %v719, %v720
  %v722 = vsel %vm658, %v500, 0.0
  %v723 = vadd.f32 %v721, %v722
  %v724 = vsel %vm658, %v505, 0.0
  %v725 = vadd.f32 %v723, %v724
  %v726 = vsel %vm658, %v510, 0.0
  %v727 = vadd.f32 %v725, %v726
  %v728 = vsel %vm658, %v515, 0.0
  %v729 = vadd.f32 %v727, %v728
  %v730 = vsel %vm658, %v520, 0.0
  %v731 = vadd.f32 %v729, %v730
  %v732 = vsel %vm658, %v525, 0.0
  %v733 = vadd.f32 %v731, %v732
  %v734 = vsel %vm658, %v530, 0.0
  %v735 = vadd.f32 %v733, %v734
  %v736 = vsel %vm658, %v535, 0.0
  %v737 = vadd.f32 %v735, %v736
  %v738 = vsel %vm658, %v540, 0.0
  %v739 = vadd.f32 %v737, %v738
  %v740 = vsel %vm658, %v545, 0.0
  %v741 = vadd.f32 %v739, %v740
  %v742 = vsel %vm658, %v550, 0.0
  %v743 = vadd.f32 %v741, %v742
  %v744 = vsel %vm658, %v555, 0.0
  %v745 = vadd.f32 %v743, %v744
  %v746 = vsel %vm658, %v560, 0.0
  %v747 = vadd.f32 %v745, %v746
  %v748 = vsel %vm658, %v565, 0.0
  %v749 = vadd.f32 %v747, %v748
  %v750 = vsel %vm658, %v570, 0.0
  %v751 = vadd.f32 %v749, %v750
  %v752 = vsel %vm658, %v575, 0.0
  %v753 = vadd.f32 %v751, %v752
  %v754 = vsel %vm658, %v580, 0.0
  %v755 = vadd.f32 %v753, %v754
  %v756 = vsel %vm658, %v585, 0.0
  %v757 = vadd.f32 %v755, %v756
  %v758 = vsel %vm658, %v590, 0.0
  %v759 = vadd.f32 %v757, %v758
  %v760 = vsel %vm658, %v595, 0.0
  %v761 = vadd.f32 %v759, %v760
  %v762 = vsel %vm658, %v600, 0.0
  %v763 = vadd.f32 %v761, %v762
  %v764 = vsel %vm658, %v605, 0.0
  %v765 = vadd.f32 %v763, %v764
  %v766 = vsel %vm658, %v610, 0.0
  %v767 = vadd.f32 %v765, %v766
  %v768 = vsel %vm658, %v615, 0.0
  %v769 = vadd.f32 %v767, %v768
  %v770 = vsel %vm658, %v620, 0.0
  %v771 = vadd.f32 %v769, %v770
  %v772 = vsel %vm658, %v625, 0.0
  %v773 = vadd.f32 %v771, %v772
  %v774 = vsel %vm658, %v630, 0.0
  %v775 = vadd.f32 %v773, %v774
  %v776 = vsel %vm658, %v635, 0.0
  %v777 = vadd.f32 %v775, %v776
  %v778 = vsel %vm658, %v640, 0.0
  %v779 = vadd.f32 %v777, %v778
  %v780 = vsel %vm658, %v645, 0.0
  %v781 = vadd.f32 %v779, %v780
  %v782 = vsel %vm658, %v650, 0.0
  %v783 = vadd.f32 %v781, %v782
  %v784 = vsel %vm658, %v655, 0.0
  %v785 = vadd.f32 %v783, %v784
  %v786 = vrot.slane %v785, 4
  %v787 = vadd.f32 %v785, %v786
  %v788 = vrot.slane %v787, 2
  %v789 = vadd.f32 %v787, %v788
  %v790 = vrot.slane %v789, 1
  %v791 = vadd.f32 %v789, %v790
  %v792 = vmul.f32 %v340, %v340
  %v793 = vmul.f32 %v345, %v345
  %v794 = vmul.f32 %v350, %v350
  %v795 = vmul.f32 %v355, %v355
  %v796 = vmul.f32 %v360, %v360
  %v797 = vmul.f32 %v365, %v365
  %v798 = vmul.f32 %v370, %v370
  %v799 = vmul.f32 %v375, %v375
  %v800 = vmul.f32 %v380, %v380
  %v801 = vmul.f32 %v385, %v385
  %v802 = vmul.f32 %v390, %v390
  %v803 = vmul.f32 %v395, %v395
  %v804 = vmul.f32 %v400, %v400
  %v805 = vmul.f32 %v405, %v405
  %v806 = vmul.f32 %v410, %v410
  %v807 = vmul.f32 %v415, %v415
  %v808 = vmul.f32 %v420, %v420
  %v809 = vmul.f32 %v425, %v425
  %v810 = vmul.f32 %v430, %v430
  %v811 = vmul.f32 %v435, %v435
  %v812 = vmul.f32 %v440, %v440
  %v813 = vmul.f32 %v445, %v445
  %v814 = vmul.f32 %v450, %v450
  %v815 = vmul.f32 %v455, %v455
  %v816 = vmul.f32 %v460, %v460
  %v817 = vmul.f32 %v465, %v465
  %v818 = vmul.f32 %v470, %v470
  %v819 = vmul.f32 %v475, %v475
  %v820 = vmul.f32 %v480, %v480
  %v821 = vmul.f32 %v485, %v485
  %v822 = vmul.f32 %v490, %v490
  %v823 = vmul.f32 %v495, %v495
  %v824 = vmul.f32 %v500, %v500
  %v825 = vmul.f32 %v505, %v505
  %v826 = vmul.f32 %v510, %v510
  %v827 = vmul.f32 %v515, %v515
  %v828 = vmul.f32 %v520, %v520
  %v829 = vmul.f32 %v525, %v525
  %v830 = vmul.f32 %v530, %v530
  %v831 = vmul.f32 %v535, %v535
  %v832 = vmul.f32 %v540, %v540
  %v833 = vmul.f32 %v545, %v545
  %v834 = vmul.f32 %v550, %v550
  %v835 = vmul.f32 %v555, %v555
  %v836 = vmul.f32 %v560, %v560
  %v837 = vmul.f32 %v565, %v565
  %v838 = vmul.f32 %v570, %v570
  %v839 = vmul.f32 %v575, %v575
  %v840 = vmul.f32 %v580, %v580
  %v841 = vmul.f32 %v585, %v585
  %v842 = vmul.f32 %v590, %v590
  %v843 = vmul.f32 %v595, %v595
  %v844 = vmul.f32 %v600, %v600
  %v845 = vmul.f32 %v605, %v605
  %v846 = vmul.f32 %v610, %v610
  %v847 = vmul.f32 %v615, %v615
  %v848 = vmul.f32 %v620, %v620
  %v849 = vmul.f32 %v625, %v625
  %v850 = vmul.f32 %v630, %v630
  %v851 = vmul.f32 %v635, %v635
  %v852 = vmul.f32 %v640, %v640
  %v853 = vmul.f32 %v645, %v645
  %v854 = vmul.f32 %v650, %v650
  %v855 = vmul.f32 %v655, %v655
  %v856 = vsel %vm658, %v792, 0.0
  %v857 = vsel %vm658, %v793, 0.0
  %v858 = vadd.f32 %v856, %v857
  %v859 = vsel %vm658, %v794, 0.0
  %v860 = vadd.f32 %v858, %v859
  %v861 = vsel %vm658, %v795, 0.0
  %v862 = vadd.f32 %v860, %v861
  %v863 = vsel %vm658, %v796, 0.0
  %v864 = vadd.f32 %v862, %v863
  %v865 = vsel %vm658, %v797, 0.0
  %v866 = vadd.f32 %v864, %v865
  %v867 = vsel %vm658, %v798, 0.0
  %v868 = vadd.f32 %v866, %v867
  %v869 = vsel %vm658, %v799, 0.0
  %v870 = vadd.f32 %v868, %v869
  %v871 = vsel %vm658, %v800, 0.0
  %v872 = vadd.f32 %v870, %v871
  %v873 = vsel %vm658, %v801, 0.0
  %v874 = vadd.f32 %v872, %v873
  %v875 = vsel %vm658, %v802, 0.0
  %v876 = vadd.f32 %v874, %v875
  %v877 = vsel %vm658, %v803, 0.0
  %v878 = vadd.f32 %v876, %v877
  %v879 = vsel %vm658, %v804, 0.0
  %v880 = vadd.f32 %v878, %v879
  %v881 = vsel %vm658, %v805, 0.0
  %v882 = vadd.f32 %v880, %v881
  %v883 = vsel %vm658, %v806, 0.0
  %v884 = vadd.f32 %v882, %v883
  %v885 = vsel %vm658, %v807, 0.0
  %v886 = vadd.f32 %v884, %v885
  %v887 = vsel %vm658, %v808, 0.0
  %v888 = vadd.f32 %v886, %v887
  %v889 = vsel %vm658, %v809, 0.0
  %v890 = vadd.f32 %v888, %v889
  %v891 = vsel %vm658, %v810, 0.0
  %v892 = vadd.f32 %v890, %v891
  %v893 = vsel %vm658, %v811, 0.0
  %v894 = vadd.f32 %v892, %v893
  %v895 = vsel %vm658, %v812, 0.0
  %v896 = vadd.f32 %v894, %v895
  %v897 = vsel %vm658, %v813, 0.0
  %v898 = vadd.f32 %v896, %v897
  %v899 = vsel %vm658, %v814, 0.0
  %v900 = vadd.f32 %v898, %v899
  %v901 = vsel %vm658, %v815, 0.0
  %v902 = vadd.f32 %v900, %v901
  %v903 = vsel %vm658, %v816, 0.0
  %v904 = vadd.f32 %v902, %v903
  %v905 = vsel %vm658, %v817, 0.0
  %v906 = vadd.f32 %v904, %v905
  %v907 = vsel %vm658, %v818, 0.0
  %v908 = vadd.f32 %v906, %v907
  %v909 = vsel %vm658, %v819, 0.0
  %v910 = vadd.f32 %v908, %v909
  %v911 = vsel %vm658, %v820, 0.0
  %v912 = vadd.f32 %v910, %v911
  %v913 = vsel %vm658, %v821, 0.0
  %v914 = vadd.f32 %v912, %v913
  %v915 = vsel %vm658, %v822, 0.0
  %v916 = vadd.f32 %v914, %v915
  %v917 = vsel %vm658, %v823, 0.0
  %v918 = vadd.f32 %v916, %v917
  %v919 = vsel %vm658, %v824, 0.0
  %v920 = vadd.f32 %v918, %v919
  %v921 = vsel %vm658, %v825, 0.0
  %v922 = vadd.f32 %v920, %v921
  %v923 = vsel %vm658, %v826, 0.0
  %v924 = vadd.f32 %v922, %v923
  %v925 = vsel %vm658, %v827, 0.0
  %v926 = vadd.f32 %v924, %v925
  %v927 = vsel %vm658, %v828, 0.0
  %v928 = vadd.f32 %v926, %v927
  %v929 = vsel %vm658, %v829, 0.0
  %v930 = vadd.f32 %v928, %v929
  %v931 = vsel %vm658, %v830, 0.0
  %v932 = vadd.f32 %v930, %v931
  %v933 = vsel %vm658, %v831, 0.0
  %v934 = vadd.f32 %v932, %v933
  %v935 = vsel %vm658, %v832, 0.0
  %v936 = vadd.f32 %v934, %v935
  %v937 = vsel %vm658, %v833, 0.0
  %v938 = vadd.f32 %v936, %v937
  %v939 = vsel %vm658, %v834, 0.0
  %v940 = vadd.f32 %v938, %v939
  %v941 = vsel %vm658, %v835, 0.0
  %v942 = vadd.f32 %v940, %v941
  %v943 = vsel %vm658, %v836, 0.0
  %v944 = vadd.f32 %v942, %v943
  %v945 = vsel %vm658, %v837, 0.0
  %v946 = vadd.f32 %v944, %v945
  %v947 = vsel %vm658, %v838, 0.0
  %v948 = vadd.f32 %v946, %v947
  %v949 = vsel %vm658, %v839, 0.0
  %v950 = vadd.f32 %v948, %v949
  %v951 = vsel %vm658, %v840, 0.0
  %v952 = vadd.f32 %v950, %v951
  %v953 = vsel %vm658, %v841, 0.0
  %v954 = vadd.f32 %v952, %v953
  %v955 = vsel %vm658, %v842, 0.0
  %v956 = vadd.f32 %v954, %v955
  %v957 = vsel %vm658, %v843, 0.0
  %v958 = vadd.f32 %v956, %v957
  %v959 = vsel %vm658, %v844, 0.0
  %v960 = vadd.f32 %v958, %v959
  %v961 = vsel %vm658, %v845, 0.0
  %v962 = vadd.f32 %v960, %v961
  %v963 = vsel %vm658, %v846, 0.0
  %v964 = vadd.f32 %v962, %v963
  %v965 = vsel %vm658, %v847, 0.0
  %v966 = vadd.f32 %v964, %v965
  %v967 = vsel %vm658, %v848, 0.0
  %v968 = vadd.f32 %v966, %v967
  %v969 = vsel %vm658, %v849, 0.0
  %v970 = vadd.f32 %v968, %v969
  %v971 = vsel %vm658, %v850, 0.0
  %v972 = vadd.f32 %v970, %v971
  %v973 = vsel %vm658, %v851, 0.0
  %v974 = vadd.f32 %v972, %v973
  %v975 = vsel %vm658, %v852, 0.0
  %v976 = vadd.f32 %v974, %v975
  %v977 = vsel %vm658, %v853, 0.0
  %v978 = vadd.f32 %v976, %v977
  %v979 = vsel %vm658, %v854, 0.0
  %v980 = vadd.f32 %v978, %v979
  %v981 = vsel %vm658, %v855, 0.0
  %v982 = vadd.f32 %v980, %v981
  %v983 = vrot.slane %v982, 4
  %v984 = vadd.f32 %v982, %v983
  %v985 = vrot.slane %v984, 2
  %v986 = vadd.f32 %v984, %v985
  %v987 = vrot.slane %v986, 1
  %v988 = vadd.f32 %v986, %v987
  %v989 = vmul.f32 %v791, 0.001953125
  %v990 = vmul.f32 %v988, 0.001953125
  %v991 = vmul.f32 %v989, %v989
  %v992 = vsub.f32 %v990, %v991
  %v993 = vmax.f32 %v992, 0.0
  %v994 = vsub.f32 %v340, %v989
  %v995 = vsub.f32 %v345, %v989
  %v996 = vsub.f32 %v350, %v989
  %v997 = vsub.f32 %v355, %v989
  %v998 = vsub.f32 %v360, %v989
  %v999 = vsub.f32 %v365, %v989
  %v1000 = vsub.f32 %v370, %v989
  %v1001 = vsub.f32 %v375, %v989
  %v1002 = vsub.f32 %v380, %v989
  %v1003 = vsub.f32 %v385, %v989
  %v1004 = vsub.f32 %v390, %v989
  %v1005 = vsub.f32 %v395, %v989
  %v1006 = vsub.f32 %v400, %v989
  %v1007 = vsub.f32 %v405, %v989
  %v1008 = vsub.f32 %v410, %v989
  %v1009 = vsub.f32 %v415, %v989
  %v1010 = vsub.f32 %v420, %v989
  %v1011 = vsub.f32 %v425, %v989
  %v1012 = vsub.f32 %v430, %v989
  %v1013 = vsub.f32 %v435, %v989
  %v1014 = vsub.f32 %v440, %v989
  %v1015 = vsub.f32 %v445, %v989
  %v1016 = vsub.f32 %v450, %v989
  %v1017 = vsub.f32 %v455, %v989
  %v1018 = vsub.f32 %v460, %v989
  %v1019 = vsub.f32 %v465, %v989
  %v1020 = vsub.f32 %v470, %v989
  %v1021 = vsub.f32 %v475, %v989
  %v1022 = vsub.f32 %v480, %v989
  %v1023 = vsub.f32 %v485, %v989
  %v1024 = vsub.f32 %v490, %v989
  %v1025 = vsub.f32 %v495, %v989
  %v1026 = vsub.f32 %v500, %v989
  %v1027 = vsub.f32 %v505, %v989
  %v1028 = vsub.f32 %v510, %v989
  %v1029 = vsub.f32 %v515, %v989
  %v1030 = vsub.f32 %v520, %v989
  %v1031 = vsub.f32 %v525, %v989
  %v1032 = vsub.f32 %v530, %v989
  %v1033 = vsub.f32 %v535, %v989
  %v1034 = vsub.f32 %v540, %v989
  %v1035 = vsub.f32 %v545, %v989
  %v1036 = vsub.f32 %v550, %v989
  %v1037 = vsub.f32 %v555, %v989
  %v1038 = vsub.f32 %v560, %v989
  %v1039 = vsub.f32 %v565, %v989
  %v1040 = vsub.f32 %v570, %v989
  %v1041 = vsub.f32 %v575, %v989
  %v1042 = vsub.f32 %v580, %v989
  %v1043 = vsub.f32 %v585, %v989
  %v1044 = vsub.f32 %v590, %v989
  %v1045 = vsub.f32 %v595, %v989
  %v1046 = vsub.f32 %v600, %v989
  %v1047 = vsub.f32 %v605, %v989
  %v1048 = vsub.f32 %v610, %v989
  %v1049 = vsub.f32 %v615, %v989
  %v1050 = vsub.f32 %v620, %v989
  %v1051 = vsub.f32 %v625, %v989
  %v1052 = vsub.f32 %v630, %v989
  %v1053 = vsub.f32 %v635, %v989
  %v1054 = vsub.f32 %v640, %v989
  %v1055 = vsub.f32 %v645, %v989
  %v1056 = vsub.f32 %v650, %v989
  %v1057 = vsub.f32 %v655, %v989
  %v1058 = vadd.f32 %v993, 1e-05
  %v1059 = vrsqrt.pop %v1058
  %v1060 = vmul.f32 %v994, %v1059
  %v1061 = vmul.f32 %v995, %v1059
  %v1062 = vmul.f32 %v996, %v1059
  %v1063 = vmul.f32 %v997, %v1059
  %v1064 = vmul.f32 %v998, %v1059
  %v1065 = vmul.f32 %v999, %v1059
  %v1066 = vmul.f32 %v1000, %v1059
  %v1067 = vmul.f32 %v1001, %v1059
  %v1068 = vmul.f32 %v1002, %v1059
  %v1069 = vmul.f32 %v1003, %v1059
  %v1070 = vmul.f32 %v1004, %v1059
  %v1071 = vmul.f32 %v1005, %v1059
  %v1072 = vmul.f32 %v1006, %v1059
  %v1073 = vmul.f32 %v1007, %v1059
  %v1074 = vmul.f32 %v1008, %v1059
  %v1075 = vmul.f32 %v1009, %v1059
  %v1076 = vmul.f32 %v1010, %v1059
  %v1077 = vmul.f32 %v1011, %v1059
  %v1078 = vmul.f32 %v1012, %v1059
  %v1079 = vmul.f32 %v1013, %v1059
  %v1080 = vmul.f32 %v1014, %v1059
  %v1081 = vmul.f32 %v1015, %v1059
  %v1082 = vmul.f32 %v1016, %v1059
  %v1083 = vmul.f32 %v1017, %v1059
  %v1084 = vmul.f32 %v1018, %v1059
  %v1085 = vmul.f32 %v1019, %v1059
  %v1086 = vmul.f32 %v1020, %v1059
  %v1087 = vmul.f32 %v1021, %v1059
  %v1088 = vmul.f32 %v1022, %v1059
  %v1089 = vmul.f32 %v1023, %v1059
  %v1090 = vmul.f32 %v1024, %v1059
  %v1091 = vmul.f32 %v1025, %v1059
  %v1092 = vmul.f32 %v1026, %v1059
  %v1093 = vmul.f32 %v1027, %v1059
  %v1094 = vmul.f32 %v1028, %v1059
  %v1095 = vmul.f32 %v1029, %v1059
  %v1096 = vmul.f32 %v1030, %v1059
  %v1097 = vmul.f32 %v1031, %v1059
  %v1098 = vmul.f32 %v1032, %v1059
  %v1099 = vmul.f32 %v1033, %v1059
  %v1100 = vmul.f32 %v1034, %v1059
  %v1101 = vmul.f32 %v1035, %v1059
  %v1102 = vmul.f32 %v1036, %v1059
  %v1103 = vmul.f32 %v1037, %v1059
  %v1104 = vmul.f32 %v1038, %v1059
  %v1105 = vmul.f32 %v1039, %v1059
  %v1106 = vmul.f32 %v1040, %v1059
  %v1107 = vmul.f32 %v1041, %v1059
  %v1108 = vmul.f32 %v1042, %v1059
  %v1109 = vmul.f32 %v1043, %v1059
  %v1110 = vmul.f32 %v1044, %v1059
  %v1111 = vmul.f32 %v1045, %v1059
  %v1112 = vmul.f32 %v1046, %v1059
  %v1113 = vmul.f32 %v1047, %v1059
  %v1114 = vmul.f32 %v1048, %v1059
  %v1115 = vmul.f32 %v1049, %v1059
  %v1116 = vmul.f32 %v1050, %v1059
  %v1117 = vmul.f32 %v1051, %v1059
  %v1118 = vmul.f32 %v1052, %v1059
  %v1119 = vmul.f32 %v1053, %v1059
  %v1120 = vmul.f32 %v1054, %v1059
  %v1121 = vmul.f32 %v1055, %v1059
  %v1122 = vmul.f32 %v1056, %v1059
  %v1123 = vmul.f32 %v1057, %v1059
  %1124 = vst.msk [vmem:[%s2] sm:$0xff] %vm658, %v1060
  %1125 = vst.msk [vmem:[%s2 + $0x8] sm:$0xff] %vm658, %v1061
  %1126 = vst.msk [vmem:[%s2 + $0x10] sm:$0xff] %vm658, %v1062
  %1127 = vst.msk [vmem:[%s2 + $0x18] sm:$0xff] %vm658, %v1063
  %1128 = vst.msk [vmem:[%s2 + $0x20] sm:$0xff] %vm658, %v1064
  %1129 = vst.msk [vmem:[%s2 + $0x28] sm:$0xff] %vm658, %v1065
  %1130 = vst.msk [vmem:[%s2 + $0x30] sm:$0xff] %vm658, %v1066
  %1131 = vst.msk [vmem:[%s2 + $0x38] sm:$0xff] %vm658, %v1067
  %1132 = vst.msk [vmem:[%s2 + $0x40] sm:$0xff] %vm658, %v1068
  %1133 = vst.msk [vmem:[%s2 + $0x48] sm:$0xff] %vm658, %v1069
  %1134 = vst.msk [vmem:[%s2 + $0x50] sm:$0xff] %vm658, %v1070
  %1135 = vst.msk [vmem:[%s2 + $0x58] sm:$0xff] %vm658, %v1071
  %1136 = vst.msk [vmem:[%s2 + $0x60] sm:$0xff] %vm658, %v1072
  %1137 = vst.msk [vmem:[%s2 + $0x68] sm:$0xff] %vm658, %v1073
  %1138 = vst.msk [vmem:[%s2 + $0x70] sm:$0xff] %vm658, %v1074
  %1139 = vst.msk [vmem:[%s2 + $0x78] sm:$0xff] %vm658, %v1075
  %1140 = vst.msk [vmem:[%s2 + $0x80] sm:$0xff] %vm658, %v1076
  %1141 = vst.msk [vmem:[%s2 + $0x88] sm:$0xff] %vm658, %v1077
  %1142 = vst.msk [vmem:[%s2 + $0x90] sm:$0xff] %vm658, %v1078
  %1143 = vst.msk [vmem:[%s2 + $0x98] sm:$0xff] %vm658, %v1079
  %1144 = vst.msk [vmem:[%s2 + $0xa0] sm:$0xff] %vm658, %v1080
  %1145 = vst.msk [vmem:[%s2 + $0xa8] sm:$0xff] %vm658, %v1081
  %1146 = vst.msk [vmem:[%s2 + $0xb0] sm:$0xff] %vm658, %v1082
  %1147 = vst.msk [vmem:[%s2 + $0xb8] sm:$0xff] %vm658, %v1083
  %1148 = vst.msk [vmem:[%s2 + $0xc0] sm:$0xff] %vm658, %v1084
  %1149 = vst.msk [vmem:[%s2 + $0xc8] sm:$0xff] %vm658, %v1085
  %1150 = vst.msk [vmem:[%s2 + $0xd0] sm:$0xff] %vm658, %v1086
  %1151 = vst.msk [vmem:[%s2 + $0xd8] sm:$0xff] %vm658, %v1087
  %1152 = vst.msk [vmem:[%s2 + $0xe0] sm:$0xff] %vm658, %v1088
  %1153 = vst.msk [vmem:[%s2 + $0xe8] sm:$0xff] %vm658, %v1089
  %1154 = vst.msk [vmem:[%s2 + $0xf0] sm:$0xff] %vm658, %v1090
  %1155 = vst.msk [vmem:[%s2 + $0xf8] sm:$0xff] %vm658, %v1091
  %1156 = vst.msk [vmem:[%s2 + $0x100] sm:$0xff] %vm658, %v1092
  %1157 = vst.msk [vmem:[%s2 + $0x108] sm:$0xff] %vm658, %v1093
  %1158 = vst.msk [vmem:[%s2 + $0x110] sm:$0xff] %vm658, %v1094
  %1159 = vst.msk [vmem:[%s2 + $0x118] sm:$0xff] %vm658, %v1095
  %1160 = vst.msk [vmem:[%s2 + $0x120] sm:$0xff] %vm658, %v1096
  %1161 = vst.msk [vmem:[%s2 + $0x128] sm:$0xff] %vm658, %v1097
  %1162 = vst.msk [vmem:[%s2 + $0x130] sm:$0xff] %vm658, %v1098
  %1163 = vst.msk [vmem:[%s2 + $0x138] sm:$0xff] %vm658, %v1099
  %1164 = vst.msk [vmem:[%s2 + $0x140] sm:$0xff] %vm658, %v1100
  %1165 = vst.msk [vmem:[%s2 + $0x148] sm:$0xff] %vm658, %v1101
  %1166 = vst.msk [vmem:[%s2 + $0x150] sm:$0xff] %vm658, %v1102
  %1167 = vst.msk [vmem:[%s2 + $0x158] sm:$0xff] %vm658, %v1103
  %1168 = vst.msk [vmem:[%s2 + $0x160] sm:$0xff] %vm658, %v1104
  %1169 = vst.msk [vmem:[%s2 + $0x168] sm:$0xff] %vm658, %v1105
  %1170 = vst.msk [vmem:[%s2 + $0x170] sm:$0xff] %vm658, %v1106
  %1171 = vst.msk [vmem:[%s2 + $0x178] sm:$0xff] %vm658, %v1107
  %1172 = vst.msk [vmem:[%s2 + $0x180] sm:$0xff] %vm658, %v1108
  %1173 = vst.msk [vmem:[%s2 + $0x188] sm:$0xff] %vm658, %v1109
  %1174 = vst.msk [vmem:[%s2 + $0x190] sm:$0xff] %vm658, %v1110
  %1175 = vst.msk [vmem:[%s2 + $0x198] sm:$0xff] %vm658, %v1111
  %1176 = vst.msk [vmem:[%s2 + $0x1a0] sm:$0xff] %vm658, %v1112
  %1177 = vst.msk [vmem:[%s2 + $0x1a8] sm:$0xff] %vm658, %v1113
  %1178 = vst.msk [vmem:[%s2 + $0x1b0] sm:$0xff] %vm658, %v1114
  %1179 = vst.msk [vmem:[%s2 + $0x1b8] sm:$0xff] %vm658, %v1115
  %1180 = vst.msk [vmem:[%s2 + $0x1c0] sm:$0xff] %vm658, %v1116
  %1181 = vst.msk [vmem:[%s2 + $0x1c8] sm:$0xff] %vm658, %v1117
  %1182 = vst.msk [vmem:[%s2 + $0x1d0] sm:$0xff] %vm658, %v1118
  %1183 = vst.msk [vmem:[%s2 + $0x1d8] sm:$0xff] %vm658, %v1119
  %1184 = vst.msk [vmem:[%s2 + $0x1e0] sm:$0xff] %vm658, %v1120
  %1185 = vst.msk [vmem:[%s2 + $0x1e8] sm:$0xff] %vm658, %v1121
  %1186 = vst.msk [vmem:[%s2 + $0x1f0] sm:$0xff] %vm658, %v1122
  %1187 = vst.msk [vmem:[%s2 + $0x1f8] sm:$0xff] %vm658, %v1123
  // Predicated region
  $region10: #{forward.5} parent=0 // pred_check
    _
  $region11: #{forward.5} parent=0 // pred_check_branch
    %1189 = sbr.rel (0) target = $region13
  $region12: #{forward.5} parent=0 // pred_region
    _
  $region13: #{forward.5} parent=0 // pred_fallthru
    _
  // Predicated region
  $region14: #{forward.5} parent=0 // pred_check
    _
  $region15: #{forward.5} parent=0 // pred_check_branch
    %1191 = sbr.rel (0) target = $region17
  $region16: #{forward.5} parent=0 // pred_region
    _
  $region17: #{forward.5} parent=0 // pred_fallthru
    _

// kernel: forward.6
$region0: #{forward.6}
  #allocation0 [shape = 'u32[]', space=smem, size = 0x4, offset = 0x4, fixed_abs, tag = 'smem constant byte address 0x4 - core index']
  #allocation1 [shape = 'u32[144,128]{1,0:T(1,128)}', space=vmem, size = 0x12000, scoped, tag = 'internal scratch']
  %s0 = inlined_call_operand.vmem [shape: f32[450,128], index: 0, kind: input, shape index: {}]
  %s1 = inlined_call_operand.vmem [shape: f32[128,16], index: 1, kind: input, shape index: {}]
  %s2 = inlined_call_operand.vmem [shape: f32[1,16], index: 2, kind: input, shape index: {}]
  %s3 = inlined_call_operand.vmem [shape: f32[450,16], index: 3, kind: output, shape index: {}]
  %s4 = sld [smem:[#allocation0]]
  $region22: #{forward.6} parent=0
    _
  %s6 = ssub.s32 1, %s4
  %s7 = scalar_select 0, %s6, %s4
  // Predicated region
  $region2: #{forward.6} parent=0 // pred_check
    _
  $region3: #{forward.6} parent=0 // pred_check_branch
    %9 = sbr.rel (0) target = $region5
  $region4: #{forward.6} parent=0 // pred_region
    _
  $region5: #{forward.6} parent=0 // pred_fallthru
    _
  // Predicated region
  $region6: #{forward.6} parent=0 // pred_check
    _
  $region7: #{forward.6} parent=0 // pred_check_branch
    %11 = sbr.rel (0) target = $region9
  $region8: #{forward.6} parent=0 // pred_region
    _
  $region9: #{forward.6} parent=0 // pred_fallthru
    _
  // Predicated region
  $region10: #{forward.6} parent=0 // pred_check
    _
  $region11: #{forward.6} parent=0 // pred_check_branch
    %13 = sbr.rel (0) target = $region13
  $region12: #{forward.6} parent=0 // pred_region
    _
  $region13: #{forward.6} parent=0 // pred_fallthru
    _
  %v14 = vld [vmem:[%s0] sm:$0xff]
  %v15 = vld [vmem:[%s0 + $0x8] sm:$0xff]
  %v16 = vld [vmem:[%s0 + $0x10] sm:$0xff]
  %v17 = vld [vmem:[%s0 + $0x18] sm:$0xff]
  %v18 = vld [vmem:[%s0 + $0x20] sm:$0xff]
  %v19 = vld [vmem:[%s0 + $0x28] sm:$0xff]
  %v20 = vld [vmem:[%s0 + $0x30] sm:$0xff]
  %v21 = vld [vmem:[%s0 + $0x38] sm:$0xff]
  %v22 = vld [vmem:[%s0 + $0x40] sm:$0xff]
  %v23 = vld [vmem:[%s0 + $0x48] sm:$0xff]
  %v24 = vld [vmem:[%s0 + $0x50] sm:$0xff]
  %v25 = vld [vmem:[%s0 + $0x58] sm:$0xff]
  %v26 = vld [vmem:[%s0 + $0x60] sm:$0xff]
  %v27 = vld [vmem:[%s0 + $0x68] sm:$0xff]
  %v28 = vld [vmem:[%s0 + $0x70] sm:$0xff]
  %v29 = vld [vmem:[%s0 + $0x78] sm:$0xff]
  %v30 = vld [vmem:[%s0 + $0x80] sm:$0xff]
  %v31 = vld [vmem:[%s0 + $0x88] sm:$0xff]
  %v32 = vld [vmem:[%s0 + $0x90] sm:$0xff]
  %v33 = vld [vmem:[%s0 + $0x98] sm:$0xff]
  %v34 = vld [vmem:[%s0 + $0xa0] sm:$0xff]
  %v35 = vld [vmem:[%s0 + $0xa8] sm:$0xff]
  %v36 = vld [vmem:[%s0 + $0xb0] sm:$0xff]
  %v37 = vld [vmem:[%s0 + $0xb8] sm:$0xff]
  %v38 = vld [vmem:[%s0 + $0xc0] sm:$0xff]
  %v39 = vld [vmem:[%s0 + $0xc8] sm:$0xff]
  %v40 = vld [vmem:[%s0 + $0xd0] sm:$0xff]
  %v41 = vld [vmem:[%s0 + $0xd8] sm:$0xff]
  %v42 = vld [vmem:[%s0 + $0xe0] sm:$0xff]
  %v43 = vld [vmem:[%s0 + $0xe8] sm:$0xff]
  %v44 = vld [vmem:[%s0 + $0xf0] sm:$0xff]
  %v45 = vld [vmem:[%s0 + $0xf8] sm:$0xff]
  %v46 = vld [vmem:[%s0 + $0x100] sm:$0xff]
  %v47 = vld [vmem:[%s0 + $0x108] sm:$0xff]
  %v48 = vld [vmem:[%s0 + $0x110] sm:$0xff]
  %v49 = vld [vmem:[%s0 + $0x118] sm:$0xff]
  %v50 = vld [vmem:[%s0 + $0x120] sm:$0xff]
  %v51 = vld [vmem:[%s0 + $0x128] sm:$0xff]
  %v52 = vld [vmem:[%s0 + $0x130] sm:$0xff]
  %v53 = vld [vmem:[%s0 + $0x138] sm:$0xff]
  %v54 = vld [vmem:[%s0 + $0x140] sm:$0xff]
  %v55 = vld [vmem:[%s0 + $0x148] sm:$0xff]
  %v56 = vld [vmem:[%s0 + $0x150] sm:$0xff]
  %v57 = vld [vmem:[%s0 + $0x158] sm:$0xff]
  %v58 = vld [vmem:[%s0 + $0x160] sm:$0xff]
  %v59 = vld [vmem:[%s0 + $0x168] sm:$0xff]
  %v60 = vld [vmem:[%s0 + $0x170] sm:$0xff]
  %v61 = vld [vmem:[%s0 + $0x178] sm:$0xff]
  %v62 = vld [vmem:[%s0 + $0x180] sm:$0xff]
  %v63 = vld [vmem:[%s0 + $0x188] sm:$0xff]
  %v64 = vld [vmem:[%s0 + $0x190] sm:$0xff]
  %v65 = vld [vmem:[%s0 + $0x198] sm:$0xff]
  %v66 = vld [vmem:[%s0 + $0x1a0] sm:$0xff]
  %v67 = vld [vmem:[%s0 + $0x1a8] sm:$0xff]
  %v68 = vld [vmem:[%s0 + $0x1b0] sm:$0xff]
  %v69 = vld [vmem:[%s0 + $0x1b8] sm:$0xff]
  %v70 = vld [vmem:[%s0 + $0x1c0] sm:$0x3]
  %v71 = vld [vmem:[%s1] sm:$0xff]
  %v72 = vld [vmem:[%s1 + $0x8] sm:$0xff]
  %v73 = vld [vmem:[%s1 + $0x10] sm:$0xff]
  %v74 = vld [vmem:[%s1 + $0x18] sm:$0xff]
  %v75 = vld [vmem:[%s1 + $0x20] sm:$0xff]
  %v76 = vld [vmem:[%s1 + $0x28] sm:$0xff]
  %v77 = vld [vmem:[%s1 + $0x30] sm:$0xff]
  %v78 = vld [vmem:[%s1 + $0x38] sm:$0xff]
  %v79 = vld [vmem:[%s1 + $0x40] sm:$0xff]
  %v80 = vld [vmem:[%s1 + $0x48] sm:$0xff]
  %v81 = vld [vmem:[%s1 + $0x50] sm:$0xff]
  %v82 = vld [vmem:[%s1 + $0x58] sm:$0xff]
  %v83 = vld [vmem:[%s1 + $0x60] sm:$0xff]
  %v84 = vld [vmem:[%s1 + $0x68] sm:$0xff]
  %v85 = vld [vmem:[%s1 + $0x70] sm:$0xff]
  %v86 = vld [vmem:[%s1 + $0x78] sm:$0xff]
  %v87 = vld [vmem:[%s2] sm:$0x1]
  %v89 = vlaneseq
  %v90 = vshrl.u32 %v89, 7
  %v91 = vsub.s32 0, %v90
  %v92 = vrot.slane %v87, %v91
  %94 = vmatprep.subr.mxu0 0.0
  %95 = vmatpush1.msra.mxu0 %v86
  %96 = vmatprep.subr.mxu0 0.0
  %97 = vmatpush1.msra.mxu0 %v85
  %98 = vmatprep.subr.mxu0 0.0
  %99 = vmatpush1.msra.mxu0 %v84
  %100 = vmatprep.subr.mxu0 0.0
  %101 = vmatpush1.msra.mxu0 %v83
  %102 = vmatprep.subr.mxu0 0.0
  %103 = vmatpush1.msra.mxu0 %v82
  %104 = vmatprep.subr.mxu0 0.0
  %105 = vmatpush1.msra.mxu0 %v81
  %106 = vmatprep.subr.mxu0 0.0
  %107 = vmatpush1.msra.mxu0 %v80
  %108 = vmatprep.subr.mxu0 0.0
  %109 = vmatpush1.msra.mxu0 %v79
  %110 = vmatprep.subr.mxu0 0.0
  %111 = vmatpush1.msra.mxu0 %v78
  %112 = vmatprep.subr.mxu0 0.0
  %113 = vmatpush1.msra.mxu0 %v77
  %114 = vmatprep.subr.mxu0 0.0
  %115 = vmatpush1.msra.mxu0 %v76
  %116 = vmatprep.subr.mxu0 0.0
  %117 = vmatpush1.msra.mxu0 %v75
  %118 = vmatprep.subr.mxu0 0.0
  %119 = vmatpush1.msra.mxu0 %v74
  %120 = vmatprep.subr.mxu0 0.0
  %121 = vmatpush1.msra.mxu0 %v73
  %122 = vmatprep.subr.mxu0 0.0
  %123 = vmatpush1.msra.mxu0 %v72
  %124 = vmatprep.subr.mxu0 0.0
  %125 = vmatpush1.msra.mxu0 %v71
  %126 = vmatprep.subr.mxu0 0.0
  %127 = vmatpush2.msra.mxu0 0.0
  %128 = vmatprep.subr.mxu0 0.0
  %129 = vmatpush2.msra.mxu0 0.0
  %130 = vmatprep.subr.mxu0 0.0
  %131 = vmatpush2.msra.mxu0 0.0
  %132 = vmatprep.subr.mxu0 0.0
  %133 = vmatpush2.msra.mxu0 0.0
  %134 = vmatprep.subr.mxu0 0.0
  %135 = vmatpush2.msra.mxu0 0.0
  %136 = vmatprep.subr.mxu0 0.0
  %137 = vmatpush2.msra.mxu0 0.0
  %138 = vmatprep.subr.mxu0 0.0
  %139 = vmatpush2.msra.mxu0 0.0
  %140 = vmatprep.subr.mxu0 0.0
  %141 = vmatpush2.msra.mxu0 0.0
  %142 = vmatprep.subr.mxu0 0.0
  %143 = vmatpush2.msra.mxu0 0.0
  %144 = vmatprep.subr.mxu0 0.0
  %145 = vmatpush2.msra.mxu0 0.0
  %146 = vmatprep.subr.mxu0 0.0
  %147 = vmatpush2.msra.mxu0 0.0
  %148 = vmatprep.subr.mxu0 0.0
  %149 = vmatpush2.msra.mxu0 0.0
  %150 = vmatprep.subr.mxu0 0.0
  %151 = vmatpush2.msra.mxu0 0.0
  %152 = vmatprep.subr.mxu0 0.0
  %153 = vmatpush2.msra.mxu0 0.0
  %154 = vmatprep.subr.mxu0 0.0
  %155 = vmatpush2.msra.mxu0 0.0
  %156 = vmatprep.subr.mxu0 0.0
  %157 = vmatpush2.msra.mxu0 0.0
  %158 = vmatprep.mubr.f32.mxu0 0.0
  %159 = vmatmul.mubr.f32.gmra.mxu0 %v14
  %v160 = vpop.f32.mrf.mxu0
  %v161 = vadd.f32 %v92, %v160
  %v162 = vpop.f32.mrf.mxu0
  %163 = vmatprep.mubr.f32.mxu0 0.0
  %164 = vmatmul.mubr.f32.gmra.mxu0 %v15
  %v165 = vpop.f32.mrf.mxu0
  %v166 = vadd.f32 %v92, %v165
  %v167 = vpop.f32.mrf.mxu0
  %168 = vmatprep.mubr.f32.mxu0 0.0
  %169 = vmatmul.mubr.f32.gmra.mxu0 %v16
  %v170 = vpop.f32.mrf.mxu0
  %v171 = vadd.f32 %v92, %v170
  %v172 = vpop.f32.mrf.mxu0
  %173 = vmatprep.mubr.f32.mxu0 0.0
  %174 = vmatmul.mubr.f32.gmra.mxu0 %v17
  %v175 = vpop.f32.mrf.mxu0
  %v176 = vadd.f32 %v92, %v175
  %v177 = vpop.f32.mrf.mxu0
  %178 = vmatprep.mubr.f32.mxu0 0.0
  %179 = vmatmul.mubr.f32.gmra.mxu0 %v18
  %v180 = vpop.f32.mrf.mxu0
  %v181 = vadd.f32 %v92, %v180
  %v182 = vpop.f32.mrf.mxu0
  %183 = vmatprep.mubr.f32.mxu0 0.0
  %184 = vmatmul.mubr.f32.gmra.mxu0 %v19
  %v185 = vpop.f32.mrf.mxu0
  %v186 = vadd.f32 %v92, %v185
  %v187 = vpop.f32.mrf.mxu0
  %188 = vmatprep.mubr.f32.mxu0 0.0
  %189 = vmatmul.mubr.f32.gmra.mxu0 %v20
  %v190 = vpop.f32.mrf.mxu0
  %v191 = vadd.f32 %v92, %v190
  %v192 = vpop.f32.mrf.mxu0
  %193 = vmatprep.mubr.f32.mxu0 0.0
  %194 = vmatmul.mubr.f32.gmra.mxu0 %v21
  %v195 = vpop.f32.mrf.mxu0
  %v196 = vadd.f32 %v92, %v195
  %v197 = vpop.f32.mrf.mxu0
  %198 = vmatprep.mubr.f32.mxu0 0.0
  %199 = vmatmul.mubr.f32.gmra.mxu0 %v22
  %v200 = vpop.f32.mrf.mxu0
  %v201 = vadd.f32 %v92, %v200
  %v202 = vpop.f32.mrf.mxu0
  %203 = vmatprep.mubr.f32.mxu0 0.0
  %204 = vmatmul.mubr.f32.gmra.mxu0 %v23
  %v205 = vpop.f32.mrf.mxu0
  %v206 = vadd.f32 %v92, %v205
  %v207 = vpop.f32.mrf.mxu0
  %208 = vmatprep.mubr.f32.mxu0 0.0
  %209 = vmatmul.mubr.f32.gmra.mxu0 %v24
  %v210 = vpop.f32.mrf.mxu0
  %v211 = vadd.f32 %v92, %v210
  %v212 = vpop.f32.mrf.mxu0
  %213 = vmatprep.mubr.f32.mxu0 0.0
  %214 = vmatmul.mubr.f32.gmra.mxu0 %v25
  %v215 = vpop.f32.mrf.mxu0
  %v216 = vadd.f32 %v92, %v215
  %v217 = vpop.f32.mrf.mxu0
  %218 = vmatprep.mubr.f32.mxu0 0.0
  %219 = vmatmul.mubr.f32.gmra.mxu0 %v26
  %v220 = vpop.f32.mrf.mxu0
  %v221 = vadd.f32 %v92, %v220
  %v222 = vpop.f32.mrf.mxu0
  %223 = vmatprep.mubr.f32.mxu0 0.0
  %224 = vmatmul.mubr.f32.gmra.mxu0 %v27
  %v225 = vpop.f32.mrf.mxu0
  %v226 = vadd.f32 %v92, %v225
  %v227 = vpop.f32.mrf.mxu0
  %228 = vmatprep.mubr.f32.mxu0 0.0
  %229 = vmatmul.mubr.f32.gmra.mxu0 %v28
  %v230 = vpop.f32.mrf.mxu0
  %v231 = vadd.f32 %v92, %v230
  %v232 = vpop.f32.mrf.mxu0
  %233 = vmatprep.mubr.f32.mxu0 0.0
  %234 = vmatmul.mubr.f32.gmra.mxu0 %v29
  %v235 = vpop.f32.mrf.mxu0
  %v236 = vadd.f32 %v92, %v235
  %v237 = vpop.f32.mrf.mxu0
  %238 = vmatprep.mubr.f32.mxu0 0.0
  %239 = vmatmul.mubr.f32.gmra.mxu0 %v30
  %v240 = vpop.f32.mrf.mxu0
  %v241 = vadd.f32 %v92, %v240
  %v242 = vpop.f32.mrf.mxu0
  %243 = vmatprep.mubr.f32.mxu0 0.0
  %244 = vmatmul.mubr.f32.gmra.mxu0 %v31
  %v245 = vpop.f32.mrf.mxu0
  %v246 = vadd.f32 %v92, %v245
  %v247 = vpop.f32.mrf.mxu0
  %248 = vmatprep.mubr.f32.mxu0 0.0
  %249 = vmatmul.mubr.f32.gmra.mxu0 %v32
  %v250 = vpop.f32.mrf.mxu0
  %v251 = vadd.f32 %v92, %v250
  %v252 = vpop.f32.mrf.mxu0
  %253 = vmatprep.mubr.f32.mxu0 0.0
  %254 = vmatmul.mubr.f32.gmra.mxu0 %v33
  %v255 = vpop.f32.mrf.mxu0
  %v256 = vadd.f32 %v92, %v255
  %v257 = vpop.f32.mrf.mxu0
  %258 = vmatprep.mubr.f32.mxu0 0.0
  %259 = vmatmul.mubr.f32.gmra.mxu0 %v34
  %v260 = vpop.f32.mrf.mxu0
  %v261 = vadd.f32 %v92, %v260
  %v262 = vpop.f32.mrf.mxu0
  %263 = vmatprep.mubr.f32.mxu0 0.0
  %264 = vmatmul.mubr.f32.gmra.mxu0 %v35
  %v265 = vpop.f32.mrf.mxu0
  %v266 = vadd.f32 %v92, %v265
  %v267 = vpop.f32.mrf.mxu0
  %268 = vmatprep.mubr.f32.mxu0 0.0
  %269 = vmatmul.mubr.f32.gmra.mxu0 %v36
  %v270 = vpop.f32.mrf.mxu0
  %v271 = vadd.f32 %v92, %v270
  %v272 = vpop.f32.mrf.mxu0
  %273 = vmatprep.mubr.f32.mxu0 0.0
  %274 = vmatmul.mubr.f32.gmra.mxu0 %v37
  %v275 = vpop.f32.mrf.mxu0
  %v276 = vadd.f32 %v92, %v275
  %v277 = vpop.f32.mrf.mxu0
  %278 = vmatprep.mubr.f32.mxu0 0.0
  %279 = vmatmul.mubr.f32.gmra.mxu0 %v38
  %v280 = vpop.f32.mrf.mxu0
  %v281 = vadd.f32 %v92, %v280
  %v282 = vpop.f32.mrf.mxu0
  %283 = vmatprep.mubr.f32.mxu0 0.0
  %284 = vmatmul.mubr.f32.gmra.mxu0 %v39
  %v285 = vpop.f32.mrf.mxu0
  %v286 = vadd.f32 %v92, %v285
  %v287 = vpop.f32.mrf.mxu0
  %288 = vmatprep.mubr.f32.mxu0 0.0
  %289 = vmatmul.mubr.f32.gmra.mxu0 %v40
  %v290 = vpop.f32.mrf.mxu0
  %v291 = vadd.f32 %v92, %v290
  %v292 = vpop.f32.mrf.mxu0
  %293 = vmatprep.mubr.f32.mxu0 0.0
  %294 = vmatmul.mubr.f32.gmra.mxu0 %v41
  %v295 = vpop.f32.mrf.mxu0
  %v296 = vadd.f32 %v92, %v295
  %v297 = vpop.f32.mrf.mxu0
  %298 = vmatprep.mubr.f32.mxu0 0.0
  %299 = vmatmul.mubr.f32.gmra.mxu0 %v42
  %v300 = vpop.f32.mrf.mxu0
  %v301 = vadd.f32 %v92, %v300
  %v302 = vpop.f32.mrf.mxu0
  %303 = vmatprep.mubr.f32.mxu0 0.0
  %304 = vmatmul.mubr.f32.gmra.mxu0 %v43
  %v305 = vpop.f32.mrf.mxu0
  %v306 = vadd.f32 %v92, %v305
  %v307 = vpop.f32.mrf.mxu0
  %308 = vmatprep.mubr.f32.mxu0 0.0
  %309 = vmatmul.mubr.f32.gmra.mxu0 %v44
  %v310 = vpop.f32.mrf.mxu0
  %v311 = vadd.f32 %v92, %v310
  %v312 = vpop.f32.mrf.mxu0
  %313 = vmatprep.mubr.f32.mxu0 0.0
  %314 = vmatmul.mubr.f32.gmra.mxu0 %v45
  %v315 = vpop.f32.mrf.mxu0
  %v316 = vadd.f32 %v92, %v315
  %v317 = vpop.f32.mrf.mxu0
  %318 = vmatprep.mubr.f32.mxu0 0.0
  %319 = vmatmul.mubr.f32.gmra.mxu0 %v46
  %v320 = vpop.f32.mrf.mxu0
  %v321 = vadd.f32 %v92, %v320
  %v322 = vpop.f32.mrf.mxu0
  %323 = vmatprep.mubr.f32.mxu0 0.0
  %324 = vmatmul.mubr.f32.gmra.mxu0 %v47
  %v325 = vpop.f32.mrf.mxu0
  %v326 = vadd.f32 %v92, %v325
  %v327 = vpop.f32.mrf.mxu0
  %328 = vmatprep.mubr.f32.mxu0 0.0
  %329 = vmatmul.mubr.f32.gmra.mxu0 %v48
  %v330 = vpop.f32.mrf.mxu0
  %v331 = vadd.f32 %v92, %v330
  %v332 = vpop.f32.mrf.mxu0
  %333 = vmatprep.mubr.f32.mxu0 0.0
  %334 = vmatmul.mubr.f32.gmra.mxu0 %v49
  %v335 = vpop.f32.mrf.mxu0
  %v336 = vadd.f32 %v92, %v335
  %v337 = vpop.f32.mrf.mxu0
  %338 = vmatprep.mubr.f32.mxu0 0.0
  %339 = vmatmul.mubr.f32.gmra.mxu0 %v50
  %v340 = vpop.f32.mrf.mxu0
  %v341 = vadd.f32 %v92, %v340
  %v342 = vpop.f32.mrf.mxu0
  %343 = vmatprep.mubr.f32.mxu0 0.0
  %344 = vmatmul.mubr.f32.gmra.mxu0 %v51
  %v345 = vpop.f32.mrf.mxu0
  %v346 = vadd.f32 %v92, %v345
  %v347 = vpop.f32.mrf.mxu0
  %348 = vmatprep.mubr.f32.mxu0 0.0
  %349 = vmatmul.mubr.f32.gmra.mxu0 %v52
  %v350 = vpop.f32.mrf.mxu0
  %v351 = vadd.f32 %v92, %v350
  %v352 = vpop.f32.mrf.mxu0
  %353 = vmatprep.mubr.f32.mxu0 0.0
  %354 = vmatmul.mubr.f32.gmra.mxu0 %v53
  %v355 = vpop.f32.mrf.mxu0
  %v356 = vadd.f32 %v92, %v355
  %v357 = vpop.f32.mrf.mxu0
  %358 = vmatprep.mubr.f32.mxu0 0.0
  %359 = vmatmul.mubr.f32.gmra.mxu0 %v54
  %v360 = vpop.f32.mrf.mxu0
  %v361 = vadd.f32 %v92, %v360
  %v362 = vpop.f32.mrf.mxu0
  %363 = vmatprep.mubr.f32.mxu0 0.0
  %364 = vmatmul.mubr.f32.gmra.mxu0 %v55
  %v365 = vpop.f32.mrf.mxu0
  %v366 = vadd.f32 %v92, %v365
  %v367 = vpop.f32.mrf.mxu0
  %368 = vmatprep.mubr.f32.mxu0 0.0
  %369 = vmatmul.mubr.f32.gmra.mxu0 %v56
  %v370 = vpop.f32.mrf.mxu0
  %v371 = vadd.f32 %v92, %v370
  %v372 = vpop.f32.mrf.mxu0
  %373 = vmatprep.mubr.f32.mxu0 0.0
  %374 = vmatmul.mubr.f32.gmra.mxu0 %v57
  %v375 = vpop.f32.mrf.mxu0
  %v376 = vadd.f32 %v92, %v375
  %v377 = vpop.f32.mrf.mxu0
  %378 = vmatprep.mubr.f32.mxu0 0.0
  %379 = vmatmul.mubr.f32.gmra.mxu0 %v58
  %v380 = vpop.f32.mrf.mxu0
  %v381 = vadd.f32 %v92, %v380
  %v382 = vpop.f32.mrf.mxu0
  %383 = vmatprep.mubr.f32.mxu0 0.0
  %384 = vmatmul.mubr.f32.gmra.mxu0 %v59
  %v385 = vpop.f32.mrf.mxu0
  %v386 = vadd.f32 %v92, %v385
  %v387 = vpop.f32.mrf.mxu0
  %388 = vmatprep.mubr.f32.mxu0 0.0
  %389 = vmatmul.mubr.f32.gmra.mxu0 %v60
  %v390 = vpop.f32.mrf.mxu0
  %v391 = vadd.f32 %v92, %v390
  %v392 = vpop.f32.mrf.mxu0
  %393 = vmatprep.mubr.f32.mxu0 0.0
  %394 = vmatmul.mubr.f32.gmra.mxu0 %v61
  %v395 = vpop.f32.mrf.mxu0
  %v396 = vadd.f32 %v92, %v395
  %v397 = vpop.f32.mrf.mxu0
  %398 = vmatprep.mubr.f32.mxu0 0.0
  %399 = vmatmul.mubr.f32.gmra.mxu0 %v62
  %v400 = vpop.f32.mrf.mxu0
  %v401 = vadd.f32 %v92, %v400
  %v402 = vpop.f32.mrf.mxu0
  %403 = vmatprep.mubr.f32.mxu0 0.0
  %404 = vmatmul.mubr.f32.gmra.mxu0 %v63
  %v405 = vpop.f32.mrf.mxu0
  %v406 = vadd.f32 %v92, %v405
  %v407 = vpop.f32.mrf.mxu0
  %408 = vmatprep.mubr.f32.mxu0 0.0
  %409 = vmatmul.mubr.f32.gmra.mxu0 %v64
  %v410 = vpop.f32.mrf.mxu0
  %v411 = vadd.f32 %v92, %v410
  %v412 = vpop.f32.mrf.mxu0
  %413 = vmatprep.mubr.f32.mxu0 0.0
  %414 = vmatmul.mubr.f32.gmra.mxu0 %v65
  %v415 = vpop.f32.mrf.mxu0
  %v416 = vadd.f32 %v92, %v415
  %v417 = vpop.f32.mrf.mxu0
  %418 = vmatprep.mubr.f32.mxu0 0.0
  %419 = vmatmul.mubr.f32.gmra.mxu0 %v66
  %v420 = vpop.f32.mrf.mxu0
  %v421 = vadd.f32 %v92, %v420
  %v422 = vpop.f32.mrf.mxu0
  %423 = vmatprep.mubr.f32.mxu0 0.0
  %424 = vmatmul.mubr.f32.gmra.mxu0 %v67
  %v425 = vpop.f32.mrf.mxu0
  %v426 = vadd.f32 %v92, %v425
  %v427 = vpop.f32.mrf.mxu0
  %428 = vmatprep.mubr.f32.mxu0 0.0
  %429 = vmatmul.mubr.f32.gmra.mxu0 %v68
  %v430 = vpop.f32.mrf.mxu0
  %v431 = vadd.f32 %v92, %v430
  %v432 = vpop.f32.mrf.mxu0
  %433 = vmatprep.mubr.f32.mxu0 0.0
  %434 = vmatmul.mubr.f32.gmra.mxu0 %v69
  %v435 = vpop.f32.mrf.mxu0
  %v436 = vadd.f32 %v92, %v435
  %v437 = vpop.f32.mrf.mxu0
  %438 = vmatprep.mubr.f32.mxu0 0.0
  %439 = vmatmul.mubr.f32.gmra.mxu0 %v70
  %v440 = vpop.f32.mrf.mxu0
  %v441 = vadd.f32 %v92, %v440
  %v442 = vpop.f32.mrf.mxu0
  %443 = vdwg.mxu0
  %vm444 = vcmask 130048
  %445 = vst.msk [vmem:[%s3] sm:$0xff] %vm444, %v161
  %446 = vst.msk [vmem:[%s3 + $0x8] sm:$0xff] %vm444, %v166
  %447 = vst.msk [vmem:[%s3 + $0x10] sm:$0xff] %vm444, %v171
  %448 = vst.msk [vmem:[%s3 + $0x18] sm:$0xff] %vm444, %v176
  %449 = vst.msk [vmem:[%s3 + $0x20] sm:$0xff] %vm444, %v181
  %450 = vst.msk [vmem:[%s3 + $0x28] sm:$0xff] %vm444, %v186
  %451 = vst.msk [vmem:[%s3 + $0x30] sm:$0xff] %vm444, %v191
  %452 = vst.msk [vmem:[%s3 + $0x38] sm:$0xff] %vm444, %v196
  %453 = vst.msk [vmem:[%s3 + $0x40] sm:$0xff] %vm444, %v201
  %454 = vst.msk [vmem:[%s3 + $0x48] sm:$0xff] %vm444, %v206
  %455 = vst.msk [vmem:[%s3 + $0x50] sm:$0xff] %vm444, %v211
  %456 = vst.msk [vmem:[%s3 + $0x58] sm:$0xff] %vm444, %v216
  %457 = vst.msk [vmem:[%s3 + $0x60] sm:$0xff] %vm444, %v221
  %458 = vst.msk [vmem:[%s3 + $0x68] sm:$0xff] %vm444, %v226
  %459 = vst.msk [vmem:[%s3 + $0x70] sm:$0xff] %vm444, %v231
  %460 = vst.msk [vmem:[%s3 + $0x78] sm:$0xff] %vm444, %v236
  %461 = vst.msk [vmem:[%s3 + $0x80] sm:$0xff] %vm444, %v241
  %462 = vst.msk [vmem:[%s3 + $0x88] sm:$0xff] %vm444, %v246
  %463 = vst.msk [vmem:[%s3 + $0x90] sm:$0xff] %vm444, %v251
  %464 = vst.msk [vmem:[%s3 + $0x98] sm:$0xff] %vm444, %v256
  %465 = vst.msk [vmem:[%s3 + $0xa0] sm:$0xff] %vm444, %v261
  %466 = vst.msk [vmem:[%s3 + $0xa8] sm:$0xff] %vm444, %v266
  %467 = vst.msk [vmem:[%s3 + $0xb0] sm:$0xff] %vm444, %v271
  %468 = vst.msk [vmem:[%s3 + $0xb8] sm:$0xff] %vm444, %v276
  %469 = vst.msk [vmem:[%s3 + $0xc0] sm:$0xff] %vm444, %v281
  %470 = vst.msk [vmem:[%s3 + $0xc8] sm:$0xff] %vm444, %v286
  %471 = vst.msk [vmem:[%s3 + $0xd0] sm:$0xff] %vm444, %v291
  %472 = vst.msk [vmem:[%s3 + $0xd8] sm:$0xff] %vm444, %v296
  %473 = vst.msk [vmem:[%s3 + $0xe0] sm:$0xff] %vm444, %v301
  %474 = vst.msk [vmem:[%s3 + $0xe8] sm:$0xff] %vm444, %v306
  %475 = vst.msk [vmem:[%s3 + $0xf0] sm:$0xff] %vm444, %v311
  %476 = vst.msk [vmem:[%s3 + $0xf8] sm:$0xff] %vm444, %v316
  %477 = vst.msk [vmem:[%s3 + $0x100] sm:$0xff] %vm444, %v321
  %478 = vst.msk [vmem:[%s3 + $0x108] sm:$0xff] %vm444, %v326
  %479 = vst.msk [vmem:[%s3 + $0x110] sm:$0xff] %vm444, %v331
  %480 = vst.msk [vmem:[%s3 + $0x118] sm:$0xff] %vm444, %v336
  %481 = vst.msk [vmem:[%s3 + $0x120] sm:$0xff] %vm444, %v341
  %482 = vst.msk [vmem:[%s3 + $0x128] sm:$0xff] %vm444, %v346
  %483 = vst.msk [vmem:[%s3 + $0x130] sm:$0xff] %vm444, %v351
  %484 = vst.msk [vmem:[%s3 + $0x138] sm:$0xff] %vm444, %v356
  %485 = vst.msk [vmem:[%s3 + $0x140] sm:$0xff] %vm444, %v361
  %486 = vst.msk [vmem:[%s3 + $0x148] sm:$0xff] %vm444, %v366
  %487 = vst.msk [vmem:[%s3 + $0x150] sm:$0xff] %vm444, %v371
  %488 = vst.msk [vmem:[%s3 + $0x158] sm:$0xff] %vm444, %v376
  %489 = vst.msk [vmem:[%s3 + $0x160] sm:$0xff] %vm444, %v381
  %490 = vst.msk [vmem:[%s3 + $0x168] sm:$0xff] %vm444, %v386
  %491 = vst.msk [vmem:[%s3 + $0x170] sm:$0xff] %vm444, %v391
  %492 = vst.msk [vmem:[%s3 + $0x178] sm:$0xff] %vm444, %v396
  %493 = vst.msk [vmem:[%s3 + $0x180] sm:$0xff] %vm444, %v401
  %494 = vst.msk [vmem:[%s3 + $0x188] sm:$0xff] %vm444, %v406
  %495 = vst.msk [vmem:[%s3 + $0x190] sm:$0xff] %vm444, %v411
  %496 = vst.msk [vmem:[%s3 + $0x198] sm:$0xff] %vm444, %v416
  %497 = vst.msk [vmem:[%s3 + $0x1a0] sm:$0xff] %vm444, %v421
  %498 = vst.msk [vmem:[%s3 + $0x1a8] sm:$0xff] %vm444, %v426
  %499 = vst.msk [vmem:[%s3 + $0x1b0] sm:$0xff] %vm444, %v431
  %500 = vst.msk [vmem:[%s3 + $0x1b8] sm:$0xff] %vm444, %v436
  %vm501 = vcmask 123904
  %502 = vst.msk [vmem:[%s3 + $0x1c0] sm:$0x3] %vm501, %v441
  // Predicated region
  $region14: #{forward.6} parent=0 // pred_check
    _
  $region15: #{forward.6} parent=0 // pred_check_branch
    %504 = sbr.rel (0) target = $region17
  $region16: #{forward.6} parent=0 // pred_region
    _
  $region17: #{forward.6} parent=0 // pred_fallthru
    _
  // Predicated region
  $region18: #{forward.6} parent=0 // pred_check
    _
  $region19: #{forward.6} parent=0 // pred_check_branch
    %506 = sbr.rel (0) target = $region21
  $region20: #{forward.6} parent=0 // pred_region
    _
  $region21: #{forward.6} parent=0 // pred_fallthru
    _

// kernel: forward.7
$region0: #{forward.7}
  #allocation0 [shape = 'u32[]', space=smem, size = 0x4, offset = 0x4, fixed_abs, tag = 'smem constant byte address 0x4 - core index']
  #allocation1 [shape = 'u32[144,128]{1,0:T(1,128)}', space=vmem, size = 0x12000, scoped, tag = 'internal scratch']
  %s0 = inlined_call_operand.vmem [shape: f32[450,144], index: 0, kind: input, shape index: {}]
  %s1 = inlined_call_operand.vmem [shape: f32[144,16], index: 1, kind: input, shape index: {}]
  %s2 = inlined_call_operand.vmem [shape: f32[450,16], index: 2, kind: input, shape index: {}]
  %s3 = inlined_call_operand.vmem [shape: f32[450,16], index: 3, kind: output, shape index: {}]
  %s4 = sld [smem:[#allocation0]]
  $region22: #{forward.7} parent=0
    _
  %s6 = ssub.s32 1, %s4
  %s7 = scalar_select 0, %s6, %s4
  // Predicated region
  $region2: #{forward.7} parent=0 // pred_check
    _
  $region3: #{forward.7} parent=0 // pred_check_branch
    %9 = sbr.rel (0) target = $region5
  $region4: #{forward.7} parent=0 // pred_region
    _
  $region5: #{forward.7} parent=0 // pred_fallthru
    _
  // Predicated region
  $region6: #{forward.7} parent=0 // pred_check
    _
  $region7: #{forward.7} parent=0 // pred_check_branch
    %11 = sbr.rel (0) target = $region9
  $region8: #{forward.7} parent=0 // pred_region
    _
  $region9: #{forward.7} parent=0 // pred_fallthru
    _
  // Predicated region
  $region10: #{forward.7} parent=0 // pred_check
    _
  $region11: #{forward.7} parent=0 // pred_check_branch
    %13 = sbr.rel (0) target = $region13
  $region12: #{forward.7} parent=0 // pred_region
    _
  $region13: #{forward.7} parent=0 // pred_fallthru
    _
  %v14 = vld [vmem:[%s0] sm:$0xff]
  %v15 = vld [vmem:[%s0 + $0x8] sm:$0xff]
  %v16 = vld [vmem:[%s0 + $0x10] sm:$0xff]
  %v17 = vld [vmem:[%s0 + $0x18] sm:$0xff]
  %v18 = vld [vmem:[%s0 + $0x20] sm:$0xff]
  %v19 = vld [vmem:[%s0 + $0x28] sm:$0xff]
  %v20 = vld [vmem:[%s0 + $0x30] sm:$0xff]
  %v21 = vld [vmem:[%s0 + $0x38] sm:$0xff]
  %v22 = vld [vmem:[%s0 + $0x40] sm:$0xff]
  %v23 = vld [vmem:[%s0 + $0x48] sm:$0xff]
  %v24 = vld [vmem:[%s0 + $0x50] sm:$0xff]
  %v25 = vld [vmem:[%s0 + $0x58] sm:$0xff]
  %v26 = vld [vmem:[%s0 + $0x60] sm:$0xff]
  %v27 = vld [vmem:[%s0 + $0x68] sm:$0xff]
  %v28 = vld [vmem:[%s0 + $0x70] sm:$0xff]
  %v29 = vld [vmem:[%s0 + $0x78] sm:$0xff]
  %v30 = vld [vmem:[%s0 + $0x80] sm:$0xff]
  %v31 = vld [vmem:[%s0 + $0x88] sm:$0xff]
  %v32 = vld [vmem:[%s0 + $0x90] sm:$0xff]
  %v33 = vld [vmem:[%s0 + $0x98] sm:$0xff]
  %v34 = vld [vmem:[%s0 + $0xa0] sm:$0xff]
  %v35 = vld [vmem:[%s0 + $0xa8] sm:$0xff]
  %v36 = vld [vmem:[%s0 + $0xb0] sm:$0xff]
  %v37 = vld [vmem:[%s0 + $0xb8] sm:$0xff]
  %v38 = vld [vmem:[%s0 + $0xc0] sm:$0xff]
  %v39 = vld [vmem:[%s0 + $0xc8] sm:$0xff]
  %v40 = vld [vmem:[%s0 + $0xd0] sm:$0xff]
  %v41 = vld [vmem:[%s0 + $0xd8] sm:$0xff]
  %v42 = vld [vmem:[%s0 + $0xe0] sm:$0xff]
  %v43 = vld [vmem:[%s0 + $0xe8] sm:$0xff]
  %v44 = vld [vmem:[%s0 + $0xf0] sm:$0xff]
  %v45 = vld [vmem:[%s0 + $0xf8] sm:$0xff]
  %v46 = vld [vmem:[%s0 + $0x100] sm:$0xff]
  %v47 = vld [vmem:[%s0 + $0x108] sm:$0xff]
  %v48 = vld [vmem:[%s0 + $0x110] sm:$0xff]
  %v49 = vld [vmem:[%s0 + $0x118] sm:$0xff]
  %v50 = vld [vmem:[%s0 + $0x120] sm:$0xff]
  %v51 = vld [vmem:[%s0 + $0x128] sm:$0xff]
  %v52 = vld [vmem:[%s0 + $0x130] sm:$0xff]
  %v53 = vld [vmem:[%s0 + $0x138] sm:$0xff]
  %v54 = vld [vmem:[%s0 + $0x140] sm:$0xff]
  %v55 = vld [vmem:[%s0 + $0x148] sm:$0xff]
  %v56 = vld [vmem:[%s0 + $0x150] sm:$0xff]
  %v57 = vld [vmem:[%s0 + $0x158] sm:$0xff]
  %v58 = vld [vmem:[%s0 + $0x160] sm:$0xff]
  %v59 = vld [vmem:[%s0 + $0x168] sm:$0xff]
  %v60 = vld [vmem:[%s0 + $0x170] sm:$0xff]
  %v61 = vld [vmem:[%s0 + $0x178] sm:$0xff]
  %v62 = vld [vmem:[%s0 + $0x180] sm:$0xff]
  %v63 = vld [vmem:[%s0 + $0x188] sm:$0xff]
  %v64 = vld [vmem:[%s0 + $0x190] sm:$0xff]
  %v65 = vld [vmem:[%s0 + $0x198] sm:$0xff]
  %v66 = vld [vmem:[%s0 + $0x1a0] sm:$0xff]
  %v67 = vld [vmem:[%s0 + $0x1a8] sm:$0xff]
  %v68 = vld [vmem:[%s0 + $0x1b0] sm:$0xff]
  %v69 = vld [vmem:[%s0 + $0x1b8] sm:$0xff]
  %v70 = vld [vmem:[%s0 + $0x1c0] sm:$0xff]
  %v71 = vld [vmem:[%s0 + $0x1c8] sm:$0xff]
  %v72 = vld [vmem:[%s0 + $0x1d0] sm:$0xff]
  %v73 = vld [vmem:[%s0 + $0x1d8] sm:$0xff]
  %v74 = vld [vmem:[%s0 + $0x1e0] sm:$0xff]
  %v75 = vld [vmem:[%s0 + $0x1e8] sm:$0xff]
  %v76 = vld [vmem:[%s0 + $0x1f0] sm:$0xff]
  %v77 = vld [vmem:[%s0 + $0x1f8] sm:$0xff]
  %v78 = vld [vmem:[%s0 + $0x200] sm:$0xff]
  %v79 = vld [vmem:[%s0 + $0x208] sm:$0xff]
  %v80 = vld [vmem:[%s0 + $0x210] sm:$0xff]
  %v81 = vld [vmem:[%s0 + $0x218] sm:$0xff]
  %v82 = vld [vmem:[%s0 + $0x220] sm:$0xff]
  %v83 = vld [vmem:[%s0 + $0x228] sm:$0xff]
  %v84 = vld [vmem:[%s0 + $0x230] sm:$0xff]
  %v85 = vld [vmem:[%s0 + $0x238] sm:$0xff]
  %v86 = vld [vmem:[%s0 + $0x240] sm:$0xff]
  %v87 = vld [vmem:[%s0 + $0x248] sm:$0xff]
  %v88 = vld [vmem:[%s0 + $0x250] sm:$0xff]
  %v89 = vld [vmem:[%s0 + $0x258] sm:$0xff]
  %v90 = vld [vmem:[%s0 + $0x260] sm:$0xff]
  %v91 = vld [vmem:[%s0 + $0x268] sm:$0xff]
  %v92 = vld [vmem:[%s0 + $0x270] sm:$0xff]
  %v93 = vld [vmem:[%s0 + $0x278] sm:$0xff]
  %v94 = vld [vmem:[%s0 + $0x280] sm:$0xff]
  %v95 = vld [vmem:[%s0 + $0x288] sm:$0xff]
  %v96 = vld [vmem:[%s0 + $0x290] sm:$0xff]
  %v97 = vld [vmem:[%s0 + $0x298] sm:$0xff]
  %v98 = vld [vmem:[%s0 + $0x2a0] sm:$0xff]
  %v99 = vld [vmem:[%s0 + $0x2a8] sm:$0xff]
  %v100 = vld [vmem:[%s0 + $0x2b0] sm:$0xff]
  %v101 = vld [vmem:[%s0 + $0x2b8] sm:$0xff]
  %v102 = vld [vmem:[%s0 + $0x2c0] sm:$0xff]
  %v103 = vld [vmem:[%s0 + $0x2c8] sm:$0xff]
  %v104 = vld [vmem:[%s0 + $0x2d0] sm:$0xff]
  %v105 = vld [vmem:[%s0 + $0x2d8] sm:$0xff]
  %v106 = vld [vmem:[%s0 + $0x2e0] sm:$0xff]
  %v107 = vld [vmem:[%s0 + $0x2e8] sm:$0xff]
  %v108 = vld [vmem:[%s0 + $0x2f0] sm:$0xff]
  %v109 = vld [vmem:[%s0 + $0x2f8] sm:$0xff]
  %v110 = vld [vmem:[%s0 + $0x300] sm:$0xff]
  %v111 = vld [vmem:[%s0 + $0x308] sm:$0xff]
  %v112 = vld [vmem:[%s0 + $0x310] sm:$0xff]
  %v113 = vld [vmem:[%s0 + $0x318] sm:$0xff]
  %v114 = vld [vmem:[%s0 + $0x320] sm:$0xff]
  %v115 = vld [vmem:[%s0 + $0x328] sm:$0xff]
  %v116 = vld [vmem:[%s0 + $0x330] sm:$0xff]
  %v117 = vld [vmem:[%s0 + $0x338] sm:$0xff]
  %v118 = vld [vmem:[%s0 + $0x340] sm:$0xff]
  %v119 = vld [vmem:[%s0 + $0x348] sm:$0xff]
  %v120 = vld [vmem:[%s0 + $0x350] sm:$0xff]
  %v121 = vld [vmem:[%s0 + $0x358] sm:$0xff]
  %v122 = vld [vmem:[%s0 + $0x360] sm:$0xff]
  %v123 = vld [vmem:[%s0 + $0x368] sm:$0xff]
  %v124 = vld [vmem:[%s0 + $0x370] sm:$0xff]
  %v125 = vld [vmem:[%s0 + $0x378] sm:$0xff]
  %v126 = vld [vmem:[%s0 + $0x380] sm:$0x3]
  %v127 = vld [vmem:[%s0 + $0x388] sm:$0x3]
  %v128 = vld [vmem:[%s1] sm:$0xff]
  %v129 = vld [vmem:[%s1 + $0x8] sm:$0xff]
  %v130 = vld [vmem:[%s1 + $0x10] sm:$0xff]
  %v131 = vld [vmem:[%s1 + $0x18] sm:$0xff]
  %v132 = vld [vmem:[%s1 + $0x20] sm:$0xff]
  %v133 = vld [vmem:[%s1 + $0x28] sm:$0xff]
  %v134 = vld [vmem:[%s1 + $0x30] sm:$0xff]
  %v135 = vld [vmem:[%s1 + $0x38] sm:$0xff]
  %v136 = vld [vmem:[%s1 + $0x40] sm:$0xff]
  %v137 = vld [vmem:[%s1 + $0x48] sm:$0xff]
  %v138 = vld [vmem:[%s1 + $0x50] sm:$0xff]
  %v139 = vld [vmem:[%s1 + $0x58] sm:$0xff]
  %v140 = vld [vmem:[%s1 + $0x60] sm:$0xff]
  %v141 = vld [vmem:[%s1 + $0x68] sm:$0xff]
  %v142 = vld [vmem:[%s1 + $0x70] sm:$0xff]
  %v143 = vld [vmem:[%s1 + $0x78] sm:$0xff]
  %v144 = vld [vmem:[%s1 + $0x80] sm:$0xff]
  %v145 = vld [vmem:[%s1 + $0x88] sm:$0xff]
  %vm146 = vcmask 130048
  %v148 = vsel %vm146, %v15, 0
  %v151 = vsel %vm146, %v17, 0
  %v154 = vsel %vm146, %v19, 0
  %v157 = vsel %vm146, %v21, 0
  %v160 = vsel %vm146, %v23, 0
  %v163 = vsel %vm146, %v25, 0
  %v166 = vsel %vm146, %v27, 0
  %v169 = vsel %vm146, %v29, 0
  %v172 = vsel %vm146, %v31, 0
  %v175 = vsel %vm146, %v33, 0
  %v178 = vsel %vm146, %v35, 0
  %v181 = vsel %vm146, %v37, 0
  %v184 = vsel %vm146, %v39, 0
  %v187 = vsel %vm146, %v41, 0
  %v190 = vsel %vm146, %v43, 0
  %v193 = vsel %vm146, %v45, 0
  %v196 = vsel %vm146, %v47, 0
  %v199 = vsel %vm146, %v49, 0
  %v202 = vsel %vm146, %v51, 0
  %v205 = vsel %vm146, %v53, 0
  %v208 = vsel %vm146, %v55, 0
  %v211 = vsel %vm146, %v57, 0
  %v214 = vsel %vm146, %v59, 0
  %v217 = vsel %vm146, %v61, 0
  %v220 = vsel %vm146, %v63, 0
  %v223 = vsel %vm146, %v65, 0
  %v226 = vsel %vm146, %v67, 0
  %v229 = vsel %vm146, %v69, 0
  %v232 = vsel %vm146, %v71, 0
  %v235 = vsel %vm146, %v73, 0
  %v238 = vsel %vm146, %v75, 0
  %v241 = vsel %vm146, %v77, 0
  %v244 = vsel %vm146, %v79, 0
  %v247 = vsel %vm146, %v81, 0
  %v250 = vsel %vm146, %v83, 0
  %v253 = vsel %vm146, %v85, 0
  %v256 = vsel %vm146, %v87, 0
  %v259 = vsel %vm146, %v89, 0
  %v262 = vsel %vm146, %v91, 0
  %v265 = vsel %vm146, %v93, 0
  %v268 = vsel %vm146, %v95, 0
  %v271 = vsel %vm146, %v97, 0
  %v274 = vsel %vm146, %v99, 0
  %v277 = vsel %vm146, %v101, 0
  %v280 = vsel %vm146, %v103, 0
  %v283 = vsel %vm146, %v105, 0
  %v286 = vsel %vm146, %v107, 0
  %v289 = vsel %vm146, %v109, 0
  %v292 = vsel %vm146, %v111, 0
  %v295 = vsel %vm146, %v113, 0
  %v298 = vsel %vm146, %v115, 0
  %v301 = vsel %vm146, %v117, 0
  %v304 = vsel %vm146, %v119, 0
  %v307 = vsel %vm146, %v121, 0
  %v310 = vsel %vm146, %v123, 0
  %v313 = vsel %vm146, %v125, 0
  %v316 = vsel %vm146, %v127, 0
  %318 = vmatprep.subr.mxu0 0.0
  %319 = vmatpush1.msra.mxu0 %v143
  %320 = vmatprep.subr.mxu0 0.0
  %321 = vmatpush1.msra.mxu0 %v142
  %322 = vmatprep.subr.mxu0 0.0
  %323 = vmatpush1.msra.mxu0 %v141
  %324 = vmatprep.subr.mxu0 0.0
  %325 = vmatpush1.msra.mxu0 %v140
  %326 = vmatprep.subr.mxu0 0.0
  %327 = vmatpush1.msra.mxu0 %v139
  %328 = vmatprep.subr.mxu0 0.0
  %329 = vmatpush1.msra.mxu0 %v138
  %330 = vmatprep.subr.mxu0 0.0
  %331 = vmatpush1.msra.mxu0 %v137
  %332 = vmatprep.subr.mxu0 0.0
  %333 = vmatpush1.msra.mxu0 %v136
  %334 = vmatprep.subr.mxu0 0.0
  %335 = vmatpush1.msra.mxu0 %v135
  %336 = vmatprep.subr.mxu0 0.0
  %337 = vmatpush1.msra.mxu0 %v134
  %338 = vmatprep.subr.mxu0 0.0
  %339 = vmatpush1.msra.mxu0 %v133
  %340 = vmatprep.subr.mxu0 0.0
  %341 = vmatpush1.msra.mxu0 %v132
  %342 = vmatprep.subr.mxu0 0.0
  %343 = vmatpush1.msra.mxu0 %v131
  %344 = vmatprep.subr.mxu0 0.0
  %345 = vmatpush1.msra.mxu0 %v130
  %346 = vmatprep.subr.mxu0 0.0
  %347 = vmatpush1.msra.mxu0 %v129
  %348 = vmatprep.subr.mxu0 0.0
  %349 = vmatpush1.msra.mxu0 %v128
  %350 = vmatprep.subr.mxu0 0.0
  %351 = vmatpush2.msra.mxu0 0.0
  %352 = vmatprep.subr.mxu0 0.0
  %353 = vmatpush2.msra.mxu0 0.0
  %354 = vmatprep.subr.mxu0 0.0
  %355 = vmatpush2.msra.mxu0 0.0
  %356 = vmatprep.subr.mxu0 0.0
  %357 = vmatpush2.msra.mxu0 0.0
  %358 = vmatprep.subr.mxu0 0.0
  %359 = vmatpush2.msra.mxu0 0.0
  %360 = vmatprep.subr.mxu0 0.0
  %361 = vmatpush2.msra.mxu0 0.0
  %362 = vmatprep.subr.mxu0 0.0
  %363 = vmatpush2.msra.mxu0 0.0
  %364 = vmatprep.subr.mxu0 0.0
  %365 = vmatpush2.msra.mxu0 0.0
  %366 = vmatprep.subr.mxu0 0.0
  %367 = vmatpush2.msra.mxu0 0.0
  %368 = vmatprep.subr.mxu0 0.0
  %369 = vmatpush2.msra.mxu0 0.0
  %370 = vmatprep.subr.mxu0 0.0
  %371 = vmatpush2.msra.mxu0 0.0
  %372 = vmatprep.subr.mxu0 0.0
  %373 = vmatpush2.msra.mxu0 0.0
  %374 = vmatprep.subr.mxu0 0.0
  %375 = vmatpush2.msra.mxu0 0.0
  %376 = vmatprep.subr.mxu0 0.0
  %377 = vmatpush2.msra.mxu0 0.0
  %378 = vmatprep.subr.mxu0 0.0
  %379 = vmatpush2.msra.mxu0 %v145
  %380 = vmatprep.subr.mxu0 0.0
  %381 = vmatpush2.msra.mxu0 %v144
  %382 = vmatprep.mubr.f32.mxu0 %v148
  %383 = vmatmul.mubr.f32.gmra.mxu0 %v14
  %v384 = vpop.f32.mrf.mxu0
  %v385 = vadd.f32 0.0, %v384
  %v386 = vpop.f32.mrf.mxu0
  %387 = vmatprep.mubr.f32.mxu0 %v151
  %388 = vmatmul.mubr.f32.gmra.mxu0 %v16
  %v389 = vpop.f32.mrf.mxu0
  %v390 = vadd.f32 0.0, %v389
  %v391 = vpop.f32.mrf.mxu0
  %392 = vmatprep.mubr.f32.mxu0 %v154
  %393 = vmatmul.mubr.f32.gmra.mxu0 %v18
  %v394 = vpop.f32.mrf.mxu0
  %v395 = vadd.f32 0.0, %v394
  %v396 = vpop.f32.mrf.mxu0
  %397 = vmatprep.mubr.f32.mxu0 %v157
  %398 = vmatmul.mubr.f32.gmra.mxu0 %v20
  %v399 = vpop.f32.mrf.mxu0
  %v400 = vadd.f32 0.0, %v399
  %v401 = vpop.f32.mrf.mxu0
  %402 = vmatprep.mubr.f32.mxu0 %v160
  %403 = vmatmul.mubr.f32.gmra.mxu0 %v22
  %v404 = vpop.f32.mrf.mxu0
  %v405 = vadd.f32 0.0, %v404
  %v406 = vpop.f32.mrf.mxu0
  %407 = vmatprep.mubr.f32.mxu0 %v163
  %408 = vmatmul.mubr.f32.gmra.mxu0 %v24
  %v409 = vpop.f32.mrf.mxu0
  %v410 = vadd.f32 0.0, %v409
  %v411 = vpop.f32.mrf.mxu0
  %412 = vmatprep.mubr.f32.mxu0 %v166
  %413 = vmatmul.mubr.f32.gmra.mxu0 %v26
  %v414 = vpop.f32.mrf.mxu0
  %v415 = vadd.f32 0.0, %v414
  %v416 = vpop.f32.mrf.mxu0
  %417 = vmatprep.mubr.f32.mxu0 %v169
  %418 = vmatmul.mubr.f32.gmra.mxu0 %v28
  %v419 = vpop.f32.mrf.mxu0
  %v420 = vadd.f32 0.0, %v419
  %v421 = vpop.f32.mrf.mxu0
  %422 = vmatprep.mubr.f32.mxu0 %v172
  %423 = vmatmul.mubr.f32.gmra.mxu0 %v30
  %v424 = vpop.f32.mrf.mxu0
  %v425 = vadd.f32 0.0, %v424
  %v426 = vpop.f32.mrf.mxu0
  %427 = vmatprep.mubr.f32.mxu0 %v175
  %428 = vmatmul.mubr.f32.gmra.mxu0 %v32
  %v429 = vpop.f32.mrf.mxu0
  %v430 = vadd.f32 0.0, %v429
  %v431 = vpop.f32.mrf.mxu0
  %432 = vmatprep.mubr.f32.mxu0 %v178
  %433 = vmatmul.mubr.f32.gmra.mxu0 %v34
  %v434 = vpop.f32.mrf.mxu0
  %v435 = vadd.f32 0.0, %v434
  %v436 = vpop.f32.mrf.mxu0
  %437 = vmatprep.mubr.f32.mxu0 %v181
  %438 = vmatmul.mubr.f32.gmra.mxu0 %v36
  %v439 = vpop.f32.mrf.mxu0
  %v440 = vadd.f32 0.0, %v439
  %v441 = vpop.f32.mrf.mxu0
  %442 = vmatprep.mubr.f32.mxu0 %v184
  %443 = vmatmul.mubr.f32.gmra.mxu0 %v38
  %v444 = vpop.f32.mrf.mxu0
  %v445 = vadd.f32 0.0, %v444
  %v446 = vpop.f32.mrf.mxu0
  %447 = vmatprep.mubr.f32.mxu0 %v187
  %448 = vmatmul.mubr.f32.gmra.mxu0 %v40
  %v449 = vpop.f32.mrf.mxu0
  %v450 = vadd.f32 0.0, %v449
  %v451 = vpop.f32.mrf.mxu0
  %452 = vmatprep.mubr.f32.mxu0 %v190
  %453 = vmatmul.mubr.f32.gmra.mxu0 %v42
  %v454 = vpop.f32.mrf.mxu0
  %v455 = vadd.f32 0.0, %v454
  %v456 = vpop.f32.mrf.mxu0
  %457 = vmatprep.mubr.f32.mxu0 %v193
  %458 = vmatmul.mubr.f32.gmra.mxu0 %v44
  %v459 = vpop.f32.mrf.mxu0
  %v460 = vadd.f32 0.0, %v459
  %v461 = vpop.f32.mrf.mxu0
  %462 = vmatprep.mubr.f32.mxu0 %v196
  %463 = vmatmul.mubr.f32.gmra.mxu0 %v46
  %v464 = vpop.f32.mrf.mxu0
  %v465 = vadd.f32 0.0, %v464
  %v466 = vpop.f32.mrf.mxu0
  %467 = vmatprep.mubr.f32.mxu0 %v199
  %468 = vmatmul.mubr.f32.gmra.mxu0 %v48
  %v469 = vpop.f32.mrf.mxu0
  %v470 = vadd.f32 0.0, %v469
  %v471 = vpop.f32.mrf.mxu0
  %472 = vmatprep.mubr.f32.mxu0 %v202
  %473 = vmatmul.mubr.f32.gmra.mxu0 %v50
  %v474 = vpop.f32.mrf.mxu0
  %v475 = vadd.f32 0.0, %v474
  %v476 = vpop.f32.mrf.mxu0
  %477 = vmatprep.mubr.f32.mxu0 %v205
  %478 = vmatmul.mubr.f32.gmra.mxu0 %v52
  %v479 = vpop.f32.mrf.mxu0
  %v480 = vadd.f32 0.0, %v479
  %v481 = vpop.f32.mrf.mxu0
  %482 = vmatprep.mubr.f32.mxu0 %v208
  %483 = vmatmul.mubr.f32.gmra.mxu0 %v54
  %v484 = vpop.f32.mrf.mxu0
  %v485 = vadd.f32 0.0, %v484
  %v486 = vpop.f32.mrf.mxu0
  %487 = vmatprep.mubr.f32.mxu0 %v211
  %488 = vmatmul.mubr.f32.gmra.mxu0 %v56
  %v489 = vpop.f32.mrf.mxu0
  %v490 = vadd.f32 0.0, %v489
  %v491 = vpop.f32.mrf.mxu0
  %492 = vmatprep.mubr.f32.mxu0 %v214
  %493 = vmatmul.mubr.f32.gmra.mxu0 %v58
  %v494 = vpop.f32.mrf.mxu0
  %v495 = vadd.f32 0.0, %v494
  %v496 = vpop.f32.mrf.mxu0
  %497 = vmatprep.mubr.f32.mxu0 %v217
  %498 = vmatmul.mubr.f32.gmra.mxu0 %v60
  %v499 = vpop.f32.mrf.mxu0
  %v500 = vadd.f32 0.0, %v499
  %v501 = vpop.f32.mrf.mxu0
  %502 = vmatprep.mubr.f32.mxu0 %v220
  %503 = vmatmul.mubr.f32.gmra.mxu0 %v62
  %v504 = vpop.f32.mrf.mxu0
  %v505 = vadd.f32 0.0, %v504
  %v506 = vpop.f32.mrf.mxu0
  %507 = vmatprep.mubr.f32.mxu0 %v223
  %508 = vmatmul.mubr.f32.gmra.mxu0 %v64
  %v509 = vpop.f32.mrf.mxu0
  %v510 = vadd.f32 0.0, %v509
  %v511 = vpop.f32.mrf.mxu0
  %512 = vmatprep.mubr.f32.mxu0 %v226
  %513 = vmatmul.mubr.f32.gmra.mxu0 %v66
  %v514 = vpop.f32.mrf.mxu0
  %v515 = vadd.f32 0.0, %v514
  %v516 = vpop.f32.mrf.mxu0
  %517 = vmatprep.mubr.f32.mxu0 %v229
  %518 = vmatmul.mubr.f32.gmra.mxu0 %v68
  %v519 = vpop.f32.mrf.mxu0
  %v520 = vadd.f32 0.0, %v519
  %v521 = vpop.f32.mrf.mxu0
  %522 = vmatprep.mubr.f32.mxu0 %v232
  %523 = vmatmul.mubr.f32.gmra.mxu0 %v70
  %v524 = vpop.f32.mrf.mxu0
  %v525 = vadd.f32 0.0, %v524
  %v526 = vpop.f32.mrf.mxu0
  %527 = vmatprep.mubr.f32.mxu0 %v235
  %528 = vmatmul.mubr.f32.gmra.mxu0 %v72
  %v529 = vpop.f32.mrf.mxu0
  %v530 = vadd.f32 0.0, %v529
  %v531 = vpop.f32.mrf.mxu0
  %532 = vmatprep.mubr.f32.mxu0 %v238
  %533 = vmatmul.mubr.f32.gmra.mxu0 %v74
  %v534 = vpop.f32.mrf.mxu0
  %v535 = vadd.f32 0.0, %v534
  %v536 = vpop.f32.mrf.mxu0
  %537 = vmatprep.mubr.f32.mxu0 %v241
  %538 = vmatmul.mubr.f32.gmra.mxu0 %v76
  %v539 = vpop.f32.mrf.mxu0
  %v540 = vadd.f32 0.0, %v539
  %v541 = vpop.f32.mrf.mxu0
  %542 = vmatprep.mubr.f32.mxu0 %v244
  %543 = vmatmul.mubr.f32.gmra.mxu0 %v78
  %v544 = vpop.f32.mrf.mxu0
  %v545 = vadd.f32 0.0, %v544
  %v546 = vpop.f32.mrf.mxu0
  %547 = vmatprep.mubr.f32.mxu0 %v247
  %548 = vmatmul.mubr.f32.gmra.mxu0 %v80
  %v549 = vpop.f32.mrf.mxu0
  %v550 = vadd.f32 0.0, %v549
  %v551 = vpop.f32.mrf.mxu0
  %552 = vmatprep.mubr.f32.mxu0 %v250
  %553 = vmatmul.mubr.f32.gmra.mxu0 %v82
  %v554 = vpop.f32.mrf.mxu0
  %v555 = vadd.f32 0.0, %v554
  %v556 = vpop.f32.mrf.mxu0
  %557 = vmatprep.mubr.f32.mxu0 %v253
  %558 = vmatmul.mubr.f32.gmra.mxu0 %v84
  %v559 = vpop.f32.mrf.mxu0
  %v560 = vadd.f32 0.0, %v559
  %v561 = vpop.f32.mrf.mxu0
  %562 = vmatprep.mubr.f32.mxu0 %v256
  %563 = vmatmul.mubr.f32.gmra.mxu0 %v86
  %v564 = vpop.f32.mrf.mxu0
  %v565 = vadd.f32 0.0, %v564
  %v566 = vpop.f32.mrf.mxu0
  %567 = vmatprep.mubr.f32.mxu0 %v259
  %568 = vmatmul.mubr.f32.gmra.mxu0 %v88
  %v569 = vpop.f32.mrf.mxu0
  %v570 = vadd.f32 0.0, %v569
  %v571 = vpop.f32.mrf.mxu0
  %572 = vmatprep.mubr.f32.mxu0 %v262
  %573 = vmatmul.mubr.f32.gmra.mxu0 %v90
  %v574 = vpop.f32.mrf.mxu0
  %v575 = vadd.f32 0.0, %v574
  %v576 = vpop.f32.mrf.mxu0
  %577 = vmatprep.mubr.f32.mxu0 %v265
  %578 = vmatmul.mubr.f32.gmra.mxu0 %v92
  %v579 = vpop.f32.mrf.mxu0
  %v580 = vadd.f32 0.0, %v579
  %v581 = vpop.f32.mrf.mxu0
  %582 = vmatprep.mubr.f32.mxu0 %v268
  %583 = vmatmul.mubr.f32.gmra.mxu0 %v94
  %v584 = vpop.f32.mrf.mxu0
  %v585 = vadd.f32 0.0, %v584
  %v586 = vpop.f32.mrf.mxu0
  %587 = vmatprep.mubr.f32.mxu0 %v271
  %588 = vmatmul.mubr.f32.gmra.mxu0 %v96
  %v589 = vpop.f32.mrf.mxu0
  %v590 = vadd.f32 0.0, %v589
  %v591 = vpop.f32.mrf.mxu0
  %592 = vmatprep.mubr.f32.mxu0 %v274
  %593 = vmatmul.mubr.f32.gmra.mxu0 %v98
  %v594 = vpop.f32.mrf.mxu0
  %v595 = vadd.f32 0.0, %v594
  %v596 = vpop.f32.mrf.mxu0
  %597 = vmatprep.mubr.f32.mxu0 %v277
  %598 = vmatmul.mubr.f32.gmra.mxu0 %v100
  %v599 = vpop.f32.mrf.mxu0
  %v600 = vadd.f32 0.0, %v599
  %v601 = vpop.f32.mrf.mxu0
  %602 = vmatprep.mubr.f32.mxu0 %v280
  %603 = vmatmul.mubr.f32.gmra.mxu0 %v102
  %v604 = vpop.f32.mrf.mxu0
  %v605 = vadd.f32 0.0, %v604
  %v606 = vpop.f32.mrf.mxu0
  %607 = vmatprep.mubr.f32.mxu0 %v283
  %608 = vmatmul.mubr.f32.gmra.mxu0 %v104
  %v609 = vpop.f32.mrf.mxu0
  %v610 = vadd.f32 0.0, %v609
  %v611 = vpop.f32.mrf.mxu0
  %612 = vmatprep.mubr.f32.mxu0 %v286
  %613 = vmatmul.mubr.f32.gmra.mxu0 %v106
  %v614 = vpop.f32.mrf.mxu0
  %v615 = vadd.f32 0.0, %v614
  %v616 = vpop.f32.mrf.mxu0
  %617 = vmatprep.mubr.f32.mxu0 %v289
  %618 = vmatmul.mubr.f32.gmra.mxu0 %v108
  %v619 = vpop.f32.mrf.mxu0
  %v620 = vadd.f32 0.0, %v619
  %v621 = vpop.f32.mrf.mxu0
  %622 = vmatprep.mubr.f32.mxu0 %v292
  %623 = vmatmul.mubr.f32.gmra.mxu0 %v110
  %v624 = vpop.f32.mrf.mxu0
  %v625 = vadd.f32 0.0, %v624
  %v626 = vpop.f32.mrf.mxu0
  %627 = vmatprep.mubr.f32.mxu0 %v295
  %628 = vmatmul.mubr.f32.gmra.mxu0 %v112
  %v629 = vpop.f32.mrf.mxu0
  %v630 = vadd.f32 0.0, %v629
  %v631 = vpop.f32.mrf.mxu0
  %632 = vmatprep.mubr.f32.mxu0 %v298
  %633 = vmatmul.mubr.f32.gmra.mxu0 %v114
  %v634 = vpop.f32.mrf.mxu0
  %v635 = vadd.f32 0.0, %v634
  %v636 = vpop.f32.mrf.mxu0
  %637 = vmatprep.mubr.f32.mxu0 %v301
  %638 = vmatmul.mubr.f32.gmra.mxu0 %v116
  %v639 = vpop.f32.mrf.mxu0
  %v640 = vadd.f32 0.0, %v639
  %v641 = vpop.f32.mrf.mxu0
  %642 = vmatprep.mubr.f32.mxu0 %v304
  %643 = vmatmul.mubr.f32.gmra.mxu0 %v118
  %v644 = vpop.f32.mrf.mxu0
  %v645 = vadd.f32 0.0, %v644
  %v646 = vpop.f32.mrf.mxu0
  %647 = vmatprep.mubr.f32.mxu0 %v307
  %648 = vmatmul.mubr.f32.gmra.mxu0 %v120
  %v649 = vpop.f32.mrf.mxu0
  %v650 = vadd.f32 0.0, %v649
  %v651 = vpop.f32.mrf.mxu0
  %652 = vmatprep.mubr.f32.mxu0 %v310
  %653 = vmatmul.mubr.f32.gmra.mxu0 %v122
  %v654 = vpop.f32.mrf.mxu0
  %v655 = vadd.f32 0.0, %v654
  %v656 = vpop.f32.mrf.mxu0
  %657 = vmatprep.mubr.f32.mxu0 %v313
  %658 = vmatmul.mubr.f32.gmra.mxu0 %v124
  %v659 = vpop.f32.mrf.mxu0
  %v660 = vadd.f32 0.0, %v659
  %v661 = vpop.f32.mrf.mxu0
  %662 = vmatprep.mubr.f32.mxu0 %v316
  %663 = vmatmul.mubr.f32.gmra.mxu0 %v126
  %v664 = vpop.f32.mrf.mxu0
  %v665 = vadd.f32 0.0, %v664
  %v666 = vpop.f32.mrf.mxu0
  %667 = vdwg.mxu0
  %v668 = vld [vmem:[%s2] sm:$0xff]
  %v669 = vld [vmem:[%s2 + $0x8] sm:$0xff]
  %v670 = vld [vmem:[%s2 + $0x10] sm:$0xff]
  %v671 = vld [vmem:[%s2 + $0x18] sm:$0xff]
  %v672 = vld [vmem:[%s2 + $0x20] sm:$0xff]
  %v673 = vld [vmem:[%s2 + $0x28] sm:$0xff]
  %v674 = vld [vmem:[%s2 + $0x30] sm:$0xff]
  %v675 = vld [vmem:[%s2 + $0x38] sm:$0xff]
  %v676 = vld [vmem:[%s2 + $0x40] sm:$0xff]
  %v677 = vld [vmem:[%s2 + $0x48] sm:$0xff]
  %v678 = vld [vmem:[%s2 + $0x50] sm:$0xff]
  %v679 = vld [vmem:[%s2 + $0x58] sm:$0xff]
  %v680 = vld [vmem:[%s2 + $0x60] sm:$0xff]
  %v681 = vld [vmem:[%s2 + $0x68] sm:$0xff]
  %v682 = vld [vmem:[%s2 + $0x70] sm:$0xff]
  %v683 = vld [vmem:[%s2 + $0x78] sm:$0xff]
  %v684 = vld [vmem:[%s2 + $0x80] sm:$0xff]
  %v685 = vld [vmem:[%s2 + $0x88] sm:$0xff]
  %v686 = vld [vmem:[%s2 + $0x90] sm:$0xff]
  %v687 = vld [vmem:[%s2 + $0x98] sm:$0xff]
  %v688 = vld [vmem:[%s2 + $0xa0] sm:$0xff]
  %v689 = vld [vmem:[%s2 + $0xa8] sm:$0xff]
  %v690 = vld [vmem:[%s2 + $0xb0] sm:$0xff]
  %v691 = vld [vmem:[%s2 + $0xb8] sm:$0xff]
  %v692 = vld [vmem:[%s2 + $0xc0] sm:$0xff]
  %v693 = vld [vmem:[%s2 + $0xc8] sm:$0xff]
  %v694 = vld [vmem:[%s2 + $0xd0] sm:$0xff]
  %v695 = vld [vmem:[%s2 + $0xd8] sm:$0xff]
  %v696 = vld [vmem:[%s2 + $0xe0] sm:$0xff]
  %v697 = vld [vmem:[%s2 + $0xe8] sm:$0xff]
  %v698 = vld [vmem:[%s2 + $0xf0] sm:$0xff]
  %v699 = vld [vmem:[%s2 + $0xf8] sm:$0xff]
  %v700 = vld [vmem:[%s2 + $0x100] sm:$0xff]
  %v701 = vld [vmem:[%s2 + $0x108] sm:$0xff]
  %v702 = vld [vmem:[%s2 + $0x110] sm:$0xff]
  %v703 = vld [vmem:[%s2 + $0x118] sm:$0xff]
  %v704 = vld [vmem:[%s2 + $0x120] sm:$0xff]
  %v705 = vld [vmem:[%s2 + $0x128] sm:$0xff]
  %v706 = vld [vmem:[%s2 + $0x130] sm:$0xff]
  %v707 = vld [vmem:[%s2 + $0x138] sm:$0xff]
  %v708 = vld [vmem:[%s2 + $0x140] sm:$0xff]
  %v709 = vld [vmem:[%s2 + $0x148] sm:$0xff]
  %v710 = vld [vmem:[%s2 + $0x150] sm:$0xff]
  %v711 = vld [vmem:[%s2 + $0x158] sm:$0xff]
  %v712 = vld [vmem:[%s2 + $0x160] sm:$0xff]
  %v713 = vld [vmem:[%s2 + $0x168] sm:$0xff]
  %v714 = vld [vmem:[%s2 + $0x170] sm:$0xff]
  %v715 = vld [vmem:[%s2 + $0x178] sm:$0xff]
  %v716 = vld [vmem:[%s2 + $0x180] sm:$0xff]
  %v717 = vld [vmem:[%s2 + $0x188] sm:$0xff]
  %v718 = vld [vmem:[%s2 + $0x190] sm:$0xff]
  %v719 = vld [vmem:[%s2 + $0x198] sm:$0xff]
  %v720 = vld [vmem:[%s2 + $0x1a0] sm:$0xff]
  %v721 = vld [vmem:[%s2 + $0x1a8] sm:$0xff]
  %v722 = vld [vmem:[%s2 + $0x1b0] sm:$0xff]
  %v723 = vld [vmem:[%s2 + $0x1b8] sm:$0xff]
  %v724 = vld [vmem:[%s2 + $0x1c0] sm:$0x3]
  %v725 = vsel %vm146, %v385, 0.0
  %v726 = vsel %vm146, %v390, 0.0
  %v727 = vadd.f32 %v725, %v726
  %v728 = vsel %vm146, %v395, 0.0
  %v729 = vadd.f32 %v727, %v728
  %v730 = vsel %vm146, %v400, 0.0
  %v731 = vadd.f32 %v729, %v730
  %v732 = vsel %vm146, %v405, 0.0
  %v733 = vadd.f32 %v731, %v732
  %v734 = vsel %vm146, %v410, 0.0
  %v735 = vadd.f32 %v733, %v734
  %v736 = vsel %vm146, %v415, 0.0
  %v737 = vadd.f32 %v735, %v736
  %v738 = vsel %vm146, %v420, 0.0
  %v739 = vadd.f32 %v737, %v738
  %v740 = vsel %vm146, %v425, 0.0
  %v741 = vadd.f32 %v739, %v740
  %v742 = vsel %vm146, %v430, 0.0
  %v743 = vadd.f32 %v741, %v742
  %v744 = vsel %vm146, %v435, 0.0
  %v745 = vadd.f32 %v743, %v744
  %v746 = vsel %vm146, %v440, 0.0
  %v747 = vadd.f32 %v745, %v746
  %v748 = vsel %vm146, %v445, 0.0
  %v749 = vadd.f32 %v747, %v748
  %v750 = vsel %vm146, %v450, 0.0
  %v751 = vadd.f32 %v749, %v750
  %v752 = vsel %vm146, %v455, 0.0
  %v753 = vadd.f32 %v751, %v752
  %v754 = vsel %vm146, %v460, 0.0
  %v755 = vadd.f32 %v753, %v754
  %v756 = vsel %vm146, %v465, 0.0
  %v757 = vadd.f32 %v755, %v756
  %v758 = vsel %vm146, %v470, 0.0
  %v759 = vadd.f32 %v757, %v758
  %v760 = vsel %vm146, %v475, 0.0
  %v761 = vadd.f32 %v759, %v760
  %v762 = vsel %vm146, %v480, 0.0
  %v763 = vadd.f32 %v761, %v762
  %v764 = vsel %vm146, %v485, 0.0
  %v765 = vadd.f32 %v763, %v764
  %v766 = vsel %vm146, %v490, 0.0
  %v767 = vadd.f32 %v765, %v766
  %v768 = vsel %vm146, %v495, 0.0
  %v769 = vadd.f32 %v767, %v768
  %v770 = vsel %vm146, %v500, 0.0
  %v771 = vadd.f32 %v769, %v770
  %v772 = vsel %vm146, %v505, 0.0
  %v773 = vadd.f32 %v771, %v772
  %v774 = vsel %vm146, %v510, 0.0
  %v775 = vadd.f32 %v773, %v774
  %v776 = vsel %vm146, %v515, 0.0
  %v777 = vadd.f32 %v775, %v776
  %v778 = vsel %vm146, %v520, 0.0
  %v779 = vadd.f32 %v777, %v778
  %v780 = vsel %vm146, %v525, 0.0
  %v781 = vadd.f32 %v779, %v780
  %v782 = vsel %vm146, %v530, 0.0
  %v783 = vadd.f32 %v781, %v782
  %v784 = vsel %vm146, %v535, 0.0
  %v785 = vadd.f32 %v783, %v784
  %v786 = vsel %vm146, %v540, 0.0
  %v787 = vadd.f32 %v785, %v786
  %v788 = vsel %vm146, %v545, 0.0
  %v789 = vadd.f32 %v787, %v788
  %v790 = vsel %vm146, %v550, 0.0
  %v791 = vadd.f32 %v789, %v790
  %v792 = vsel %vm146, %v555, 0.0
  %v793 = vadd.f32 %v791, %v792
  %v794 = vsel %vm146, %v560, 0.0
  %v795 = vadd.f32 %v793, %v794
  %v796 = vsel %vm146, %v565, 0.0
  %v797 = vadd.f32 %v795, %v796
  %v798 = vsel %vm146, %v570, 0.0
  %v799 = vadd.f32 %v797, %v798
  %v800 = vsel %vm146, %v575, 0.0
  %v801 = vadd.f32 %v799, %v800
  %v802 = vsel %vm146, %v580, 0.0
  %v803 = vadd.f32 %v801, %v802
  %v804 = vsel %vm146, %v585, 0.0
  %v805 = vadd.f32 %v803, %v804
  %v806 = vsel %vm146, %v590, 0.0
  %v807 = vadd.f32 %v805, %v806
  %v808 = vsel %vm146, %v595, 0.0
  %v809 = vadd.f32 %v807, %v808
  %v810 = vsel %vm146, %v600, 0.0
  %v811 = vadd.f32 %v809, %v810
  %v812 = vsel %vm146, %v605, 0.0
  %v813 = vadd.f32 %v811, %v812
  %v814 = vsel %vm146, %v610, 0.0
  %v815 = vadd.f32 %v813, %v814
  %v816 = vsel %vm146, %v615, 0.0
  %v817 = vadd.f32 %v815, %v816
  %v818 = vsel %vm146, %v620, 0.0
  %v819 = vadd.f32 %v817, %v818
  %v820 = vsel %vm146, %v625, 0.0
  %v821 = vadd.f32 %v819, %v820
  %v822 = vsel %vm146, %v630, 0.0
  %v823 = vadd.f32 %v821, %v822
  %v824 = vsel %vm146, %v635, 0.0
  %v825 = vadd.f32 %v823, %v824
  %v826 = vsel %vm146, %v640, 0.0
  %v827 = vadd.f32 %v825, %v826
  %v828 = vsel %vm146, %v645, 0.0
  %v829 = vadd.f32 %v827, %v828
  %v830 = vsel %vm146, %v650, 0.0
  %v831 = vadd.f32 %v829, %v830
  %v832 = vsel %vm146, %v655, 0.0
  %v833 = vadd.f32 %v831, %v832
  %v834 = vsel %vm146, %v660, 0.0
  %v835 = vadd.f32 %v833, %v834
  %vm836 = vcmask 123904
  %v837 = vsel %vm836, %v665, 0.0
  %v838 = vadd.f32 %v835, %v837
  %v839 = vrot.slane %v838, 4
  %v840 = vadd.f32 %v838, %v839
  %v841 = vrot.slane %v840, 2
  %v842 = vadd.f32 %v840, %v841
  %v843 = vrot.slane %v842, 1
  %v844 = vadd.f32 %v842, %v843
  %v845 = vmul.f32 %v385, %v385
  %v846 = vmul.f32 %v390, %v390
  %v847 = vmul.f32 %v395, %v395
  %v848 = vmul.f32 %v400, %v400
  %v849 = vmul.f32 %v405, %v405
  %v850 = vmul.f32 %v410, %v410
  %v851 = vmul.f32 %v415, %v415
  %v852 = vmul.f32 %v420, %v420
  %v853 = vmul.f32 %v425, %v425
  %v854 = vmul.f32 %v430, %v430
  %v855 = vmul.f32 %v435, %v435
  %v856 = vmul.f32 %v440, %v440
  %v857 = vmul.f32 %v445, %v445
  %v858 = vmul.f32 %v450, %v450
  %v859 = vmul.f32 %v455, %v455
  %v860 = vmul.f32 %v460, %v460
  %v861 = vmul.f32 %v465, %v465
  %v862 = vmul.f32 %v470, %v470
  %v863 = vmul.f32 %v475, %v475
  %v864 = vmul.f32 %v480, %v480
  %v865 = vmul.f32 %v485, %v485
  %v866 = vmul.f32 %v490, %v490
  %v867 = vmul.f32 %v495, %v495
  %v868 = vmul.f32 %v500, %v500
  %v869 = vmul.f32 %v505, %v505
  %v870 = vmul.f32 %v510, %v510
  %v871 = vmul.f32 %v515, %v515
  %v872 = vmul.f32 %v520, %v520
  %v873 = vmul.f32 %v525, %v525
  %v874 = vmul.f32 %v530, %v530
  %v875 = vmul.f32 %v535, %v535
  %v876 = vmul.f32 %v540, %v540
  %v877 = vmul.f32 %v545, %v545
  %v878 = vmul.f32 %v550, %v550
  %v879 = vmul.f32 %v555, %v555
  %v880 = vmul.f32 %v560, %v560
  %v881 = vmul.f32 %v565, %v565
  %v882 = vmul.f32 %v570, %v570
  %v883 = vmul.f32 %v575, %v575
  %v884 = vmul.f32 %v580, %v580
  %v885 = vmul.f32 %v585, %v585
  %v886 = vmul.f32 %v590, %v590
  %v887 = vmul.f32 %v595, %v595
  %v888 = vmul.f32 %v600, %v600
  %v889 = vmul.f32 %v605, %v605
  %v890 = vmul.f32 %v610, %v610
  %v891 = vmul.f32 %v615, %v615
  %v892 = vmul.f32 %v620, %v620
  %v893 = vmul.f32 %v625, %v625
  %v894 = vmul.f32 %v630, %v630
  %v895 = vmul.f32 %v635, %v635
  %v896 = vmul.f32 %v640, %v640
  %v897 = vmul.f32 %v645, %v645
  %v898 = vmul.f32 %v650, %v650
  %v899 = vmul.f32 %v655, %v655
  %v900 = vmul.f32 %v660, %v660
  %v901 = vmul.f32 %v665, %v665
  %v902 = vsel %vm146, %v845, 0.0
  %v903 = vsel %vm146, %v846, 0.0
  %v904 = vadd.f32 %v902, %v903
  %v905 = vsel %vm146, %v847, 0.0
  %v906 = vadd.f32 %v904, %v905
  %v907 = vsel %vm146, %v848, 0.0
  %v908 = vadd.f32 %v906, %v907
  %v909 = vsel %vm146, %v849, 0.0
  %v910 = vadd.f32 %v908, %v909
  %v911 = vsel %vm146, %v850, 0.0
  %v912 = vadd.f32 %v910, %v911
  %v913 = vsel %vm146, %v851, 0.0
  %v914 = vadd.f32 %v912, %v913
  %v915 = vsel %vm146, %v852, 0.0
  %v916 = vadd.f32 %v914, %v915
  %v917 = vsel %vm146, %v853, 0.0
  %v918 = vadd.f32 %v916, %v917
  %v919 = vsel %vm146, %v854, 0.0
  %v920 = vadd.f32 %v918, %v919
  %v921 = vsel %vm146, %v855, 0.0
  %v922 = vadd.f32 %v920, %v921
  %v923 = vsel %vm146, %v856, 0.0
  %v924 = vadd.f32 %v922, %v923
  %v925 = vsel %vm146, %v857, 0.0
  %v926 = vadd.f32 %v924, %v925
  %v927 = vsel %vm146, %v858, 0.0
  %v928 = vadd.f32 %v926, %v927
  %v929 = vsel %vm146, %v859, 0.0
  %v930 = vadd.f32 %v928, %v929
  %v931 = vsel %vm146, %v860, 0.0
  %v932 = vadd.f32 %v930, %v931
  %v933 = vsel %vm146, %v861, 0.0
  %v934 = vadd.f32 %v932, %v933
  %v935 = vsel %vm146, %v862, 0.0
  %v936 = vadd.f32 %v934, %v935
  %v937 = vsel %vm146, %v863, 0.0
  %v938 = vadd.f32 %v936, %v937
  %v939 = vsel %vm146, %v864, 0.0
  %v940 = vadd.f32 %v938, %v939
  %v941 = vsel %vm146, %v865, 0.0
  %v942 = vadd.f32 %v940, %v941
  %v943 = vsel %vm146, %v866, 0.0
  %v944 = vadd.f32 %v942, %v943
  %v945 = vsel %vm146, %v867, 0.0
  %v946 = vadd.f32 %v944, %v945
  %v947 = vsel %vm146, %v868, 0.0
  %v948 = vadd.f32 %v946, %v947
  %v949 = vsel %vm146, %v869, 0.0
  %v950 = vadd.f32 %v948, %v949
  %v951 = vsel %vm146, %v870, 0.0
  %v952 = vadd.f32 %v950, %v951
  %v953 = vsel %vm146, %v871, 0.0
  %v954 = vadd.f32 %v952, %v953
  %v955 = vsel %vm146, %v872, 0.0
  %v956 = vadd.f32 %v954, %v955
  %v957 = vsel %vm146, %v873, 0.0
  %v958 = vadd.f32 %v956, %v957
  %v959 = vsel %vm146, %v874, 0.0
  %v960 = vadd.f32 %v958, %v959
  %v961 = vsel %vm146, %v875, 0.0
  %v962 = vadd.f32 %v960, %v961
  %v963 = vsel %vm146, %v876, 0.0
  %v964 = vadd.f32 %v962, %v963
  %v965 = vsel %vm146, %v877, 0.0
  %v966 = vadd.f32 %v964, %v965
  %v967 = vsel %vm146, %v878, 0.0
  %v968 = vadd.f32 %v966, %v967
  %v969 = vsel %vm146, %v879, 0.0
  %v970 = vadd.f32 %v968, %v969
  %v971 = vsel %vm146, %v880, 0.0
  %v972 = vadd.f32 %v970, %v971
  %v973 = vsel %vm146, %v881, 0.0
  %v974 = vadd.f32 %v972, %v973
  %v975 = vsel %vm146, %v882, 0.0
  %v976 = vadd.f32 %v974, %v975
  %v977 = vsel %vm146, %v883, 0.0
  %v978 = vadd.f32 %v976, %v977
  %v979 = vsel %vm146, %v884, 0.0
  %v980 = vadd.f32 %v978, %v979
  %v981 = vsel %vm146, %v885, 0.0
  %v982 = vadd.f32 %v980, %v981
  %v983 = vsel %vm146, %v886, 0.0
  %v984 = vadd.f32 %v982, %v983
  %v985 = vsel %vm146, %v887, 0.0
  %v986 = vadd.f32 %v984, %v985
  %v987 = vsel %vm146, %v888, 0.0
  %v988 = vadd.f32 %v986, %v987
  %v989 = vsel %vm146, %v889, 0.0
  %v990 = vadd.f32 %v988, %v989
  %v991 = vsel %vm146, %v890, 0.0
  %v992 = vadd.f32 %v990, %v991
  %v993 = vsel %vm146, %v891, 0.0
  %v994 = vadd.f32 %v992, %v993
  %v995 = vsel %vm146, %v892, 0.0
  %v996 = vadd.f32 %v994, %v995
  %v997 = vsel %vm146, %v893, 0.0
  %v998 = vadd.f32 %v996, %v997
  %v999 = vsel %vm146, %v894, 0.0
  %v1000 = vadd.f32 %v998, %v999
  %v1001 = vsel %vm146, %v895, 0.0
  %v1002 = vadd.f32 %v1000, %v1001
  %v1003 = vsel %vm146, %v896, 0.0
  %v1004 = vadd.f32 %v1002, %v1003
  %v1005 = vsel %vm146, %v897, 0.0
  %v1006 = vadd.f32 %v1004, %v1005
  %v1007 = vsel %vm146, %v898, 0.0
  %v1008 = vadd.f32 %v1006, %v1007
  %v1009 = vsel %vm146, %v899, 0.0
  %v1010 = vadd.f32 %v1008, %v1009
  %v1011 = vsel %vm146, %v900, 0.0
  %v1012 = vadd.f32 %v1010, %v1011
  %v1013 = vsel %vm836, %v901, 0.0
  %v1014 = vadd.f32 %v1012, %v1013
  %v1015 = vrot.slane %v1014, 4
  %v1016 = vadd.f32 %v1014, %v1015
  %v1017 = vrot.slane %v1016, 2
  %v1018 = vadd.f32 %v1016, %v1017
  %v1019 = vrot.slane %v1018, 1
  %v1020 = vadd.f32 %v1018, %v1019
  %v1021 = vmul.f32 %v844, 0.0022222223
  %v1022 = vmul.f32 %v1020, 0.0022222223
  %v1023 = vmul.f32 %v1021, %v1021
  %v1024 = vsub.f32 %v1022, %v1023
  %v1025 = vmax.f32 %v1024, 0.0
  %v1026 = vsub.f32 %v385, %v1021
  %v1027 = vsub.f32 %v390, %v1021
  %v1028 = vsub.f32 %v395, %v1021
  %v1029 = vsub.f32 %v400, %v1021
  %v1030 = vsub.f32 %v405, %v1021
  %v1031 = vsub.f32 %v410, %v1021
  %v1032 = vsub.f32 %v415, %v1021
  %v1033 = vsub.f32 %v420, %v1021
  %v1034 = vsub.f32 %v425, %v1021
  %v1035 = vsub.f32 %v430, %v1021
  %v1036 = vsub.f32 %v435, %v1021
  %v1037 = vsub.f32 %v440, %v1021
  %v1038 = vsub.f32 %v445, %v1021
  %v1039 = vsub.f32 %v450, %v1021
  %v1040 = vsub.f32 %v455, %v1021
  %v1041 = vsub.f32 %v460, %v1021
  %v1042 = vsub.f32 %v465, %v1021
  %v1043 = vsub.f32 %v470, %v1021
  %v1044 = vsub.f32 %v475, %v1021
  %v1045 = vsub.f32 %v480, %v1021
  %v1046 = vsub.f32 %v485, %v1021
  %v1047 = vsub.f32 %v490, %v1021
  %v1048 = vsub.f32 %v495, %v1021
  %v1049 = vsub.f32 %v500, %v1021
  %v1050 = vsub.f32 %v505, %v1021
  %v1051 = vsub.f32 %v510, %v1021
  %v1052 = vsub.f32 %v515, %v1021
  %v1053 = vsub.f32 %v520, %v1021
  %v1054 = vsub.f32 %v525, %v1021
  %v1055 = vsub.f32 %v530, %v1021
  %v1056 = vsub.f32 %v535, %v1021
  %v1057 = vsub.f32 %v540, %v1021
  %v1058 = vsub.f32 %v545, %v1021
  %v1059 = vsub.f32 %v550, %v1021
  %v1060 = vsub.f32 %v555, %v1021
  %v1061 = vsub.f32 %v560, %v1021
  %v1062 = vsub.f32 %v565, %v1021
  %v1063 = vsub.f32 %v570, %v1021
  %v1064 = vsub.f32 %v575, %v1021
  %v1065 = vsub.f32 %v580, %v1021
  %v1066 = vsub.f32 %v585, %v1021
  %v1067 = vsub.f32 %v590, %v1021
  %v1068 = vsub.f32 %v595, %v1021
  %v1069 = vsub.f32 %v600, %v1021
  %v1070 = vsub.f32 %v605, %v1021
  %v1071 = vsub.f32 %v610, %v1021
  %v1072 = vsub.f32 %v615, %v1021
  %v1073 = vsub.f32 %v620, %v1021
  %v1074 = vsub.f32 %v625, %v1021
  %v1075 = vsub.f32 %v630, %v1021
  %v1076 = vsub.f32 %v635, %v1021
  %v1077 = vsub.f32 %v640, %v1021
  %v1078 = vsub.f32 %v645, %v1021
  %v1079 = vsub.f32 %v650, %v1021
  %v1080 = vsub.f32 %v655, %v1021
  %v1081 = vsub.f32 %v660, %v1021
  %v1082 = vsub.f32 %v665, %v1021
  %v1083 = vadd.f32 %v1025, 1e-05
  %v1084 = vrsqrt.pop %v1083
  %v1085 = vmul.f32 %v1026, %v1084
  %v1086 = vmul.f32 %v1027, %v1084
  %v1087 = vmul.f32 %v1028, %v1084
  %v1088 = vmul.f32 %v1029, %v1084
  %v1089 = vmul.f32 %v1030, %v1084
  %v1090 = vmul.f32 %v1031, %v1084
  %v1091 = vmul.f32 %v1032, %v1084
  %v1092 = vmul.f32 %v1033, %v1084
  %v1093 = vmul.f32 %v1034, %v1084
  %v1094 = vmul.f32 %v1035, %v1084
  %v1095 = vmul.f32 %v1036, %v1084
  %v1096 = vmul.f32 %v1037, %v1084
  %v1097 = vmul.f32 %v1038, %v1084
  %v1098 = vmul.f32 %v1039, %v1084
  %v1099 = vmul.f32 %v1040, %v1084
  %v1100 = vmul.f32 %v1041, %v1084
  %v1101 = vmul.f32 %v1042, %v1084
  %v1102 = vmul.f32 %v1043, %v1084
  %v1103 = vmul.f32 %v1044, %v1084
  %v1104 = vmul.f32 %v1045, %v1084
  %v1105 = vmul.f32 %v1046, %v1084
  %v1106 = vmul.f32 %v1047, %v1084
  %v1107 = vmul.f32 %v1048, %v1084
  %v1108 = vmul.f32 %v1049, %v1084
  %v1109 = vmul.f32 %v1050, %v1084
  %v1110 = vmul.f32 %v1051, %v1084
  %v1111 = vmul.f32 %v1052, %v1084
  %v1112 = vmul.f32 %v1053, %v1084
  %v1113 = vmul.f32 %v1054, %v1084
  %v1114 = vmul.f32 %v1055, %v1084
  %v1115 = vmul.f32 %v1056, %v1084
  %v1116 = vmul.f32 %v1057, %v1084
  %v1117 = vmul.f32 %v1058, %v1084
  %v1118 = vmul.f32 %v1059, %v1084
  %v1119 = vmul.f32 %v1060, %v1084
  %v1120 = vmul.f32 %v1061, %v1084
  %v1121 = vmul.f32 %v1062, %v1084
  %v1122 = vmul.f32 %v1063, %v1084
  %v1123 = vmul.f32 %v1064, %v1084
  %v1124 = vmul.f32 %v1065, %v1084
  %v1125 = vmul.f32 %v1066, %v1084
  %v1126 = vmul.f32 %v1067, %v1084
  %v1127 = vmul.f32 %v1068, %v1084
  %v1128 = vmul.f32 %v1069, %v1084
  %v1129 = vmul.f32 %v1070, %v1084
  %v1130 = vmul.f32 %v1071, %v1084
  %v1131 = vmul.f32 %v1072, %v1084
  %v1132 = vmul.f32 %v1073, %v1084
  %v1133 = vmul.f32 %v1074, %v1084
  %v1134 = vmul.f32 %v1075, %v1084
  %v1135 = vmul.f32 %v1076, %v1084
  %v1136 = vmul.f32 %v1077, %v1084
  %v1137 = vmul.f32 %v1078, %v1084
  %v1138 = vmul.f32 %v1079, %v1084
  %v1139 = vmul.f32 %v1080, %v1084
  %v1140 = vmul.f32 %v1081, %v1084
  %v1141 = vmul.f32 %v1082, %v1084
  %v1142 = vadd.f32 %v668, %v1085
  %v1143 = vadd.f32 %v669, %v1086
  %v1144 = vadd.f32 %v670, %v1087
  %v1145 = vadd.f32 %v671, %v1088
  %v1146 = vadd.f32 %v672, %v1089
  %v1147 = vadd.f32 %v673, %v1090
  %v1148 = vadd.f32 %v674, %v1091
  %v1149 = vadd.f32 %v675, %v1092
  %v1150 = vadd.f32 %v676, %v1093
  %v1151 = vadd.f32 %v677, %v1094
  %v1152 = vadd.f32 %v678, %v1095
  %v1153 = vadd.f32 %v679, %v1096
  %v1154 = vadd.f32 %v680, %v1097
  %v1155 = vadd.f32 %v681, %v1098
  %v1156 = vadd.f32 %v682, %v1099
  %v1157 = vadd.f32 %v683, %v1100
  %v1158 = vadd.f32 %v684, %v1101
  %v1159 = vadd.f32 %v685, %v1102
  %v1160 = vadd.f32 %v686, %v1103
  %v1161 = vadd.f32 %v687, %v1104
  %v1162 = vadd.f32 %v688, %v1105
  %v1163 = vadd.f32 %v689, %v1106
  %v1164 = vadd.f32 %v690, %v1107
  %v1165 = vadd.f32 %v691, %v1108
  %v1166 = vadd.f32 %v692, %v1109
  %v1167 = vadd.f32 %v693, %v1110
  %v1168 = vadd.f32 %v694, %v1111
  %v1169 = vadd.f32 %v695, %v1112
  %v1170 = vadd.f32 %v696, %v1113
  %v1171 = vadd.f32 %v697, %v1114
  %v1172 = vadd.f32 %v698, %v1115
  %v1173 = vadd.f32 %v699, %v1116
  %v1174 = vadd.f32 %v700, %v1117
  %v1175 = vadd.f32 %v701, %v1118
  %v1176 = vadd.f32 %v702, %v1119
  %v1177 = vadd.f32 %v703, %v1120
  %v1178 = vadd.f32 %v704, %v1121
  %v1179 = vadd.f32 %v705, %v1122
  %v1180 = vadd.f32 %v706, %v1123
  %v1181 = vadd.f32 %v707, %v1124
  %v1182 = vadd.f32 %v708, %v1125
  %v1183 = vadd.f32 %v709, %v1126
  %v1184 = vadd.f32 %v710, %v1127
  %v1185 = vadd.f32 %v711, %v1128
  %v1186 = vadd.f32 %v712, %v1129
  %v1187 = vadd.f32 %v713, %v1130
  %v1188 = vadd.f32 %v714, %v1131
  %v1189 = vadd.f32 %v715, %v1132
  %v1190 = vadd.f32 %v716, %v1133
  %v1191 = vadd.f32 %v717, %v1134
  %v1192 = vadd.f32 %v718, %v1135
  %v1193 = vadd.f32 %v719, %v1136
  %v1194 = vadd.f32 %v720, %v1137
  %v1195 = vadd.f32 %v721, %v1138
  %v1196 = vadd.f32 %v722, %v1139
  %v1197 = vadd.f32 %v723, %v1140
  %v1198 = vadd.f32 %v724, %v1141
  %v1199 = vsel %vm146, %v1142, 0.0
  %v1200 = vsel %vm146, %v1143, 0.0
  %v1201 = vadd.f32 %v1199, %v1200
  %v1202 = vsel %vm146, %v1144, 0.0
  %v1203 = vadd.f32 %v1201, %v1202
  %v1204 = vsel %vm146, %v1145, 0.0
  %v1205 = vadd.f32 %v1203, %v1204
  %v1206 = vsel %vm146, %v1146, 0.0
  %v1207 = vadd.f32 %v1205, %v1206
  %v1208 = vsel %vm146, %v1147, 0.0
  %v1209 = vadd.f32 %v1207, %v1208
  %v1210 = vsel %vm146, %v1148, 0.0
  %v1211 = vadd.f32 %v1209, %v1210
  %v1212 = vsel %vm146, %v1149, 0.0
  %v1213 = vadd.f32 %v1211, %v1212
  %v1214 = vsel %vm146, %v1150, 0.0
  %v1215 = vadd.f32 %v1213, %v1214
  %v1216 = vsel %vm146, %v1151, 0.0
  %v1217 = vadd.f32 %v1215, %v1216
  %v1218 = vsel %vm146, %v1152, 0.0
  %v1219 = vadd.f32 %v1217, %v1218
  %v1220 = vsel %vm146, %v1153, 0.0
  %v1221 = vadd.f32 %v1219, %v1220
  %v1222 = vsel %vm146, %v1154, 0.0
  %v1223 = vadd.f32 %v1221, %v1222
  %v1224 = vsel %vm146, %v1155, 0.0
  %v1225 = vadd.f32 %v1223, %v1224
  %v1226 = vsel %vm146, %v1156, 0.0
  %v1227 = vadd.f32 %v1225, %v1226
  %v1228 = vsel %vm146, %v1157, 0.0
  %v1229 = vadd.f32 %v1227, %v1228
  %v1230 = vsel %vm146, %v1158, 0.0
  %v1231 = vadd.f32 %v1229, %v1230
  %v1232 = vsel %vm146, %v1159, 0.0
  %v1233 = vadd.f32 %v1231, %v1232
  %v1234 = vsel %vm146, %v1160, 0.0
  %v1235 = vadd.f32 %v1233, %v1234
  %v1236 = vsel %vm146, %v1161, 0.0
  %v1237 = vadd.f32 %v1235, %v1236
  %v1238 = vsel %vm146, %v1162, 0.0
  %v1239 = vadd.f32 %v1237, %v1238
  %v1240 = vsel %vm146, %v1163, 0.0
  %v1241 = vadd.f32 %v1239, %v1240
  %v1242 = vsel %vm146, %v1164, 0.0
  %v1243 = vadd.f32 %v1241, %v1242
  %v1244 = vsel %vm146, %v1165, 0.0
  %v1245 = vadd.f32 %v1243, %v1244
  %v1246 = vsel %vm146, %v1166, 0.0
  %v1247 = vadd.f32 %v1245, %v1246
  %v1248 = vsel %vm146, %v1167, 0.0
  %v1249 = vadd.f32 %v1247, %v1248
  %v1250 = vsel %vm146, %v1168, 0.0
  %v1251 = vadd.f32 %v1249, %v1250
  %v1252 = vsel %vm146, %v1169, 0.0
  %v1253 = vadd.f32 %v1251, %v1252
  %v1254 = vsel %vm146, %v1170, 0.0
  %v1255 = vadd.f32 %v1253, %v1254
  %v1256 = vsel %vm146, %v1171, 0.0
  %v1257 = vadd.f32 %v1255, %v1256
  %v1258 = vsel %vm146, %v1172, 0.0
  %v1259 = vadd.f32 %v1257, %v1258
  %v1260 = vsel %vm146, %v1173, 0.0
  %v1261 = vadd.f32 %v1259, %v1260
  %v1262 = vsel %vm146, %v1174, 0.0
  %v1263 = vadd.f32 %v1261, %v1262
  %v1264 = vsel %vm146, %v1175, 0.0
  %v1265 = vadd.f32 %v1263, %v1264
  %v1266 = vsel %vm146, %v1176, 0.0
  %v1267 = vadd.f32 %v1265, %v1266
  %v1268 = vsel %vm146, %v1177, 0.0
  %v1269 = vadd.f32 %v1267, %v1268
  %v1270 = vsel %vm146, %v1178, 0.0
  %v1271 = vadd.f32 %v1269, %v1270
  %v1272 = vsel %vm146, %v1179, 0.0
  %v1273 = vadd.f32 %v1271, %v1272
  %v1274 = vsel %vm146, %v1180, 0.0
  %v1275 = vadd.f32 %v1273, %v1274
  %v1276 = vsel %vm146, %v1181, 0.0
  %v1277 = vadd.f32 %v1275, %v1276
  %v1278 = vsel %vm146, %v1182, 0.0
  %v1279 = vadd.f32 %v1277, %v1278
  %v1280 = vsel %vm146, %v1183, 0.0
  %v1281 = vadd.f32 %v1279, %v1280
  %v1282 = vsel %vm146, %v1184, 0.0
  %v1283 = vadd.f32 %v1281, %v1282
  %v1284 = vsel %vm146, %v1185, 0.0
  %v1285 = vadd.f32 %v1283, %v1284
  %v1286 = vsel %vm146, %v1186, 0.0
  %v1287 = vadd.f32 %v1285, %v1286
  %v1288 = vsel %vm146, %v1187, 0.0
  %v1289 = vadd.f32 %v1287, %v1288
  %v1290 = vsel %vm146, %v1188, 0.0
  %v1291 = vadd.f32 %v1289, %v1290
  %v1292 = vsel %vm146, %v1189, 0.0
  %v1293 = vadd.f32 %v1291, %v1292
  %v1294 = vsel %vm146, %v1190, 0.0
  %v1295 = vadd.f32 %v1293, %v1294
  %v1296 = vsel %vm146, %v1191, 0.0
  %v1297 = vadd.f32 %v1295, %v1296
  %v1298 = vsel %vm146, %v1192, 0.0
  %v1299 = vadd.f32 %v1297, %v1298
  %v1300 = vsel %vm146, %v1193, 0.0
  %v1301 = vadd.f32 %v1299, %v1300
  %v1302 = vsel %vm146, %v1194, 0.0
  %v1303 = vadd.f32 %v1301, %v1302
  %v1304 = vsel %vm146, %v1195, 0.0
  %v1305 = vadd.f32 %v1303, %v1304
  %v1306 = vsel %vm146, %v1196, 0.0
  %v1307 = vadd.f32 %v1305, %v1306
  %v1308 = vsel %vm146, %v1197, 0.0
  %v1309 = vadd.f32 %v1307, %v1308
  %v1310 = vsel %vm836, %v1198, 0.0
  %v1311 = vadd.f32 %v1309, %v1310
  %v1312 = vrot.slane %v1311, 4
  %v1313 = vadd.f32 %v1311, %v1312
  %v1314 = vrot.slane %v1313, 2
  %v1315 = vadd.f32 %v1313, %v1314
  %v1316 = vrot.slane %v1315, 1
  %v1317 = vadd.f32 %v1315, %v1316
  %v1318 = vmul.f32 %v1142, %v1142
  %v1319 = vmul.f32 %v1143, %v1143
  %v1320 = vmul.f32 %v1144, %v1144
  %v1321 = vmul.f32 %v1145, %v1145
  %v1322 = vmul.f32 %v1146, %v1146
  %v1323 = vmul.f32 %v1147, %v1147
  %v1324 = vmul.f32 %v1148, %v1148
  %v1325 = vmul.f32 %v1149, %v1149
  %v1326 = vmul.f32 %v1150, %v1150
  %v1327 = vmul.f32 %v1151, %v1151
  %v1328 = vmul.f32 %v1152, %v1152
  %v1329 = vmul.f32 %v1153, %v1153
  %v1330 = vmul.f32 %v1154, %v1154
  %v1331 = vmul.f32 %v1155, %v1155
  %v1332 = vmul.f32 %v1156, %v1156
  %v1333 = vmul.f32 %v1157, %v1157
  %v1334 = vmul.f32 %v1158, %v1158
  %v1335 = vmul.f32 %v1159, %v1159
  %v1336 = vmul.f32 %v1160, %v1160
  %v1337 = vmul.f32 %v1161, %v1161
  %v1338 = vmul.f32 %v1162, %v1162
  %v1339 = vmul.f32 %v1163, %v1163
  %v1340 = vmul.f32 %v1164, %v1164
  %v1341 = vmul.f32 %v1165, %v1165
  %v1342 = vmul.f32 %v1166, %v1166
  %v1343 = vmul.f32 %v1167, %v1167
  %v1344 = vmul.f32 %v1168, %v1168
  %v1345 = vmul.f32 %v1169, %v1169
  %v1346 = vmul.f32 %v1170, %v1170
  %v1347 = vmul.f32 %v1171, %v1171
  %v1348 = vmul.f32 %v1172, %v1172
  %v1349 = vmul.f32 %v1173, %v1173
  %v1350 = vmul.f32 %v1174, %v1174
  %v1351 = vmul.f32 %v1175, %v1175
  %v1352 = vmul.f32 %v1176, %v1176
  %v1353 = vmul.f32 %v1177, %v1177
  %v1354 = vmul.f32 %v1178, %v1178
  %v1355 = vmul.f32 %v1179, %v1179
  %v1356 = vmul.f32 %v1180, %v1180
  %v1357 = vmul.f32 %v1181, %v1181
  %v1358 = vmul.f32 %v1182, %v1182
  %v1359 = vmul.f32 %v1183, %v1183
  %v1360 = vmul.f32 %v1184, %v1184
  %v1361 = vmul.f32 %v1185, %v1185
  %v1362 = vmul.f32 %v1186, %v1186
  %v1363 = vmul.f32 %v1187, %v1187
  %v1364 = vmul.f32 %v1188, %v1188
  %v1365 = vmul.f32 %v1189, %v1189
  %v1366 = vmul.f32 %v1190, %v1190
  %v1367 = vmul.f32 %v1191, %v1191
  %v1368 = vmul.f32 %v1192, %v1192
  %v1369 = vmul.f32 %v1193, %v1193
  %v1370 = vmul.f32 %v1194, %v1194
  %v1371 = vmul.f32 %v1195, %v1195
  %v1372 = vmul.f32 %v1196, %v1196
  %v1373 = vmul.f32 %v1197, %v1197
  %v1374 = vmul.f32 %v1198, %v1198
  %v1375 = vsel %vm146, %v1318, 0.0
  %v1376 = vsel %vm146, %v1319, 0.0
  %v1377 = vadd.f32 %v1375, %v1376
  %v1378 = vsel %vm146, %v1320, 0.0
  %v1379 = vadd.f32 %v1377, %v1378
  %v1380 = vsel %vm146, %v1321, 0.0
  %v1381 = vadd.f32 %v1379, %v1380
  %v1382 = vsel %vm146, %v1322, 0.0
  %v1383 = vadd.f32 %v1381, %v1382
  %v1384 = vsel %vm146, %v1323, 0.0
  %v1385 = vadd.f32 %v1383, %v1384
  %v1386 = vsel %vm146, %v1324, 0.0
  %v1387 = vadd.f32 %v1385, %v1386
  %v1388 = vsel %vm146, %v1325, 0.0
  %v1389 = vadd.f32 %v1387, %v1388
  %v1390 = vsel %vm146, %v1326, 0.0
  %v1391 = vadd.f32 %v1389, %v1390
  %v1392 = vsel %vm146, %v1327, 0.0
  %v1393 = vadd.f32 %v1391, %v1392
  %v1394 = vsel %vm146, %v1328, 0.0
  %v1395 = vadd.f32 %v1393, %v1394
  %v1396 = vsel %vm146, %v1329, 0.0
  %v1397 = vadd.f32 %v1395, %v1396
  %v1398 = vsel %vm146, %v1330, 0.0
  %v1399 = vadd.f32 %v1397, %v1398
  %v1400 = vsel %vm146, %v1331, 0.0
  %v1401 = vadd.f32 %v1399, %v1400
  %v1402 = vsel %vm146, %v1332, 0.0
  %v1403 = vadd.f32 %v1401, %v1402
  %v1404 = vsel %vm146, %v1333, 0.0
  %v1405 = vadd.f32 %v1403, %v1404
  %v1406 = vsel %vm146, %v1334, 0.0
  %v1407 = vadd.f32 %v1405, %v1406
  %v1408 = vsel %vm146, %v1335, 0.0
  %v1409 = vadd.f32 %v1407, %v1408
  %v1410 = vsel %vm146, %v1336, 0.0
  %v1411 = vadd.f32 %v1409, %v1410
  %v1412 = vsel %vm146, %v1337, 0.0
  %v1413 = vadd.f32 %v1411, %v1412
  %v1414 = vsel %vm146, %v1338, 0.0
  %v1415 = vadd.f32 %v1413, %v1414
  %v1416 = vsel %vm146, %v1339, 0.0
  %v1417 = vadd.f32 %v1415, %v1416
  %v1418 = vsel %vm146, %v1340, 0.0
  %v1419 = vadd.f32 %v1417, %v1418
  %v1420 = vsel %vm146, %v1341, 0.0
  %v1421 = vadd.f32 %v1419, %v1420
  %v1422 = vsel %vm146, %v1342, 0.0
  %v1423 = vadd.f32 %v1421, %v1422
  %v1424 = vsel %vm146, %v1343, 0.0
  %v1425 = vadd.f32 %v1423, %v1424
  %v1426 = vsel %vm146, %v1344, 0.0
  %v1427 = vadd.f32 %v1425, %v1426
  %v1428 = vsel %vm146, %v1345, 0.0
  %v1429 = vadd.f32 %v1427, %v1428
  %v1430 = vsel %vm146, %v1346, 0.0
  %v1431 = vadd.f32 %v1429, %v1430
  %v1432 = vsel %vm146, %v1347, 0.0
  %v1433 = vadd.f32 %v1431, %v1432
  %v1434 = vsel %vm146, %v1348, 0.0
  %v1435 = vadd.f32 %v1433, %v1434
  %v1436 = vsel %vm146, %v1349, 0.0
  %v1437 = vadd.f32 %v1435, %v1436
  %v1438 = vsel %vm146, %v1350, 0.0
  %v1439 = vadd.f32 %v1437, %v1438
  %v1440 = vsel %vm146, %v1351, 0.0
  %v1441 = vadd.f32 %v1439, %v1440
  %v1442 = vsel %vm146, %v1352, 0.0
  %v1443 = vadd.f32 %v1441, %v1442
  %v1444 = vsel %vm146, %v1353, 0.0
  %v1445 = vadd.f32 %v1443, %v1444
  %v1446 = vsel %vm146, %v1354, 0.0
  %v1447 = vadd.f32 %v1445, %v1446
  %v1448 = vsel %vm146, %v1355, 0.0
  %v1449 = vadd.f32 %v1447, %v1448
  %v1450 = vsel %vm146, %v1356, 0.0
  %v1451 = vadd.f32 %v1449, %v1450
  %v1452 = vsel %vm146, %v1357, 0.0
  %v1453 = vadd.f32 %v1451, %v1452
  %v1454 = vsel %vm146, %v1358, 0.0
  %v1455 = vadd.f32 %v1453, %v1454
  %v1456 = vsel %vm146, %v1359, 0.0
  %v1457 = vadd.f32 %v1455, %v1456
  %v1458 = vsel %vm146, %v1360, 0.0
  %v1459 = vadd.f32 %v1457, %v1458
  %v1460 = vsel %vm146, %v1361, 0.0
  %v1461 = vadd.f32 %v1459, %v1460
  %v1462 = vsel %vm146, %v1362, 0.0
  %v1463 = vadd.f32 %v1461, %v1462
  %v1464 = vsel %vm146, %v1363, 0.0
  %v1465 = vadd.f32 %v1463, %v1464
  %v1466 = vsel %vm146, %v1364, 0.0
  %v1467 = vadd.f32 %v1465, %v1466
  %v1468 = vsel %vm146, %v1365, 0.0
  %v1469 = vadd.f32 %v1467, %v1468
  %v1470 = vsel %vm146, %v1366, 0.0
  %v1471 = vadd.f32 %v1469, %v1470
  %v1472 = vsel %vm146, %v1367, 0.0
  %v1473 = vadd.f32 %v1471, %v1472
  %v1474 = vsel %vm146, %v1368, 0.0
  %v1475 = vadd.f32 %v1473, %v1474
  %v1476 = vsel %vm146, %v1369, 0.0
  %v1477 = vadd.f32 %v1475, %v1476
  %v1478 = vsel %vm146, %v1370, 0.0
  %v1479 = vadd.f32 %v1477, %v1478
  %v1480 = vsel %vm146, %v1371, 0.0
  %v1481 = vadd.f32 %v1479, %v1480
  %v1482 = vsel %vm146, %v1372, 0.0
  %v1483 = vadd.f32 %v1481, %v1482
  %v1484 = vsel %vm146, %v1373, 0.0
  %v1485 = vadd.f32 %v1483, %v1484
  %v1486 = vsel %vm836, %v1374, 0.0
  %v1487 = vadd.f32 %v1485, %v1486
  %v1488 = vrot.slane %v1487, 4
  %v1489 = vadd.f32 %v1487, %v1488
  %v1490 = vrot.slane %v1489, 2
  %v1491 = vadd.f32 %v1489, %v1490
  %v1492 = vrot.slane %v1491, 1
  %v1493 = vadd.f32 %v1491, %v1492
  %v1494 = vmul.f32 %v1317, 0.0022222223
  %v1495 = vmul.f32 %v1493, 0.0022222223
  %v1496 = vmul.f32 %v1494, %v1494
  %v1497 = vsub.f32 %v1495, %v1496
  %v1498 = vmax.f32 %v1497, 0.0
  %v1499 = vsub.f32 %v1142, %v1494
  %v1500 = vsub.f32 %v1143, %v1494
  %v1501 = vsub.f32 %v1144, %v1494
  %v1502 = vsub.f32 %v1145, %v1494
  %v1503 = vsub.f32 %v1146, %v1494
  %v1504 = vsub.f32 %v1147, %v1494
  %v1505 = vsub.f32 %v1148, %v1494
  %v1506 = vsub.f32 %v1149, %v1494
  %v1507 = vsub.f32 %v1150, %v1494
  %v1508 = vsub.f32 %v1151, %v1494
  %v1509 = vsub.f32 %v1152, %v1494
  %v1510 = vsub.f32 %v1153, %v1494
  %v1511 = vsub.f32 %v1154, %v1494
  %v1512 = vsub.f32 %v1155, %v1494
  %v1513 = vsub.f32 %v1156, %v1494
  %v1514 = vsub.f32 %v1157, %v1494
  %v1515 = vsub.f32 %v1158, %v1494
  %v1516 = vsub.f32 %v1159, %v1494
  %v1517 = vsub.f32 %v1160, %v1494
  %v1518 = vsub.f32 %v1161, %v1494
  %v1519 = vsub.f32 %v1162, %v1494
  %v1520 = vsub.f32 %v1163, %v1494
  %v1521 = vsub.f32 %v1164, %v1494
  %v1522 = vsub.f32 %v1165, %v1494
  %v1523 = vsub.f32 %v1166, %v1494
  %v1524 = vsub.f32 %v1167, %v1494
  %v1525 = vsub.f32 %v1168, %v1494
  %v1526 = vsub.f32 %v1169, %v1494
  %v1527 = vsub.f32 %v1170, %v1494
  %v1528 = vsub.f32 %v1171, %v1494
  %v1529 = vsub.f32 %v1172, %v1494
  %v1530 = vsub.f32 %v1173, %v1494
  %v1531 = vsub.f32 %v1174, %v1494
  %v1532 = vsub.f32 %v1175, %v1494
  %v1533 = vsub.f32 %v1176, %v1494
  %v1534 = vsub.f32 %v1177, %v1494
  %v1535 = vsub.f32 %v1178, %v1494
  %v1536 = vsub.f32 %v1179, %v1494
  %v1537 = vsub.f32 %v1180, %v1494
  %v1538 = vsub.f32 %v1181, %v1494
  %v1539 = vsub.f32 %v1182, %v1494
  %v1540 = vsub.f32 %v1183, %v1494
  %v1541 = vsub.f32 %v1184, %v1494
  %v1542 = vsub.f32 %v1185, %v1494
  %v1543 = vsub.f32 %v1186, %v1494
  %v1544 = vsub.f32 %v1187, %v1494
  %v1545 = vsub.f32 %v1188, %v1494
  %v1546 = vsub.f32 %v1189, %v1494
  %v1547 = vsub.f32 %v1190, %v1494
  %v1548 = vsub.f32 %v1191, %v1494
  %v1549 = vsub.f32 %v1192, %v1494
  %v1550 = vsub.f32 %v1193, %v1494
  %v1551 = vsub.f32 %v1194, %v1494
  %v1552 = vsub.f32 %v1195, %v1494
  %v1553 = vsub.f32 %v1196, %v1494
  %v1554 = vsub.f32 %v1197, %v1494
  %v1555 = vsub.f32 %v1198, %v1494
  %v1556 = vadd.f32 %v1498, 1e-05
  %v1557 = vrsqrt.pop %v1556
  %v1558 = vmul.f32 %v1499, %v1557
  %v1559 = vmul.f32 %v1500, %v1557
  %v1560 = vmul.f32 %v1501, %v1557
  %v1561 = vmul.f32 %v1502, %v1557
  %v1562 = vmul.f32 %v1503, %v1557
  %v1563 = vmul.f32 %v1504, %v1557
  %v1564 = vmul.f32 %v1505, %v1557
  %v1565 = vmul.f32 %v1506, %v1557
  %v1566 = vmul.f32 %v1507, %v1557
  %v1567 = vmul.f32 %v1508, %v1557
  %v1568 = vmul.f32 %v1509, %v1557
  %v1569 = vmul.f32 %v1510, %v1557
  %v1570 = vmul.f32 %v1511, %v1557
  %v1571 = vmul.f32 %v1512, %v1557
  %v1572 = vmul.f32 %v1513, %v1557
  %v1573 = vmul.f32 %v1514, %v1557
  %v1574 = vmul.f32 %v1515, %v1557
  %v1575 = vmul.f32 %v1516, %v1557
  %v1576 = vmul.f32 %v1517, %v1557
  %v1577 = vmul.f32 %v1518, %v1557
  %v1578 = vmul.f32 %v1519, %v1557
  %v1579 = vmul.f32 %v1520, %v1557
  %v1580 = vmul.f32 %v1521, %v1557
  %v1581 = vmul.f32 %v1522, %v1557
  %v1582 = vmul.f32 %v1523, %v1557
  %v1583 = vmul.f32 %v1524, %v1557
  %v1584 = vmul.f32 %v1525, %v1557
  %v1585 = vmul.f32 %v1526, %v1557
  %v1586 = vmul.f32 %v1527, %v1557
  %v1587 = vmul.f32 %v1528, %v1557
  %v1588 = vmul.f32 %v1529, %v1557
  %v1589 = vmul.f32 %v1530, %v1557
  %v1590 = vmul.f32 %v1531, %v1557
  %v1591 = vmul.f32 %v1532, %v1557
  %v1592 = vmul.f32 %v1533, %v1557
  %v1593 = vmul.f32 %v1534, %v1557
  %v1594 = vmul.f32 %v1535, %v1557
  %v1595 = vmul.f32 %v1536, %v1557
  %v1596 = vmul.f32 %v1537, %v1557
  %v1597 = vmul.f32 %v1538, %v1557
  %v1598 = vmul.f32 %v1539, %v1557
  %v1599 = vmul.f32 %v1540, %v1557
  %v1600 = vmul.f32 %v1541, %v1557
  %v1601 = vmul.f32 %v1542, %v1557
  %v1602 = vmul.f32 %v1543, %v1557
  %v1603 = vmul.f32 %v1544, %v1557
  %v1604 = vmul.f32 %v1545, %v1557
  %v1605 = vmul.f32 %v1546, %v1557
  %v1606 = vmul.f32 %v1547, %v1557
  %v1607 = vmul.f32 %v1548, %v1557
  %v1608 = vmul.f32 %v1549, %v1557
  %v1609 = vmul.f32 %v1550, %v1557
  %v1610 = vmul.f32 %v1551, %v1557
  %v1611 = vmul.f32 %v1552, %v1557
  %v1612 = vmul.f32 %v1553, %v1557
  %v1613 = vmul.f32 %v1554, %v1557
  %v1614 = vmul.f32 %v1555, %v1557
  %1615 = vst.msk [vmem:[%s3] sm:$0xff] %vm146, %v1558
  %1616 = vst.msk [vmem:[%s3 + $0x8] sm:$0xff] %vm146, %v1559
  %1617 = vst.msk [vmem:[%s3 + $0x10] sm:$0xff] %vm146, %v1560
  %1618 = vst.msk [vmem:[%s3 + $0x18] sm:$0xff] %vm146, %v1561
  %1619 = vst.msk [vmem:[%s3 + $0x20] sm:$0xff] %vm146, %v1562
  %1620 = vst.msk [vmem:[%s3 + $0x28] sm:$0xff] %vm146, %v1563
  %1621 = vst.msk [vmem:[%s3 + $0x30] sm:$0xff] %vm146, %v1564
  %1622 = vst.msk [vmem:[%s3 + $0x38] sm:$0xff] %vm146, %v1565
  %1623 = vst.msk [vmem:[%s3 + $0x40] sm:$0xff] %vm146, %v1566
  %1624 = vst.msk [vmem:[%s3 + $0x48] sm:$0xff] %vm146, %v1567
  %1625 = vst.msk [vmem:[%s3 + $0x50] sm:$0xff] %vm146, %v1568
  %1626 = vst.msk [vmem:[%s3 + $0x58] sm:$0xff] %vm146, %v1569
  %1627 = vst.msk [vmem:[%s3 + $0x60] sm:$0xff] %vm146, %v1570
  %1628 = vst.msk [vmem:[%s3 + $0x68] sm:$0xff] %vm146, %v1571
  %1629 = vst.msk [vmem:[%s3 + $0x70] sm:$0xff] %vm146, %v1572
  %1630 = vst.msk [vmem:[%s3 + $0x78] sm:$0xff] %vm146, %v1573
  %1631 = vst.msk [vmem:[%s3 + $0x80] sm:$0xff] %vm146, %v1574
  %1632 = vst.msk [vmem:[%s3 + $0x88] sm:$0xff] %vm146, %v1575
  %1633 = vst.msk [vmem:[%s3 + $0x90] sm:$0xff] %vm146, %v1576
  %1634 = vst.msk [vmem:[%s3 + $0x98] sm:$0xff] %vm146, %v1577
  %1635 = vst.msk [vmem:[%s3 + $0xa0] sm:$0xff] %vm146, %v1578
  %1636 = vst.msk [vmem:[%s3 + $0xa8] sm:$0xff] %vm146, %v1579
  %1637 = vst.msk [vmem:[%s3 + $0xb0] sm:$0xff] %vm146, %v1580
  %1638 = vst.msk [vmem:[%s3 + $0xb8] sm:$0xff] %vm146, %v1581
  %1639 = vst.msk [vmem:[%s3 + $0xc0] sm:$0xff] %vm146, %v1582
  %1640 = vst.msk [vmem:[%s3 + $0xc8] sm:$0xff] %vm146, %v1583
  %1641 = vst.msk [vmem:[%s3 + $0xd0] sm:$0xff] %vm146, %v1584
  %1642 = vst.msk [vmem:[%s3 + $0xd8] sm:$0xff] %vm146, %v1585
  %1643 = vst.msk [vmem:[%s3 + $0xe0] sm:$0xff] %vm146, %v1586
  %1644 = vst.msk [vmem:[%s3 + $0xe8] sm:$0xff] %vm146, %v1587
  %1645 = vst.msk [vmem:[%s3 + $0xf0] sm:$0xff] %vm146, %v1588
  %1646 = vst.msk [vmem:[%s3 + $0xf8] sm:$0xff] %vm146, %v1589
  %1647 = vst.msk [vmem:[%s3 + $0x100] sm:$0xff] %vm146, %v1590
  %1648 = vst.msk [vmem:[%s3 + $0x108] sm:$0xff] %vm146, %v1591
  %1649 = vst.msk [vmem:[%s3 + $0x110] sm:$0xff] %vm146, %v1592
  %1650 = vst.msk [vmem:[%s3 + $0x118] sm:$0xff] %vm146, %v1593
  %1651 = vst.msk [vmem:[%s3 + $0x120] sm:$0xff] %vm146, %v1594
  %1652 = vst.msk [vmem:[%s3 + $0x128] sm:$0xff] %vm146, %v1595
  %1653 = vst.msk [vmem:[%s3 + $0x130] sm:$0xff] %vm146, %v1596
  %1654 = vst.msk [vmem:[%s3 + $0x138] sm:$0xff] %vm146, %v1597
  %1655 = vst.msk [vmem:[%s3 + $0x140] sm:$0xff] %vm146, %v1598
  %1656 = vst.msk [vmem:[%s3 + $0x148] sm:$0xff] %vm146, %v1599
  %1657 = vst.msk [vmem:[%s3 + $0x150] sm:$0xff] %vm146, %v1600
  %1658 = vst.msk [vmem:[%s3 + $0x158] sm:$0xff] %vm146, %v1601
  %1659 = vst.msk [vmem:[%s3 + $0x160] sm:$0xff] %vm146, %v1602
  %1660 = vst.msk [vmem:[%s3 + $0x168] sm:$0xff] %vm146, %v1603
  %1661 = vst.msk [vmem:[%s3 + $0x170] sm:$0xff] %vm146, %v1604
  %1662 = vst.msk [vmem:[%s3 + $0x178] sm:$0xff] %vm146, %v1605
  %1663 = vst.msk [vmem:[%s3 + $0x180] sm:$0xff] %vm146, %v1606
  %1664 = vst.msk [vmem:[%s3 + $0x188] sm:$0xff] %vm146, %v1607
  %1665 = vst.msk [vmem:[%s3 + $0x190] sm:$0xff] %vm146, %v1608
  %1666 = vst.msk [vmem:[%s3 + $0x198] sm:$0xff] %vm146, %v1609
  %1667 = vst.msk [vmem:[%s3 + $0x1a0] sm:$0xff] %vm146, %v1610
  %1668 = vst.msk [vmem:[%s3 + $0x1a8] sm:$0xff] %vm146, %v1611
  %1669 = vst.msk [vmem:[%s3 + $0x1b0] sm:$0xff] %vm146, %v1612
  %1670 = vst.msk [vmem:[%s3 + $0x1b8] sm:$0xff] %vm146, %v1613
  %1671 = vst.msk [vmem:[%s3 + $0x1c0] sm:$0x3] %vm836, %v1614
  // Predicated region
  $region14: #{forward.7} parent=0 // pred_check
    _
  $region15: #{forward.7} parent=0 // pred_check_branch
    %1673 = sbr.rel (0) target = $region17
  $region16: #{forward.7} parent=0 // pred_region
    _
  $region17: #{forward.7} parent=0 // pred_fallthru
    _
  // Predicated region
  $region18: #{forward.7} parent=0 // pred_check
    _
  $region19: #{forward.7} parent=0 // pred_check_branch
    %1675 = sbr.rel (0) target = $region21
  $region20: #{forward.7} parent=0 // pred_region
    _
  $region21: #{forward.7} parent=0 // pred_fallthru
    _

// kernel: forward.8
$region0: #{forward.8}
  #allocation0 [shape = 'u32[]', space=smem, size = 0x4, offset = 0x4, fixed_abs, tag = 'smem constant byte address 0x4 - core index']
  #allocation1 [shape = 'u32[144,128]{1,0:T(1,128)}', space=vmem, size = 0x12000, scoped, tag = 'internal scratch']
  %s0 = inlined_call_operand.vmem [shape: f32[450,144], index: 0, kind: input, shape index: {}]
  %s1 = inlined_call_operand.vmem [shape: f32[144,16], index: 1, kind: input, shape index: {}]
  %s2 = inlined_call_operand.vmem [shape: f32[450,16], index: 2, kind: input, shape index: {}]
  %s3 = inlined_call_operand.vmem [shape: f32[450,16], index: 3, kind: output, shape index: {}]
  %s4 = sld [smem:[#allocation0]]
  $region22: #{forward.8} parent=0
    _
  %s6 = ssub.s32 1, %s4
  %s7 = scalar_select 0, %s6, %s4
  // Predicated region
  $region2: #{forward.8} parent=0 // pred_check
    _
  $region3: #{forward.8} parent=0 // pred_check_branch
    %9 = sbr.rel (0) target = $region5
  $region4: #{forward.8} parent=0 // pred_region
    _
  $region5: #{forward.8} parent=0 // pred_fallthru
    _
  // Predicated region
  $region6: #{forward.8} parent=0 // pred_check
    _
  $region7: #{forward.8} parent=0 // pred_check_branch
    %11 = sbr.rel (0) target = $region9
  $region8: #{forward.8} parent=0 // pred_region
    _
  $region9: #{forward.8} parent=0 // pred_fallthru
    _
  // Predicated region
  $region10: #{forward.8} parent=0 // pred_check
    _
  $region11: #{forward.8} parent=0 // pred_check_branch
    %13 = sbr.rel (0) target = $region13
  $region12: #{forward.8} parent=0 // pred_region
    _
  $region13: #{forward.8} parent=0 // pred_fallthru
    _
  %v14 = vld [vmem:[%s0] sm:$0xff]
  %v15 = vld [vmem:[%s0 + $0x8] sm:$0xff]
  %v16 = vld [vmem:[%s0 + $0x10] sm:$0xff]
  %v17 = vld [vmem:[%s0 + $0x18] sm:$0xff]
  %v18 = vld [vmem:[%s0 + $0x20] sm:$0xff]
  %v19 = vld [vmem:[%s0 + $0x28] sm:$0xff]
  %v20 = vld [vmem:[%s0 + $0x30] sm:$0xff]
  %v21 = vld [vmem:[%s0 + $0x38] sm:$0xff]
  %v22 = vld [vmem:[%s0 + $0x40] sm:$0xff]
  %v23 = vld [vmem:[%s0 + $0x48] sm:$0xff]
  %v24 = vld [vmem:[%s0 + $0x50] sm:$0xff]
  %v25 = vld [vmem:[%s0 + $0x58] sm:$0xff]
  %v26 = vld [vmem:[%s0 + $0x60] sm:$0xff]
  %v27 = vld [vmem:[%s0 + $0x68] sm:$0xff]
  %v28 = vld [vmem:[%s0 + $0x70] sm:$0xff]
  %v29 = vld [vmem:[%s0 + $0x78] sm:$0xff]
  %v30 = vld [vmem:[%s0 + $0x80] sm:$0xff]
  %v31 = vld [vmem:[%s0 + $0x88] sm:$0xff]
  %v32 = vld [vmem:[%s0 + $0x90] sm:$0xff]
  %v33 = vld [vmem:[%s0 + $0x98] sm:$0xff]
  %v34 = vld [vmem:[%s0 + $0xa0] sm:$0xff]
  %v35 = vld [vmem:[%s0 + $0xa8] sm:$0xff]
  %v36 = vld [vmem:[%s0 + $0xb0] sm:$0xff]
  %v37 = vld [vmem:[%s0 + $0xb8] sm:$0xff]
  %v38 = vld [vmem:[%s0 + $0xc0] sm:$0xff]
  %v39 = vld [vmem:[%s0 + $0xc8] sm:$0xff]
  %v40 = vld [vmem:[%s0 + $0xd0] sm:$0xff]
  %v41 = vld [vmem:[%s0 + $0xd8] sm:$0xff]
  %v42 = vld [vmem:[%s0 + $0xe0] sm:$0xff]
  %v43 = vld [vmem:[%s0 + $0xe8] sm:$0xff]
  %v44 = vld [vmem:[%s0 + $0xf0] sm:$0xff]
  %v45 = vld [vmem:[%s0 + $0xf8] sm:$0xff]
  %v46 = vld [vmem:[%s0 + $0x100] sm:$0xff]
  %v47 = vld [vmem:[%s0 + $0x108] sm:$0xff]
  %v48 = vld [vmem:[%s0 + $0x110] sm:$0xff]
  %v49 = vld [vmem:[%s0 + $0x118] sm:$0xff]
  %v50 = vld [vmem:[%s0 + $0x120] sm:$0xff]
  %v51 = vld [vmem:[%s0 + $0x128] sm:$0xff]
  %v52 = vld [vmem:[%s0 + $0x130] sm:$0xff]
  %v53 = vld [vmem:[%s0 + $0x138] sm:$0xff]
  %v54 = vld [vmem:[%s0 + $0x140] sm:$0xff]
  %v55 = vld [vmem:[%s0 + $0x148] sm:$0xff]
  %v56 = vld [vmem:[%s0 + $0x150] sm:$0xff]
  %v57 = vld [vmem:[%s0 + $0x158] sm:$0xff]
  %v58 = vld [vmem:[%s0 + $0x160] sm:$0xff]
  %v59 = vld [vmem:[%s0 + $0x168] sm:$0xff]
  %v60 = vld [vmem:[%s0 + $0x170] sm:$0xff]
  %v61 = vld [vmem:[%s0 + $0x178] sm:$0xff]
  %v62 = vld [vmem:[%s0 + $0x180] sm:$0xff]
  %v63 = vld [vmem:[%s0 + $0x188] sm:$0xff]
  %v64 = vld [vmem:[%s0 + $0x190] sm:$0xff]
  %v65 = vld [vmem:[%s0 + $0x198] sm:$0xff]
  %v66 = vld [vmem:[%s0 + $0x1a0] sm:$0xff]
  %v67 = vld [vmem:[%s0 + $0x1a8] sm:$0xff]
  %v68 = vld [vmem:[%s0 + $0x1b0] sm:$0xff]
  %v69 = vld [vmem:[%s0 + $0x1b8] sm:$0xff]
  %v70 = vld [vmem:[%s0 + $0x1c0] sm:$0xff]
  %v71 = vld [vmem:[%s0 + $0x1c8] sm:$0xff]
  %v72 = vld [vmem:[%s0 + $0x1d0] sm:$0xff]
  %v73 = vld [vmem:[%s0 + $0x1d8] sm:$0xff]
  %v74 = vld [vmem:[%s0 + $0x1e0] sm:$0xff]
  %v75 = vld [vmem:[%s0 + $0x1e8] sm:$0xff]
  %v76 = vld [vmem:[%s0 + $0x1f0] sm:$0xff]
  %v77 = vld [vmem:[%s0 + $0x1f8] sm:$0xff]
  %v78 = vld [vmem:[%s0 + $0x200] sm:$0xff]
  %v79 = vld [vmem:[%s0 + $0x208] sm:$0xff]
  %v80 = vld [vmem:[%s0 + $0x210] sm:$0xff]
  %v81 = vld [vmem:[%s0 + $0x218] sm:$0xff]
  %v82 = vld [vmem:[%s0 + $0x220] sm:$0xff]
  %v83 = vld [vmem:[%s0 + $0x228] sm:$0xff]
  %v84 = vld [vmem:[%s0 + $0x230] sm:$0xff]
  %v85 = vld [vmem:[%s0 + $0x238] sm:$0xff]
  %v86 = vld [vmem:[%s0 + $0x240] sm:$0xff]
  %v87 = vld [vmem:[%s0 + $0x248] sm:$0xff]
  %v88 = vld [vmem:[%s0 + $0x250] sm:$0xff]
  %v89 = vld [vmem:[%s0 + $0x258] sm:$0xff]
  %v90 = vld [vmem:[%s0 + $0x260] sm:$0xff]
  %v91 = vld [vmem:[%s0 + $0x268] sm:$0xff]
  %v92 = vld [vmem:[%s0 + $0x270] sm:$0xff]
  %v93 = vld [vmem:[%s0 + $0x278] sm:$0xff]
  %v94 = vld [vmem:[%s0 + $0x280] sm:$0xff]
  %v95 = vld [vmem:[%s0 + $0x288] sm:$0xff]
  %v96 = vld [vmem:[%s0 + $0x290] sm:$0xff]
  %v97 = vld [vmem:[%s0 + $0x298] sm:$0xff]
  %v98 = vld [vmem:[%s0 + $0x2a0] sm:$0xff]
  %v99 = vld [vmem:[%s0 + $0x2a8] sm:$0xff]
  %v100 = vld [vmem:[%s0 + $0x2b0] sm:$0xff]
  %v101 = vld [vmem:[%s0 + $0x2b8] sm:$0xff]
  %v102 = vld [vmem:[%s0 + $0x2c0] sm:$0xff]
  %v103 = vld [vmem:[%s0 + $0x2c8] sm:$0xff]
  %v104 = vld [vmem:[%s0 + $0x2d0] sm:$0xff]
  %v105 = vld [vmem:[%s0 + $0x2d8] sm:$0xff]
  %v106 = vld [vmem:[%s0 + $0x2e0] sm:$0xff]
  %v107 = vld [vmem:[%s0 + $0x2e8] sm:$0xff]
  %v108 = vld [vmem:[%s0 + $0x2f0] sm:$0xff]
  %v109 = vld [vmem:[%s0 + $0x2f8] sm:$0xff]
  %v110 = vld [vmem:[%s0 + $0x300] sm:$0xff]
  %v111 = vld [vmem:[%s0 + $0x308] sm:$0xff]
  %v112 = vld [vmem:[%s0 + $0x310] sm:$0xff]
  %v113 = vld [vmem:[%s0 + $0x318] sm:$0xff]
  %v114 = vld [vmem:[%s0 + $0x320] sm:$0xff]
  %v115 = vld [vmem:[%s0 + $0x328] sm:$0xff]
  %v116 = vld [vmem:[%s0 + $0x330] sm:$0xff]
  %v117 = vld [vmem:[%s0 + $0x338] sm:$0xff]
  %v118 = vld [vmem:[%s0 + $0x340] sm:$0xff]
  %v119 = vld [vmem:[%s0 + $0x348] sm:$0xff]
  %v120 = vld [vmem:[%s0 + $0x350] sm:$0xff]
  %v121 = vld [vmem:[%s0 + $0x358] sm:$0xff]
  %v122 = vld [vmem:[%s0 + $0x360] sm:$0xff]
  %v123 = vld [vmem:[%s0 + $0x368] sm:$0xff]
  %v124 = vld [vmem:[%s0 + $0x370] sm:$0xff]
  %v125 = vld [vmem:[%s0 + $0x378] sm:$0xff]
  %v126 = vld [vmem:[%s0 + $0x380] sm:$0x3]
  %v127 = vld [vmem:[%s0 + $0x388] sm:$0x3]
  %v128 = vld [vmem:[%s1] sm:$0xff]
  %v129 = vld [vmem:[%s1 + $0x8] sm:$0xff]
  %v130 = vld [vmem:[%s1 + $0x10] sm:$0xff]
  %v131 = vld [vmem:[%s1 + $0x18] sm:$0xff]
  %v132 = vld [vmem:[%s1 + $0x20] sm:$0xff]
  %v133 = vld [vmem:[%s1 + $0x28] sm:$0xff]
  %v134 = vld [vmem:[%s1 + $0x30] sm:$0xff]
  %v135 = vld [vmem:[%s1 + $0x38] sm:$0xff]
  %v136 = vld [vmem:[%s1 + $0x40] sm:$0xff]
  %v137 = vld [vmem:[%s1 + $0x48] sm:$0xff]
  %v138 = vld [vmem:[%s1 + $0x50] sm:$0xff]
  %v139 = vld [vmem:[%s1 + $0x58] sm:$0xff]
  %v140 = vld [vmem:[%s1 + $0x60] sm:$0xff]
  %v141 = vld [vmem:[%s1 + $0x68] sm:$0xff]
  %v142 = vld [vmem:[%s1 + $0x70] sm:$0xff]
  %v143 = vld [vmem:[%s1 + $0x78] sm:$0xff]
  %v144 = vld [vmem:[%s1 + $0x80] sm:$0xff]
  %v145 = vld [vmem:[%s1 + $0x88] sm:$0xff]
  %vm146 = vcmask 130048
  %v148 = vsel %vm146, %v15, 0
  %v151 = vsel %vm146, %v17, 0
  %v154 = vsel %vm146, %v19, 0
  %v157 = vsel %vm146, %v21, 0
  %v160 = vsel %vm146, %v23, 0
  %v163 = vsel %vm146, %v25, 0
  %v166 = vsel %vm146, %v27, 0
  %v169 = vsel %vm146, %v29, 0
  %v172 = vsel %vm146, %v31, 0
  %v175 = vsel %vm146, %v33, 0
  %v178 = vsel %vm146, %v35, 0
  %v181 = vsel %vm146, %v37, 0
  %v184 = vsel %vm146, %v39, 0
  %v187 = vsel %vm146, %v41, 0
  %v190 = vsel %vm146, %v43, 0
  %v193 = vsel %vm146, %v45, 0
  %v196 = vsel %vm146, %v47, 0
  %v199 = vsel %vm146, %v49, 0
  %v202 = vsel %vm146, %v51, 0
  %v205 = vsel %vm146, %v53, 0
  %v208 = vsel %vm146, %v55, 0
  %v211 = vsel %vm146, %v57, 0
  %v214 = vsel %vm146, %v59, 0
  %v217 = vsel %vm146, %v61, 0
  %v220 = vsel %vm146, %v63, 0
  %v223 = vsel %vm146, %v65, 0
  %v226 = vsel %vm146, %v67, 0
  %v229 = vsel %vm146, %v69, 0
  %v232 = vsel %vm146, %v71, 0
  %v235 = vsel %vm146, %v73, 0
  %v238 = vsel %vm146, %v75, 0
  %v241 = vsel %vm146, %v77, 0
  %v244 = vsel %vm146, %v79, 0
  %v247 = vsel %vm146, %v81, 0
  %v250 = vsel %vm146, %v83, 0
  %v253 = vsel %vm146, %v85, 0
  %v256 = vsel %vm146, %v87, 0
  %v259 = vsel %vm146, %v89, 0
  %v262 = vsel %vm146, %v91, 0
  %v265 = vsel %vm146, %v93, 0
  %v268 = vsel %vm146, %v95, 0
  %v271 = vsel %vm146, %v97, 0
  %v274 = vsel %vm146, %v99, 0
  %v277 = vsel %vm146, %v101, 0
  %v280 = vsel %vm146, %v103, 0
  %v283 = vsel %vm146, %v105, 0
  %v286 = vsel %vm146, %v107, 0
  %v289 = vsel %vm146, %v109, 0
  %v292 = vsel %vm146, %v111, 0
  %v295 = vsel %vm146, %v113, 0
  %v298 = vsel %vm146, %v115, 0
  %v301 = vsel %vm146, %v117, 0
  %v304 = vsel %vm146, %v119, 0
  %v307 = vsel %vm146, %v121, 0
  %v310 = vsel %vm146, %v123, 0
  %v313 = vsel %vm146, %v125, 0
  %v316 = vsel %vm146, %v127, 0
  %318 = vmatprep.subr.mxu0 0.0
  %319 = vmatpush1.msra.mxu0 %v143
  %320 = vmatprep.subr.mxu0 0.0
  %321 = vmatpush1.msra.mxu0 %v142
  %322 = vmatprep.subr.mxu0 0.0
  %323 = vmatpush1.msra.mxu0 %v141
  %324 = vmatprep.subr.mxu0 0.0
  %325 = vmatpush1.msra.mxu0 %v140
  %326 = vmatprep.subr.mxu0 0.0
  %327 = vmatpush1.msra.mxu0 %v139
  %328 = vmatprep.subr.mxu0 0.0
  %329 = vmatpush1.msra.mxu0 %v138
  %330 = vmatprep.subr.mxu0 0.0
  %331 = vmatpush1.msra.mxu0 %v137
  %332 = vmatprep.subr.mxu0 0.0
  %333 = vmatpush1.msra.mxu0 %v136
  %334 = vmatprep.subr.mxu0 0.0
  %335 = vmatpush1.msra.mxu0 %v135
  %336 = vmatprep.subr.mxu0 0.0
  %337 = vmatpush1.msra.mxu0 %v134
  %338 = vmatprep.subr.mxu0 0.0
  %339 = vmatpush1.msra.mxu0 %v133
  %340 = vmatprep.subr.mxu0 0.0
  %341 = vmatpush1.msra.mxu0 %v132
  %342 = vmatprep.subr.mxu0 0.0
  %343 = vmatpush1.msra.mxu0 %v131
  %344 = vmatprep.subr.mxu0 0.0
  %345 = vmatpush1.msra.mxu0 %v130
  %346 = vmatprep.subr.mxu0 0.0
  %347 = vmatpush1.msra.mxu0 %v129
  %348 = vmatprep.subr.mxu0 0.0
  %349 = vmatpush1.msra.mxu0 %v128
  %350 = vmatprep.subr.mxu0 0.0
  %351 = vmatpush2.msra.mxu0 0.0
  %352 = vmatprep.subr.mxu0 0.0
  %353 = vmatpush2.msra.mxu0 0.0
  %354 = vmatprep.subr.mxu0 0.0
  %355 = vmatpush2.msra.mxu0 0.0
  %356 = vmatprep.subr.mxu0 0.0
  %357 = vmatpush2.msra.mxu0 0.0
  %358 = vmatprep.subr.mxu0 0.0
  %359 = vmatpush2.msra.mxu0 0.0
  %360 = vmatprep.subr.mxu0 0.0
  %361 = vmatpush2.msra.mxu0 0.0
  %362 = vmatprep.subr.mxu0 0.0
  %363 = vmatpush2.msra.mxu0 0.0
  %364 = vmatprep.subr.mxu0 0.0
  %365 = vmatpush2.msra.mxu0 0.0
  %366 = vmatprep.subr.mxu0 0.0
  %367 = vmatpush2.msra.mxu0 0.0
  %368 = vmatprep.subr.mxu0 0.0
  %369 = vmatpush2.msra.mxu0 0.0
  %370 = vmatprep.subr.mxu0 0.0
  %371 = vmatpush2.msra.mxu0 0.0
  %372 = vmatprep.subr.mxu0 0.0
  %373 = vmatpush2.msra.mxu0 0.0
  %374 = vmatprep.subr.mxu0 0.0
  %375 = vmatpush2.msra.mxu0 0.0
  %376 = vmatprep.subr.mxu0 0.0
  %377 = vmatpush2.msra.mxu0 0.0
  %378 = vmatprep.subr.mxu0 0.0
  %379 = vmatpush2.msra.mxu0 %v145
  %380 = vmatprep.subr.mxu0 0.0
  %381 = vmatpush2.msra.mxu0 %v144
  %382 = vmatprep.mubr.f32.mxu0 %v148
  %383 = vmatmul.mubr.f32.gmra.mxu0 %v14
  %v384 = vpop.f32.mrf.mxu0
  %v385 = vadd.f32 0.0, %v384
  %v386 = vpop.f32.mrf.mxu0
  %387 = vmatprep.mubr.f32.mxu0 %v151
  %388 = vmatmul.mubr.f32.gmra.mxu0 %v16
  %v389 = vpop.f32.mrf.mxu0
  %v390 = vadd.f32 0.0, %v389
  %v391 = vpop.f32.mrf.mxu0
  %392 = vmatprep.mubr.f32.mxu0 %v154
  %393 = vmatmul.mubr.f32.gmra.mxu0 %v18
  %v394 = vpop.f32.mrf.mxu0
  %v395 = vadd.f32 0.0, %v394
  %v396 = vpop.f32.mrf.mxu0
  %397 = vmatprep.mubr.f32.mxu0 %v157
  %398 = vmatmul.mubr.f32.gmra.mxu0 %v20
  %v399 = vpop.f32.mrf.mxu0
  %v400 = vadd.f32 0.0, %v399
  %v401 = vpop.f32.mrf.mxu0
  %402 = vmatprep.mubr.f32.mxu0 %v160
  %403 = vmatmul.mubr.f32.gmra.mxu0 %v22
  %v404 = vpop.f32.mrf.mxu0
  %v405 = vadd.f32 0.0, %v404
  %v406 = vpop.f32.mrf.mxu0
  %407 = vmatprep.mubr.f32.mxu0 %v163
  %408 = vmatmul.mubr.f32.gmra.mxu0 %v24
  %v409 = vpop.f32.mrf.mxu0
  %v410 = vadd.f32 0.0, %v409
  %v411 = vpop.f32.mrf.mxu0
  %412 = vmatprep.mubr.f32.mxu0 %v166
  %413 = vmatmul.mubr.f32.gmra.mxu0 %v26
  %v414 = vpop.f32.mrf.mxu0
  %v415 = vadd.f32 0.0, %v414
  %v416 = vpop.f32.mrf.mxu0
  %417 = vmatprep.mubr.f32.mxu0 %v169
  %418 = vmatmul.mubr.f32.gmra.mxu0 %v28
  %v419 = vpop.f32.mrf.mxu0
  %v420 = vadd.f32 0.0, %v419
  %v421 = vpop.f32.mrf.mxu0
  %422 = vmatprep.mubr.f32.mxu0 %v172
  %423 = vmatmul.mubr.f32.gmra.mxu0 %v30
  %v424 = vpop.f32.mrf.mxu0
  %v425 = vadd.f32 0.0, %v424
  %v426 = vpop.f32.mrf.mxu0
  %427 = vmatprep.mubr.f32.mxu0 %v175
  %428 = vmatmul.mubr.f32.gmra.mxu0 %v32
  %v429 = vpop.f32.mrf.mxu0
  %v430 = vadd.f32 0.0, %v429
  %v431 = vpop.f32.mrf.mxu0
  %432 = vmatprep.mubr.f32.mxu0 %v178
  %433 = vmatmul.mubr.f32.gmra.mxu0 %v34
  %v434 = vpop.f32.mrf.mxu0
  %v435 = vadd.f32 0.0, %v434
  %v436 = vpop.f32.mrf.mxu0
  %437 = vmatprep.mubr.f32.mxu0 %v181
  %438 = vmatmul.mubr.f32.gmra.mxu0 %v36
  %v439 = vpop.f32.mrf.mxu0
  %v440 = vadd.f32 0.0, %v439
  %v441 = vpop.f32.mrf.mxu0
  %442 = vmatprep.mubr.f32.mxu0 %v184
  %443 = vmatmul.mubr.f32.gmra.mxu0 %v38
  %v444 = vpop.f32.mrf.mxu0
  %v445 = vadd.f32 0.0, %v444
  %v446 = vpop.f32.mrf.mxu0
  %447 = vmatprep.mubr.f32.mxu0 %v187
  %448 = vmatmul.mubr.f32.gmra.mxu0 %v40
  %v449 = vpop.f32.mrf.mxu0
  %v450 = vadd.f32 0.0, %v449
  %v451 = vpop.f32.mrf.mxu0
  %452 = vmatprep.mubr.f32.mxu0 %v190
  %453 = vmatmul.mubr.f32.gmra.mxu0 %v42
  %v454 = vpop.f32.mrf.mxu0
  %v455 = vadd.f32 0.0, %v454
  %v456 = vpop.f32.mrf.mxu0
  %457 = vmatprep.mubr.f32.mxu0 %v193
  %458 = vmatmul.mubr.f32.gmra.mxu0 %v44
  %v459 = vpop.f32.mrf.mxu0
  %v460 = vadd.f32 0.0, %v459
  %v461 = vpop.f32.mrf.mxu0
  %462 = vmatprep.mubr.f32.mxu0 %v196
  %463 = vmatmul.mubr.f32.gmra.mxu0 %v46
  %v464 = vpop.f32.mrf.mxu0
  %v465 = vadd.f32 0.0, %v464
  %v466 = vpop.f32.mrf.mxu0
  %467 = vmatprep.mubr.f32.mxu0 %v199
  %468 = vmatmul.mubr.f32.gmra.mxu0 %v48
  %v469 = vpop.f32.mrf.mxu0
  %v470 = vadd.f32 0.0, %v469
  %v471 = vpop.f32.mrf.mxu0
  %472 = vmatprep.mubr.f32.mxu0 %v202
  %473 = vmatmul.mubr.f32.gmra.mxu0 %v50
  %v474 = vpop.f32.mrf.mxu0
  %v475 = vadd.f32 0.0, %v474
  %v476 = vpop.f32.mrf.mxu0
  %477 = vmatprep.mubr.f32.mxu0 %v205
  %478 = vmatmul.mubr.f32.gmra.mxu0 %v52
  %v479 = vpop.f32.mrf.mxu0
  %v480 = vadd.f32 0.0, %v479
  %v481 = vpop.f32.mrf.mxu0
  %482 = vmatprep.mubr.f32.mxu0 %v208
  %483 = vmatmul.mubr.f32.gmra.mxu0 %v54
  %v484 = vpop.f32.mrf.mxu0
  %v485 = vadd.f32 0.0, %v484
  %v486 = vpop.f32.mrf.mxu0
  %487 = vmatprep.mubr.f32.mxu0 %v211
  %488 = vmatmul.mubr.f32.gmra.mxu0 %v56
  %v489 = vpop.f32.mrf.mxu0
  %v490 = vadd.f32 0.0, %v489
  %v491 = vpop.f32.mrf.mxu0
  %492 = vmatprep.mubr.f32.mxu0 %v214
  %493 = vmatmul.mubr.f32.gmra.mxu0 %v58
  %v494 = vpop.f32.mrf.mxu0
  %v495 = vadd.f32 0.0, %v494
  %v496 = vpop.f32.mrf.mxu0
  %497 = vmatprep.mubr.f32.mxu0 %v217
  %498 = vmatmul.mubr.f32.gmra.mxu0 %v60
  %v499 = vpop.f32.mrf.mxu0
  %v500 = vadd.f32 0.0, %v499
  %v501 = vpop.f32.mrf.mxu0
  %502 = vmatprep.mubr.f32.mxu0 %v220
  %503 = vmatmul.mubr.f32.gmra.mxu0 %v62
  %v504 = vpop.f32.mrf.mxu0
  %v505 = vadd.f32 0.0, %v504
  %v506 = vpop.f32.mrf.mxu0
  %507 = vmatprep.mubr.f32.mxu0 %v223
  %508 = vmatmul.mubr.f32.gmra.mxu0 %v64
  %v509 = vpop.f32.mrf.mxu0
  %v510 = vadd.f32 0.0, %v509
  %v511 = vpop.f32.mrf.mxu0
  %512 = vmatprep.mubr.f32.mxu0 %v226
  %513 = vmatmul.mubr.f32.gmra.mxu0 %v66
  %v514 = vpop.f32.mrf.mxu0
  %v515 = vadd.f32 0.0, %v514
  %v516 = vpop.f32.mrf.mxu0
  %517 = vmatprep.mubr.f32.mxu0 %v229
  %518 = vmatmul.mubr.f32.gmra.mxu0 %v68
  %v519 = vpop.f32.mrf.mxu0
  %v520 = vadd.f32 0.0, %v519
  %v521 = vpop.f32.mrf.mxu0
  %522 = vmatprep.mubr.f32.mxu0 %v232
  %523 = vmatmul.mubr.f32.gmra.mxu0 %v70
  %v524 = vpop.f32.mrf.mxu0
  %v525 = vadd.f32 0.0, %v524
  %v526 = vpop.f32.mrf.mxu0
  %527 = vmatprep.mubr.f32.mxu0 %v235
  %528 = vmatmul.mubr.f32.gmra.mxu0 %v72
  %v529 = vpop.f32.mrf.mxu0
  %v530 = vadd.f32 0.0, %v529
  %v531 = vpop.f32.mrf.mxu0
  %532 = vmatprep.mubr.f32.mxu0 %v238
  %533 = vmatmul.mubr.f32.gmra.mxu0 %v74
  %v534 = vpop.f32.mrf.mxu0
  %v535 = vadd.f32 0.0, %v534
  %v536 = vpop.f32.mrf.mxu0
  %537 = vmatprep.mubr.f32.mxu0 %v241
  %538 = vmatmul.mubr.f32.gmra.mxu0 %v76
  %v539 = vpop.f32.mrf.mxu0
  %v540 = vadd.f32 0.0, %v539
  %v541 = vpop.f32.mrf.mxu0
  %542 = vmatprep.mubr.f32.mxu0 %v244
  %543 = vmatmul.mubr.f32.gmra.mxu0 %v78
  %v544 = vpop.f32.mrf.mxu0
  %v545 = vadd.f32 0.0, %v544
  %v546 = vpop.f32.mrf.mxu0
  %547 = vmatprep.mubr.f32.mxu0 %v247
  %548 = vmatmul.mubr.f32.gmra.mxu0 %v80
  %v549 = vpop.f32.mrf.mxu0
  %v550 = vadd.f32 0.0, %v549
  %v551 = vpop.f32.mrf.mxu0
  %552 = vmatprep.mubr.f32.mxu0 %v250
  %553 = vmatmul.mubr.f32.gmra.mxu0 %v82
  %v554 = vpop.f32.mrf.mxu0
  %v555 = vadd.f32 0.0, %v554
  %v556 = vpop.f32.mrf.mxu0
  %557 = vmatprep.mubr.f32.mxu0 %v253
  %558 = vmatmul.mubr.f32.gmra.mxu0 %v84
  %v559 = vpop.f32.mrf.mxu0
  %v560 = vadd.f32 0.0, %v559
  %v561 = vpop.f32.mrf.mxu0
  %562 = vmatprep.mubr.f32.mxu0 %v256
  %563 = vmatmul.mubr.f32.gmra.mxu0 %v86
  %v564 = vpop.f32.mrf.mxu0
  %v565 = vadd.f32 0.0, %v564
  %v566 = vpop.f32.mrf.mxu0
  %567 = vmatprep.mubr.f32.mxu0 %v259
  %568 = vmatmul.mubr.f32.gmra.mxu0 %v88
  %v569 = vpop.f32.mrf.mxu0
  %v570 = vadd.f32 0.0, %v569
  %v571 = vpop.f32.mrf.mxu0
  %572 = vmatprep.mubr.f32.mxu0 %v262
  %573 = vmatmul.mubr.f32.gmra.mxu0 %v90
  %v574 = vpop.f32.mrf.mxu0
  %v575 = vadd.f32 0.0, %v574
  %v576 = vpop.f32.mrf.mxu0
  %577 = vmatprep.mubr.f32.mxu0 %v265
  %578 = vmatmul.mubr.f32.gmra.mxu0 %v92
  %v579 = vpop.f32.mrf.mxu0
  %v580 = vadd.f32 0.0, %v579
  %v581 = vpop.f32.mrf.mxu0
  %582 = vmatprep.mubr.f32.mxu0 %v268
  %583 = vmatmul.mubr.f32.gmra.mxu0 %v94
  %v584 = vpop.f32.mrf.mxu0
  %v585 = vadd.f32 0.0, %v584
  %v586 = vpop.f32.mrf.mxu0
  %587 = vmatprep.mubr.f32.mxu0 %v271
  %588 = vmatmul.mubr.f32.gmra.mxu0 %v96
  %v589 = vpop.f32.mrf.mxu0
  %v590 = vadd.f32 0.0, %v589
  %v591 = vpop.f32.mrf.mxu0
  %592 = vmatprep.mubr.f32.mxu0 %v274
  %593 = vmatmul.mubr.f32.gmra.mxu0 %v98
  %v594 = vpop.f32.mrf.mxu0
  %v595 = vadd.f32 0.0, %v594
  %v596 = vpop.f32.mrf.mxu0
  %597 = vmatprep.mubr.f32.mxu0 %v277
  %598 = vmatmul.mubr.f32.gmra.mxu0 %v100
  %v599 = vpop.f32.mrf.mxu0
  %v600 = vadd.f32 0.0, %v599
  %v601 = vpop.f32.mrf.mxu0
  %602 = vmatprep.mubr.f32.mxu0 %v280
  %603 = vmatmul.mubr.f32.gmra.mxu0 %v102
  %v604 = vpop.f32.mrf.mxu0
  %v605 = vadd.f32 0.0, %v604
  %v606 = vpop.f32.mrf.mxu0
  %607 = vmatprep.mubr.f32.mxu0 %v283
  %608 = vmatmul.mubr.f32.gmra.mxu0 %v104
  %v609 = vpop.f32.mrf.mxu0
  %v610 = vadd.f32 0.0, %v609
  %v611 = vpop.f32.mrf.mxu0
  %612 = vmatprep.mubr.f32.mxu0 %v286
  %613 = vmatmul.mubr.f32.gmra.mxu0 %v106
  %v614 = vpop.f32.mrf.mxu0
  %v615 = vadd.f32 0.0, %v614
  %v616 = vpop.f32.mrf.mxu0
  %617 = vmatprep.mubr.f32.mxu0 %v289
  %618 = vmatmul.mubr.f32.gmra.mxu0 %v108
  %v619 = vpop.f32.mrf.mxu0
  %v620 = vadd.f32 0.0, %v619
  %v621 = vpop.f32.mrf.mxu0
  %622 = vmatprep.mubr.f32.mxu0 %v292
  %623 = vmatmul.mubr.f32.gmra.mxu0 %v110
  %v624 = vpop.f32.mrf.mxu0
  %v625 = vadd.f32 0.0, %v624
  %v626 = vpop.f32.mrf.mxu0
  %627 = vmatprep.mubr.f32.mxu0 %v295
  %628 = vmatmul.mubr.f32.gmra.mxu0 %v112
  %v629 = vpop.f32.mrf.mxu0
  %v630 = vadd.f32 0.0, %v629
  %v631 = vpop.f32.mrf.mxu0
  %632 = vmatprep.mubr.f32.mxu0 %v298
  %633 = vmatmul.mubr.f32.gmra.mxu0 %v114
  %v634 = vpop.f32.mrf.mxu0
  %v635 = vadd.f32 0.0, %v634
  %v636 = vpop.f32.mrf.mxu0
  %637 = vmatprep.mubr.f32.mxu0 %v301
  %638 = vmatmul.mubr.f32.gmra.mxu0 %v116
  %v639 = vpop.f32.mrf.mxu0
  %v640 = vadd.f32 0.0, %v639
  %v641 = vpop.f32.mrf.mxu0
  %642 = vmatprep.mubr.f32.mxu0 %v304
  %643 = vmatmul.mubr.f32.gmra.mxu0 %v118
  %v644 = vpop.f32.mrf.mxu0
  %v645 = vadd.f32 0.0, %v644
  %v646 = vpop.f32.mrf.mxu0
  %647 = vmatprep.mubr.f32.mxu0 %v307
  %648 = vmatmul.mubr.f32.gmra.mxu0 %v120
  %v649 = vpop.f32.mrf.mxu0
  %v650 = vadd.f32 0.0, %v649
  %v651 = vpop.f32.mrf.mxu0
  %652 = vmatprep.mubr.f32.mxu0 %v310
  %653 = vmatmul.mubr.f32.gmra.mxu0 %v122
  %v654 = vpop.f32.mrf.mxu0
  %v655 = vadd.f32 0.0, %v654
  %v656 = vpop.f32.mrf.mxu0
  %657 = vmatprep.mubr.f32.mxu0 %v313
  %658 = vmatmul.mubr.f32.gmra.mxu0 %v124
  %v659 = vpop.f32.mrf.mxu0
  %v660 = vadd.f32 0.0, %v659
  %v661 = vpop.f32.mrf.mxu0
  %662 = vmatprep.mubr.f32.mxu0 %v316
  %663 = vmatmul.mubr.f32.gmra.mxu0 %v126
  %v664 = vpop.f32.mrf.mxu0
  %v665 = vadd.f32 0.0, %v664
  %v666 = vpop.f32.mrf.mxu0
  %667 = vdwg.mxu0
  %v668 = vld [vmem:[%s2] sm:$0xff]
  %v669 = vld [vmem:[%s2 + $0x8] sm:$0xff]
  %v670 = vld [vmem:[%s2 + $0x10] sm:$0xff]
  %v671 = vld [vmem:[%s2 + $0x18] sm:$0xff]
  %v672 = vld [vmem:[%s2 + $0x20] sm:$0xff]
  %v673 = vld [vmem:[%s2 + $0x28] sm:$0xff]
  %v674 = vld [vmem:[%s2 + $0x30] sm:$0xff]
  %v675 = vld [vmem:[%s2 + $0x38] sm:$0xff]
  %v676 = vld [vmem:[%s2 + $0x40] sm:$0xff]
  %v677 = vld [vmem:[%s2 + $0x48] sm:$0xff]
  %v678 = vld [vmem:[%s2 + $0x50] sm:$0xff]
  %v679 = vld [vmem:[%s2 + $0x58] sm:$0xff]
  %v680 = vld [vmem:[%s2 + $0x60] sm:$0xff]
  %v681 = vld [vmem:[%s2 + $0x68] sm:$0xff]
  %v682 = vld [vmem:[%s2 + $0x70] sm:$0xff]
  %v683 = vld [vmem:[%s2 + $0x78] sm:$0xff]
  %v684 = vld [vmem:[%s2 + $0x80] sm:$0xff]
  %v685 = vld [vmem:[%s2 + $0x88] sm:$0xff]
  %v686 = vld [vmem:[%s2 + $0x90] sm:$0xff]
  %v687 = vld [vmem:[%s2 + $0x98] sm:$0xff]
  %v688 = vld [vmem:[%s2 + $0xa0] sm:$0xff]
  %v689 = vld [vmem:[%s2 + $0xa8] sm:$0xff]
  %v690 = vld [vmem:[%s2 + $0xb0] sm:$0xff]
  %v691 = vld [vmem:[%s2 + $0xb8] sm:$0xff]
  %v692 = vld [vmem:[%s2 + $0xc0] sm:$0xff]
  %v693 = vld [vmem:[%s2 + $0xc8] sm:$0xff]
  %v694 = vld [vmem:[%s2 + $0xd0] sm:$0xff]
  %v695 = vld [vmem:[%s2 + $0xd8] sm:$0xff]
  %v696 = vld [vmem:[%s2 + $0xe0] sm:$0xff]
  %v697 = vld [vmem:[%s2 + $0xe8] sm:$0xff]
  %v698 = vld [vmem:[%s2 + $0xf0] sm:$0xff]
  %v699 = vld [vmem:[%s2 + $0xf8] sm:$0xff]
  %v700 = vld [vmem:[%s2 + $0x100] sm:$0xff]
  %v701 = vld [vmem:[%s2 + $0x108] sm:$0xff]
  %v702 = vld [vmem:[%s2 + $0x110] sm:$0xff]
  %v703 = vld [vmem:[%s2 + $0x118] sm:$0xff]
  %v704 = vld [vmem:[%s2 + $0x120] sm:$0xff]
  %v705 = vld [vmem:[%s2 + $0x128] sm:$0xff]
  %v706 = vld [vmem:[%s2 + $0x130] sm:$0xff]
  %v707 = vld [vmem:[%s2 + $0x138] sm:$0xff]
  %v708 = vld [vmem:[%s2 + $0x140] sm:$0xff]
  %v709 = vld [vmem:[%s2 + $0x148] sm:$0xff]
  %v710 = vld [vmem:[%s2 + $0x150] sm:$0xff]
  %v711 = vld [vmem:[%s2 + $0x158] sm:$0xff]
  %v712 = vld [vmem:[%s2 + $0x160] sm:$0xff]
  %v713 = vld [vmem:[%s2 + $0x168] sm:$0xff]
  %v714 = vld [vmem:[%s2 + $0x170] sm:$0xff]
  %v715 = vld [vmem:[%s2 + $0x178] sm:$0xff]
  %v716 = vld [vmem:[%s2 + $0x180] sm:$0xff]
  %v717 = vld [vmem:[%s2 + $0x188] sm:$0xff]
  %v718 = vld [vmem:[%s2 + $0x190] sm:$0xff]
  %v719 = vld [vmem:[%s2 + $0x198] sm:$0xff]
  %v720 = vld [vmem:[%s2 + $0x1a0] sm:$0xff]
  %v721 = vld [vmem:[%s2 + $0x1a8] sm:$0xff]
  %v722 = vld [vmem:[%s2 + $0x1b0] sm:$0xff]
  %v723 = vld [vmem:[%s2 + $0x1b8] sm:$0xff]
  %v724 = vld [vmem:[%s2 + $0x1c0] sm:$0x3]
  %v725 = vsel %vm146, %v385, 0.0
  %v726 = vsel %vm146, %v390, 0.0
  %v727 = vadd.f32 %v725, %v726
  %v728 = vsel %vm146, %v395, 0.0
  %v729 = vadd.f32 %v727, %v728
  %v730 = vsel %vm146, %v400, 0.0
  %v731 = vadd.f32 %v729, %v730
  %v732 = vsel %vm146, %v405, 0.0
  %v733 = vadd.f32 %v731, %v732
  %v734 = vsel %vm146, %v410, 0.0
  %v735 = vadd.f32 %v733, %v734
  %v736 = vsel %vm146, %v415, 0.0
  %v737 = vadd.f32 %v735, %v736
  %v738 = vsel %vm146, %v420, 0.0
  %v739 = vadd.f32 %v737, %v738
  %v740 = vsel %vm146, %v425, 0.0
  %v741 = vadd.f32 %v739, %v740
  %v742 = vsel %vm146, %v430, 0.0
  %v743 = vadd.f32 %v741, %v742
  %v744 = vsel %vm146, %v435, 0.0
  %v745 = vadd.f32 %v743, %v744
  %v746 = vsel %vm146, %v440, 0.0
  %v747 = vadd.f32 %v745, %v746
  %v748 = vsel %vm146, %v445, 0.0
  %v749 = vadd.f32 %v747, %v748
  %v750 = vsel %vm146, %v450, 0.0
  %v751 = vadd.f32 %v749, %v750
  %v752 = vsel %vm146, %v455, 0.0
  %v753 = vadd.f32 %v751, %v752
  %v754 = vsel %vm146, %v460, 0.0
  %v755 = vadd.f32 %v753, %v754
  %v756 = vsel %vm146, %v465, 0.0
  %v757 = vadd.f32 %v755, %v756
  %v758 = vsel %vm146, %v470, 0.0
  %v759 = vadd.f32 %v757, %v758
  %v760 = vsel %vm146, %v475, 0.0
  %v761 = vadd.f32 %v759, %v760
  %v762 = vsel %vm146, %v480, 0.0
  %v763 = vadd.f32 %v761, %v762
  %v764 = vsel %vm146, %v485, 0.0
  %v765 = vadd.f32 %v763, %v764
  %v766 = vsel %vm146, %v490, 0.0
  %v767 = vadd.f32 %v765, %v766
  %v768 = vsel %vm146, %v495, 0.0
  %v769 = vadd.f32 %v767, %v768
  %v770 = vsel %vm146, %v500, 0.0
  %v771 = vadd.f32 %v769, %v770
  %v772 = vsel %vm146, %v505, 0.0
  %v773 = vadd.f32 %v771, %v772
  %v774 = vsel %vm146, %v510, 0.0
  %v775 = vadd.f32 %v773, %v774
  %v776 = vsel %vm146, %v515, 0.0
  %v777 = vadd.f32 %v775, %v776
  %v778 = vsel %vm146, %v520, 0.0
  %v779 = vadd.f32 %v777, %v778
  %v780 = vsel %vm146, %v525, 0.0
  %v781 = vadd.f32 %v779, %v780
  %v782 = vsel %vm146, %v530, 0.0
  %v783 = vadd.f32 %v781, %v782
  %v784 = vsel %vm146, %v535, 0.0
  %v785 = vadd.f32 %v783, %v784
  %v786 = vsel %vm146, %v540, 0.0
  %v787 = vadd.f32 %v785, %v786
  %v788 = vsel %vm146, %v545, 0.0
  %v789 = vadd.f32 %v787, %v788
  %v790 = vsel %vm146, %v550, 0.0
  %v791 = vadd.f32 %v789, %v790
  %v792 = vsel %vm146, %v555, 0.0
  %v793 = vadd.f32 %v791, %v792
  %v794 = vsel %vm146, %v560, 0.0
  %v795 = vadd.f32 %v793, %v794
  %v796 = vsel %vm146, %v565, 0.0
  %v797 = vadd.f32 %v795, %v796
  %v798 = vsel %vm146, %v570, 0.0
  %v799 = vadd.f32 %v797, %v798
  %v800 = vsel %vm146, %v575, 0.0
  %v801 = vadd.f32 %v799, %v800
  %v802 = vsel %vm146, %v580, 0.0
  %v803 = vadd.f32 %v801, %v802
  %v804 = vsel %vm146, %v585, 0.0
  %v805 = vadd.f32 %v803, %v804
  %v806 = vsel %vm146, %v590, 0.0
  %v807 = vadd.f32 %v805, %v806
  %v808 = vsel %vm146, %v595, 0.0
  %v809 = vadd.f32 %v807, %v808
  %v810 = vsel %vm146, %v600, 0.0
  %v811 = vadd.f32 %v809, %v810
  %v812 = vsel %vm146, %v605, 0.0
  %v813 = vadd.f32 %v811, %v812
  %v814 = vsel %vm146, %v610, 0.0
  %v815 = vadd.f32 %v813, %v814
  %v816 = vsel %vm146, %v615, 0.0
  %v817 = vadd.f32 %v815, %v816
  %v818 = vsel %vm146, %v620, 0.0
  %v819 = vadd.f32 %v817, %v818
  %v820 = vsel %vm146, %v625, 0.0
  %v821 = vadd.f32 %v819, %v820
  %v822 = vsel %vm146, %v630, 0.0
  %v823 = vadd.f32 %v821, %v822
  %v824 = vsel %vm146, %v635, 0.0
  %v825 = vadd.f32 %v823, %v824
  %v826 = vsel %vm146, %v640, 0.0
  %v827 = vadd.f32 %v825, %v826
  %v828 = vsel %vm146, %v645, 0.0
  %v829 = vadd.f32 %v827, %v828
  %v830 = vsel %vm146, %v650, 0.0
  %v831 = vadd.f32 %v829, %v830
  %v832 = vsel %vm146, %v655, 0.0
  %v833 = vadd.f32 %v831, %v832
  %v834 = vsel %vm146, %v660, 0.0
  %v835 = vadd.f32 %v833, %v834
  %vm836 = vcmask 123904
  %v837 = vsel %vm836, %v665, 0.0
  %v838 = vadd.f32 %v835, %v837
  %v839 = vrot.slane %v838, 4
  %v840 = vadd.f32 %v838, %v839
  %v841 = vrot.slane %v840, 2
  %v842 = vadd.f32 %v840, %v841
  %v843 = vrot.slane %v842, 1
  %v844 = vadd.f32 %v842, %v843
  %v845 = vmul.f32 %v385, %v385
  %v846 = vmul.f32 %v390, %v390
  %v847 = vmul.f32 %v395, %v395
  %v848 = vmul.f32 %v400, %v400
  %v849 = vmul.f32 %v405, %v405
  %v850 = vmul.f32 %v410, %v410
  %v851 = vmul.f32 %v415, %v415
  %v852 = vmul.f32 %v420, %v420
  %v853 = vmul.f32 %v425, %v425
  %v854 = vmul.f32 %v430, %v430
  %v855 = vmul.f32 %v435, %v435
  %v856 = vmul.f32 %v440, %v440
  %v857 = vmul.f32 %v445, %v445
  %v858 = vmul.f32 %v450, %v450
  %v859 = vmul.f32 %v455, %v455
  %v860 = vmul.f32 %v460, %v460
  %v861 = vmul.f32 %v465, %v465
  %v862 = vmul.f32 %v470, %v470
  %v863 = vmul.f32 %v475, %v475
  %v864 = vmul.f32 %v480, %v480
  %v865 = vmul.f32 %v485, %v485
  %v866 = vmul.f32 %v490, %v490
  %v867 = vmul.f32 %v495, %v495
  %v868 = vmul.f32 %v500, %v500
  %v869 = vmul.f32 %v505, %v505
  %v870 = vmul.f32 %v510, %v510
  %v871 = vmul.f32 %v515, %v515
  %v872 = vmul.f32 %v520, %v520
  %v873 = vmul.f32 %v525, %v525
  %v874 = vmul.f32 %v530, %v530
  %v875 = vmul.f32 %v535, %v535
  %v876 = vmul.f32 %v540, %v540
  %v877 = vmul.f32 %v545, %v545
  %v878 = vmul.f32 %v550, %v550
  %v879 = vmul.f32 %v555, %v555
  %v880 = vmul.f32 %v560, %v560
  %v881 = vmul.f32 %v565, %v565
  %v882 = vmul.f32 %v570, %v570
  %v883 = vmul.f32 %v575, %v575
  %v884 = vmul.f32 %v580, %v580
  %v885 = vmul.f32 %v585, %v585
  %v886 = vmul.f32 %v590, %v590
  %v887 = vmul.f32 %v595, %v595
  %v888 = vmul.f32 %v600, %v600
  %v889 = vmul.f32 %v605, %v605
  %v890 = vmul.f32 %v610, %v610
  %v891 = vmul.f32 %v615, %v615
  %v892 = vmul.f32 %v620, %v620
  %v893 = vmul.f32 %v625, %v625
  %v894 = vmul.f32 %v630, %v630
  %v895 = vmul.f32 %v635, %v635
  %v896 = vmul.f32 %v640, %v640
  %v897 = vmul.f32 %v645, %v645
  %v898 = vmul.f32 %v650, %v650
  %v899 = vmul.f32 %v655, %v655
  %v900 = vmul.f32 %v660, %v660
  %v901 = vmul.f32 %v665, %v665
  %v902 = vsel %vm146, %v845, 0.0
  %v903 = vsel %vm146, %v846, 0.0
  %v904 = vadd.f32 %v902, %v903
  %v905 = vsel %vm146, %v847, 0.0
  %v906 = vadd.f32 %v904, %v905
  %v907 = vsel %vm146, %v848, 0.0
  %v908 = vadd.f32 %v906, %v907
  %v909 = vsel %vm146, %v849, 0.0
  %v910 = vadd.f32 %v908, %v909
  %v911 = vsel %vm146, %v850, 0.0
  %v912 = vadd.f32 %v910, %v911
  %v913 = vsel %vm146, %v851, 0.0
  %v914 = vadd.f32 %v912, %v913
  %v915 = vsel %vm146, %v852, 0.0
  %v916 = vadd.f32 %v914, %v915
  %v917 = vsel %vm146, %v853, 0.0
  %v918 = vadd.f32 %v916, %v917
  %v919 = vsel %vm146, %v854, 0.0
  %v920 = vadd.f32 %v918, %v919
  %v921 = vsel %vm146, %v855, 0.0
  %v922 = vadd.f32 %v920, %v921
  %v923 = vsel %vm146, %v856, 0.0
  %v924 = vadd.f32 %v922, %v923
  %v925 = vsel %vm146, %v857, 0.0
  %v926 = vadd.f32 %v924, %v925
  %v927 = vsel %vm146, %v858, 0.0
  %v928 = vadd.f32 %v926, %v927
  %v929 = vsel %vm146, %v859, 0.0
  %v930 = vadd.f32 %v928, %v929
  %v931 = vsel %vm146, %v860, 0.0
  %v932 = vadd.f32 %v930, %v931
  %v933 = vsel %vm146, %v861, 0.0
  %v934 = vadd.f32 %v932, %v933
  %v935 = vsel %vm146, %v862, 0.0
  %v936 = vadd.f32 %v934, %v935
  %v937 = vsel %vm146, %v863, 0.0
  %v938 = vadd.f32 %v936, %v937
  %v939 = vsel %vm146, %v864, 0.0
  %v940 = vadd.f32 %v938, %v939
  %v941 = vsel %vm146, %v865, 0.0
  %v942 = vadd.f32 %v940, %v941
  %v943 = vsel %vm146, %v866, 0.0
  %v944 = vadd.f32 %v942, %v943
  %v945 = vsel %vm146, %v867, 0.0
  %v946 = vadd.f32 %v944, %v945
  %v947 = vsel %vm146, %v868, 0.0
  %v948 = vadd.f32 %v946, %v947
  %v949 = vsel %vm146, %v869, 0.0
  %v950 = vadd.f32 %v948, %v949
  %v951 = vsel %vm146, %v870, 0.0
  %v952 = vadd.f32 %v950, %v951
  %v953 = vsel %vm146, %v871, 0.0
  %v954 = vadd.f32 %v952, %v953
  %v955 = vsel %vm146, %v872, 0.0
  %v956 = vadd.f32 %v954, %v955
  %v957 = vsel %vm146, %v873, 0.0
  %v958 = vadd.f32 %v956, %v957
  %v959 = vsel %vm146, %v874, 0.0
  %v960 = vadd.f32 %v958, %v959
  %v961 = vsel %vm146, %v875, 0.0
  %v962 = vadd.f32 %v960, %v961
  %v963 = vsel %vm146, %v876, 0.0
  %v964 = vadd.f32 %v962, %v963
  %v965 = vsel %vm146, %v877, 0.0
  %v966 = vadd.f32 %v964, %v965
  %v967 = vsel %vm146, %v878, 0.0
  %v968 = vadd.f32 %v966, %v967
  %v969 = vsel %vm146, %v879, 0.0
  %v970 = vadd.f32 %v968, %v969
  %v971 = vsel %vm146, %v880, 0.0
  %v972 = vadd.f32 %v970, %v971
  %v973 = vsel %vm146, %v881, 0.0
  %v974 = vadd.f32 %v972, %v973
  %v975 = vsel %vm146, %v882, 0.0
  %v976 = vadd.f32 %v974, %v975
  %v977 = vsel %vm146, %v883, 0.0
  %v978 = vadd.f32 %v976, %v977
  %v979 = vsel %vm146, %v884, 0.0
  %v980 = vadd.f32 %v978, %v979
  %v981 = vsel %vm146, %v885, 0.0
  %v982 = vadd.f32 %v980, %v981
  %v983 = vsel %vm146, %v886, 0.0
  %v984 = vadd.f32 %v982, %v983
  %v985 = vsel %vm146, %v887, 0.0
  %v986 = vadd.f32 %v984, %v985
  %v987 = vsel %vm146, %v888, 0.0
  %v988 = vadd.f32 %v986, %v987
  %v989 = vsel %vm146, %v889, 0.0
  %v990 = vadd.f32 %v988, %v989
  %v991 = vsel %vm146, %v890, 0.0
  %v992 = vadd.f32 %v990, %v991
  %v993 = vsel %vm146, %v891, 0.0
  %v994 = vadd.f32 %v992, %v993
  %v995 = vsel %vm146, %v892, 0.0
  %v996 = vadd.f32 %v994, %v995
  %v997 = vsel %vm146, %v893, 0.0
  %v998 = vadd.f32 %v996, %v997
  %v999 = vsel %vm146, %v894, 0.0
  %v1000 = vadd.f32 %v998, %v999
  %v1001 = vsel %vm146, %v895, 0.0
  %v1002 = vadd.f32 %v1000, %v1001
  %v1003 = vsel %vm146, %v896, 0.0
  %v1004 = vadd.f32 %v1002, %v1003
  %v1005 = vsel %vm146, %v897, 0.0
  %v1006 = vadd.f32 %v1004, %v1005
  %v1007 = vsel %vm146, %v898, 0.0
  %v1008 = vadd.f32 %v1006, %v1007
  %v1009 = vsel %vm146, %v899, 0.0
  %v1010 = vadd.f32 %v1008, %v1009
  %v1011 = vsel %vm146, %v900, 0.0
  %v1012 = vadd.f32 %v1010, %v1011
  %v1013 = vsel %vm836, %v901, 0.0
  %v1014 = vadd.f32 %v1012, %v1013
  %v1015 = vrot.slane %v1014, 4
  %v1016 = vadd.f32 %v1014, %v1015
  %v1017 = vrot.slane %v1016, 2
  %v1018 = vadd.f32 %v1016, %v1017
  %v1019 = vrot.slane %v1018, 1
  %v1020 = vadd.f32 %v1018, %v1019
  %v1021 = vmul.f32 %v844, 0.0022222223
  %v1022 = vmul.f32 %v1020, 0.0022222223
  %v1023 = vmul.f32 %v1021, %v1021
  %v1024 = vsub.f32 %v1022, %v1023
  %v1025 = vmax.f32 %v1024, 0.0
  %v1026 = vsub.f32 %v385, %v1021
  %v1027 = vsub.f32 %v390, %v1021
  %v1028 = vsub.f32 %v395, %v1021
  %v1029 = vsub.f32 %v400, %v1021
  %v1030 = vsub.f32 %v405, %v1021
  %v1031 = vsub.f32 %v410, %v1021
  %v1032 = vsub.f32 %v415, %v1021
  %v1033 = vsub.f32 %v420, %v1021
  %v1034 = vsub.f32 %v425, %v1021
  %v1035 = vsub.f32 %v430, %v1021
  %v1036 = vsub.f32 %v435, %v1021
  %v1037 = vsub.f32 %v440, %v1021
  %v1038 = vsub.f32 %v445, %v1021
  %v1039 = vsub.f32 %v450, %v1021
  %v1040 = vsub.f32 %v455, %v1021
  %v1041 = vsub.f32 %v460, %v1021
  %v1042 = vsub.f32 %v465, %v1021
  %v1043 = vsub.f32 %v470, %v1021
  %v1044 = vsub.f32 %v475, %v1021
  %v1045 = vsub.f32 %v480, %v1021
  %v1046 = vsub.f32 %v485, %v1021
  %v1047 = vsub.f32 %v490, %v1021
  %v1048 = vsub.f32 %v495, %v1021
  %v1049 = vsub.f32 %v500, %v1021
  %v1050 = vsub.f32 %v505, %v1021
  %v1051 = vsub.f32 %v510, %v1021
  %v1052 = vsub.f32 %v515, %v1021
  %v1053 = vsub.f32 %v520, %v1021
  %v1054 = vsub.f32 %v525, %v1021
  %v1055 = vsub.f32 %v530, %v1021
  %v1056 = vsub.f32 %v535, %v1021
  %v1057 = vsub.f32 %v540, %v1021
  %v1058 = vsub.f32 %v545, %v1021
  %v1059 = vsub.f32 %v550, %v1021
  %v1060 = vsub.f32 %v555, %v1021
  %v1061 = vsub.f32 %v560, %v1021
  %v1062 = vsub.f32 %v565, %v1021
  %v1063 = vsub.f32 %v570, %v1021
  %v1064 = vsub.f32 %v575, %v1021
  %v1065 = vsub.f32 %v580, %v1021
  %v1066 = vsub.f32 %v585, %v1021
  %v1067 = vsub.f32 %v590, %v1021
  %v1068 = vsub.f32 %v595, %v1021
  %v1069 = vsub.f32 %v600, %v1021
  %v1070 = vsub.f32 %v605, %v1021
  %v1071 = vsub.f32 %v610, %v1021
  %v1072 = vsub.f32 %v615, %v1021
  %v1073 = vsub.f32 %v620, %v1021
  %v1074 = vsub.f32 %v625, %v1021
  %v1075 = vsub.f32 %v630, %v1021
  %v1076 = vsub.f32 %v635, %v1021
  %v1077 = vsub.f32 %v640, %v1021
  %v1078 = vsub.f32 %v645, %v1021
  %v1079 = vsub.f32 %v650, %v1021
  %v1080 = vsub.f32 %v655, %v1021
  %v1081 = vsub.f32 %v660, %v1021
  %v1082 = vsub.f32 %v665, %v1021
  %v1083 = vadd.f32 %v1025, 1e-05
  %v1084 = vrsqrt.pop %v1083
  %v1085 = vmul.f32 %v1026, %v1084
  %v1086 = vmul.f32 %v1027, %v1084
  %v1087 = vmul.f32 %v1028, %v1084
  %v1088 = vmul.f32 %v1029, %v1084
  %v1089 = vmul.f32 %v1030, %v1084
  %v1090 = vmul.f32 %v1031, %v1084
  %v1091 = vmul.f32 %v1032, %v1084
  %v1092 = vmul.f32 %v1033, %v1084
  %v1093 = vmul.f32 %v1034, %v1084
  %v1094 = vmul.f32 %v1035, %v1084
  %v1095 = vmul.f32 %v1036, %v1084
  %v1096 = vmul.f32 %v1037, %v1084
  %v1097 = vmul.f32 %v1038, %v1084
  %v1098 = vmul.f32 %v1039, %v1084
  %v1099 = vmul.f32 %v1040, %v1084
  %v1100 = vmul.f32 %v1041, %v1084
  %v1101 = vmul.f32 %v1042, %v1084
  %v1102 = vmul.f32 %v1043, %v1084
  %v1103 = vmul.f32 %v1044, %v1084
  %v1104 = vmul.f32 %v1045, %v1084
  %v1105 = vmul.f32 %v1046, %v1084
  %v1106 = vmul.f32 %v1047, %v1084
  %v1107 = vmul.f32 %v1048, %v1084
  %v1108 = vmul.f32 %v1049, %v1084
  %v1109 = vmul.f32 %v1050, %v1084
  %v1110 = vmul.f32 %v1051, %v1084
  %v1111 = vmul.f32 %v1052, %v1084
  %v1112 = vmul.f32 %v1053, %v1084
  %v1113 = vmul.f32 %v1054, %v1084
  %v1114 = vmul.f32 %v1055, %v1084
  %v1115 = vmul.f32 %v1056, %v1084
  %v1116 = vmul.f32 %v1057, %v1084
  %v1117 = vmul.f32 %v1058, %v1084
  %v1118 = vmul.f32 %v1059, %v1084
  %v1119 = vmul.f32 %v1060, %v1084
  %v1120 = vmul.f32 %v1061, %v1084
  %v1121 = vmul.f32 %v1062, %v1084
  %v1122 = vmul.f32 %v1063, %v1084
  %v1123 = vmul.f32 %v1064, %v1084
  %v1124 = vmul.f32 %v1065, %v1084
  %v1125 = vmul.f32 %v1066, %v1084
  %v1126 = vmul.f32 %v1067, %v1084
  %v1127 = vmul.f32 %v1068, %v1084
  %v1128 = vmul.f32 %v1069, %v1084
  %v1129 = vmul.f32 %v1070, %v1084
  %v1130 = vmul.f32 %v1071, %v1084
  %v1131 = vmul.f32 %v1072, %v1084
  %v1132 = vmul.f32 %v1073, %v1084
  %v1133 = vmul.f32 %v1074, %v1084
  %v1134 = vmul.f32 %v1075, %v1084
  %v1135 = vmul.f32 %v1076, %v1084
  %v1136 = vmul.f32 %v1077, %v1084
  %v1137 = vmul.f32 %v1078, %v1084
  %v1138 = vmul.f32 %v1079, %v1084
  %v1139 = vmul.f32 %v1080, %v1084
  %v1140 = vmul.f32 %v1081, %v1084
  %v1141 = vmul.f32 %v1082, %v1084
  %v1142 = vadd.f32 %v668, %v1085
  %v1143 = vadd.f32 %v669, %v1086
  %v1144 = vadd.f32 %v670, %v1087
  %v1145 = vadd.f32 %v671, %v1088
  %v1146 = vadd.f32 %v672, %v1089
  %v1147 = vadd.f32 %v673, %v1090
  %v1148 = vadd.f32 %v674, %v1091
  %v1149 = vadd.f32 %v675, %v1092
  %v1150 = vadd.f32 %v676, %v1093
  %v1151 = vadd.f32 %v677, %v1094
  %v1152 = vadd.f32 %v678, %v1095
  %v1153 = vadd.f32 %v679, %v1096
  %v1154 = vadd.f32 %v680, %v1097
  %v1155 = vadd.f32 %v681, %v1098
  %v1156 = vadd.f32 %v682, %v1099
  %v1157 = vadd.f32 %v683, %v1100
  %v1158 = vadd.f32 %v684, %v1101
  %v1159 = vadd.f32 %v685, %v1102
  %v1160 = vadd.f32 %v686, %v1103
  %v1161 = vadd.f32 %v687, %v1104
  %v1162 = vadd.f32 %v688, %v1105
  %v1163 = vadd.f32 %v689, %v1106
  %v1164 = vadd.f32 %v690, %v1107
  %v1165 = vadd.f32 %v691, %v1108
  %v1166 = vadd.f32 %v692, %v1109
  %v1167 = vadd.f32 %v693, %v1110
  %v1168 = vadd.f32 %v694, %v1111
  %v1169 = vadd.f32 %v695, %v1112
  %v1170 = vadd.f32 %v696, %v1113
  %v1171 = vadd.f32 %v697, %v1114
  %v1172 = vadd.f32 %v698, %v1115
  %v1173 = vadd.f32 %v699, %v1116
  %v1174 = vadd.f32 %v700, %v1117
  %v1175 = vadd.f32 %v701, %v1118
  %v1176 = vadd.f32 %v702, %v1119
  %v1177 = vadd.f32 %v703, %v1120
  %v1178 = vadd.f32 %v704, %v1121
  %v1179 = vadd.f32 %v705, %v1122
  %v1180 = vadd.f32 %v706, %v1123
  %v1181 = vadd.f32 %v707, %v1124
  %v1182 = vadd.f32 %v708, %v1125
  %v1183 = vadd.f32 %v709, %v1126
  %v1184 = vadd.f32 %v710, %v1127
  %v1185 = vadd.f32 %v711, %v1128
  %v1186 = vadd.f32 %v712, %v1129
  %v1187 = vadd.f32 %v713, %v1130
  %v1188 = vadd.f32 %v714, %v1131
  %v1189 = vadd.f32 %v715, %v1132
  %v1190 = vadd.f32 %v716, %v1133
  %v1191 = vadd.f32 %v717, %v1134
  %v1192 = vadd.f32 %v718, %v1135
  %v1193 = vadd.f32 %v719, %v1136
  %v1194 = vadd.f32 %v720, %v1137
  %v1195 = vadd.f32 %v721, %v1138
  %v1196 = vadd.f32 %v722, %v1139
  %v1197 = vadd.f32 %v723, %v1140
  %v1198 = vadd.f32 %v724, %v1141
  %v1199 = vsel %vm146, %v1142, 0.0
  %v1200 = vsel %vm146, %v1143, 0.0
  %v1201 = vadd.f32 %v1199, %v1200
  %v1202 = vsel %vm146, %v1144, 0.0
  %v1203 = vadd.f32 %v1201, %v1202
  %v1204 = vsel %vm146, %v1145, 0.0
  %v1205 = vadd.f32 %v1203, %v1204
  %v1206 = vsel %vm146, %v1146, 0.0
  %v1207 = vadd.f32 %v1205, %v1206
  %v1208 = vsel %vm146, %v1147, 0.0
  %v1209 = vadd.f32 %v1207, %v1208
  %v1210 = vsel %vm146, %v1148, 0.0
  %v1211 = vadd.f32 %v1209, %v1210
  %v1212 = vsel %vm146, %v1149, 0.0
  %v1213 = vadd.f32 %v1211, %v1212
  %v1214 = vsel %vm146, %v1150, 0.0
  %v1215 = vadd.f32 %v1213, %v1214
  %v1216 = vsel %vm146, %v1151, 0.0
  %v1217 = vadd.f32 %v1215, %v1216
  %v1218 = vsel %vm146, %v1152, 0.0
  %v1219 = vadd.f32 %v1217, %v1218
  %v1220 = vsel %vm146, %v1153, 0.0
  %v1221 = vadd.f32 %v1219, %v1220
  %v1222 = vsel %vm146, %v1154, 0.0
  %v1223 = vadd.f32 %v1221, %v1222
  %v1224 = vsel %vm146, %v1155, 0.0
  %v1225 = vadd.f32 %v1223, %v1224
  %v1226 = vsel %vm146, %v1156, 0.0
  %v1227 = vadd.f32 %v1225, %v1226
  %v1228 = vsel %vm146, %v1157, 0.0
  %v1229 = vadd.f32 %v1227, %v1228
  %v1230 = vsel %vm146, %v1158, 0.0
  %v1231 = vadd.f32 %v1229, %v1230
  %v1232 = vsel %vm146, %v1159, 0.0
  %v1233 = vadd.f32 %v1231, %v1232
  %v1234 = vsel %vm146, %v1160, 0.0
  %v1235 = vadd.f32 %v1233, %v1234
  %v1236 = vsel %vm146, %v1161, 0.0
  %v1237 = vadd.f32 %v1235, %v1236
  %v1238 = vsel %vm146, %v1162, 0.0
  %v1239 = vadd.f32 %v1237, %v1238
  %v1240 = vsel %vm146, %v1163, 0.0
  %v1241 = vadd.f32 %v1239, %v1240
  %v1242 = vsel %vm146, %v1164, 0.0
  %v1243 = vadd.f32 %v1241, %v1242
  %v1244 = vsel %vm146, %v1165, 0.0
  %v1245 = vadd.f32 %v1243, %v1244
  %v1246 = vsel %vm146, %v1166, 0.0
  %v1247 = vadd.f32 %v1245, %v1246
  %v1248 = vsel %vm146, %v1167, 0.0
  %v1249 = vadd.f32 %v1247, %v1248
  %v1250 = vsel %vm146, %v1168, 0.0
  %v1251 = vadd.f32 %v1249, %v1250
  %v1252 = vsel %vm146, %v1169, 0.0
  %v1253 = vadd.f32 %v1251, %v1252
  %v1254 = vsel %vm146, %v1170, 0.0
  %v1255 = vadd.f32 %v1253, %v1254
  %v1256 = vsel %vm146, %v1171, 0.0
  %v1257 = vadd.f32 %v1255, %v1256
  %v1258 = vsel %vm146, %v1172, 0.0
  %v1259 = vadd.f32 %v1257, %v1258
  %v1260 = vsel %vm146, %v1173, 0.0
  %v1261 = vadd.f32 %v1259, %v1260
  %v1262 = vsel %vm146, %v1174, 0.0
  %v1263 = vadd.f32 %v1261, %v1262
  %v1264 = vsel %vm146, %v1175, 0.0
  %v1265 = vadd.f32 %v1263, %v1264
  %v1266 = vsel %vm146, %v1176, 0.0
  %v1267 = vadd.f32 %v1265, %v1266
  %v1268 = vsel %vm146, %v1177, 0.0
  %v1269 = vadd.f32 %v1267, %v1268
  %v1270 = vsel %vm146, %v1178, 0.0
  %v1271 = vadd.f32 %v1269, %v1270
  %v1272 = vsel %vm146, %v1179, 0.0
  %v1273 = vadd.f32 %v1271, %v1272
  %v1274 = vsel %vm146, %v1180, 0.0
  %v1275 = vadd.f32 %v1273, %v1274
  %v1276 = vsel %vm146, %v1181, 0.0
  %v1277 = vadd.f32 %v1275, %v1276
  %v1278 = vsel %vm146, %v1182, 0.0
  %v1279 = vadd.f32 %v1277, %v1278
  %v1280 = vsel %vm146, %v1183, 0.0
  %v1281 = vadd.f32 %v1279, %v1280
  %v1282 = vsel %vm146, %v1184, 0.0
  %v1283 = vadd.f32 %v1281, %v1282
  %v1284 = vsel %vm146, %v1185, 0.0
  %v1285 = vadd.f32 %v1283, %v1284
  %v1286 = vsel %vm146, %v1186, 0.0
  %v1287 = vadd.f32 %v1285, %v1286
  %v1288 = vsel %vm146, %v1187, 0.0
  %v1289 = vadd.f32 %v1287, %v1288
  %v1290 = vsel %vm146, %v1188, 0.0
  %v1291 = vadd.f32 %v1289, %v1290
  %v1292 = vsel %vm146, %v1189, 0.0
  %v1293 = vadd.f32 %v1291, %v1292
  %v1294 = vsel %vm146, %v1190, 0.0
  %v1295 = vadd.f32 %v1293, %v1294
  %v1296 = vsel %vm146, %v1191, 0.0
  %v1297 = vadd.f32 %v1295, %v1296
  %v1298 = vsel %vm146, %v1192, 0.0
  %v1299 = vadd.f32 %v1297, %v1298
  %v1300 = vsel %vm146, %v1193, 0.0
  %v1301 = vadd.f32 %v1299, %v1300
  %v1302 = vsel %vm146, %v1194, 0.0
  %v1303 = vadd.f32 %v1301, %v1302
  %v1304 = vsel %vm146, %v1195, 0.0
  %v1305 = vadd.f32 %v1303, %v1304
  %v1306 = vsel %vm146, %v1196, 0.0
  %v1307 = vadd.f32 %v1305, %v1306
  %v1308 = vsel %vm146, %v1197, 0.0
  %v1309 = vadd.f32 %v1307, %v1308
  %v1310 = vsel %vm836, %v1198, 0.0
  %v1311 = vadd.f32 %v1309, %v1310
  %v1312 = vrot.slane %v1311, 4
  %v1313 = vadd.f32 %v1311, %v1312
  %v1314 = vrot.slane %v1313, 2
  %v1315 = vadd.f32 %v1313, %v1314
  %v1316 = vrot.slane %v1315, 1
  %v1317 = vadd.f32 %v1315, %v1316
  %v1318 = vmul.f32 %v1142, %v1142
  %v1319 = vmul.f32 %v1143, %v1143
  %v1320 = vmul.f32 %v1144, %v1144
  %v1321 = vmul.f32 %v1145, %v1145
  %v1322 = vmul.f32 %v1146, %v1146
  %v1323 = vmul.f32 %v1147, %v1147
  %v1324 = vmul.f32 %v1148, %v1148
  %v1325 = vmul.f32 %v1149, %v1149
  %v1326 = vmul.f32 %v1150, %v1150
  %v1327 = vmul.f32 %v1151, %v1151
  %v1328 = vmul.f32 %v1152, %v1152
  %v1329 = vmul.f32 %v1153, %v1153
  %v1330 = vmul.f32 %v1154, %v1154
  %v1331 = vmul.f32 %v1155, %v1155
  %v1332 = vmul.f32 %v1156, %v1156
  %v1333 = vmul.f32 %v1157, %v1157
  %v1334 = vmul.f32 %v1158, %v1158
  %v1335 = vmul.f32 %v1159, %v1159
  %v1336 = vmul.f32 %v1160, %v1160
  %v1337 = vmul.f32 %v1161, %v1161
  %v1338 = vmul.f32 %v1162, %v1162
  %v1339 = vmul.f32 %v1163, %v1163
  %v1340 = vmul.f32 %v1164, %v1164
  %v1341 = vmul.f32 %v1165, %v1165
  %v1342 = vmul.f32 %v1166, %v1166
  %v1343 = vmul.f32 %v1167, %v1167
  %v1344 = vmul.f32 %v1168, %v1168
  %v1345 = vmul.f32 %v1169, %v1169
  %v1346 = vmul.f32 %v1170, %v1170
  %v1347 = vmul.f32 %v1171, %v1171
  %v1348 = vmul.f32 %v1172, %v1172
  %v1349 = vmul.f32 %v1173, %v1173
  %v1350 = vmul.f32 %v1174, %v1174
  %v1351 = vmul.f32 %v1175, %v1175
  %v1352 = vmul.f32 %v1176, %v1176
  %v1353 = vmul.f32 %v1177, %v1177
  %v1354 = vmul.f32 %v1178, %v1178
  %v1355 = vmul.f32 %v1179, %v1179
  %v1356 = vmul.f32 %v1180, %v1180
  %v1357 = vmul.f32 %v1181, %v1181
  %v1358 = vmul.f32 %v1182, %v1182
  %v1359 = vmul.f32 %v1183, %v1183
  %v1360 = vmul.f32 %v1184, %v1184
  %v1361 = vmul.f32 %v1185, %v1185
  %v1362 = vmul.f32 %v1186, %v1186
  %v1363 = vmul.f32 %v1187, %v1187
  %v1364 = vmul.f32 %v1188, %v1188
  %v1365 = vmul.f32 %v1189, %v1189
  %v1366 = vmul.f32 %v1190, %v1190
  %v1367 = vmul.f32 %v1191, %v1191
  %v1368 = vmul.f32 %v1192, %v1192
  %v1369 = vmul.f32 %v1193, %v1193
  %v1370 = vmul.f32 %v1194, %v1194
  %v1371 = vmul.f32 %v1195, %v1195
  %v1372 = vmul.f32 %v1196, %v1196
  %v1373 = vmul.f32 %v1197, %v1197
  %v1374 = vmul.f32 %v1198, %v1198
  %v1375 = vsel %vm146, %v1318, 0.0
  %v1376 = vsel %vm146, %v1319, 0.0
  %v1377 = vadd.f32 %v1375, %v1376
  %v1378 = vsel %vm146, %v1320, 0.0
  %v1379 = vadd.f32 %v1377, %v1378
  %v1380 = vsel %vm146, %v1321, 0.0
  %v1381 = vadd.f32 %v1379, %v1380
  %v1382 = vsel %vm146, %v1322, 0.0
  %v1383 = vadd.f32 %v1381, %v1382
  %v1384 = vsel %vm146, %v1323, 0.0
  %v1385 = vadd.f32 %v1383, %v1384
  %v1386 = vsel %vm146, %v1324, 0.0
  %v1387 = vadd.f32 %v1385, %v1386
  %v1388 = vsel %vm146, %v1325, 0.0
  %v1389 = vadd.f32 %v1387, %v1388
  %v1390 = vsel %vm146, %v1326, 0.0
  %v1391 = vadd.f32 %v1389, %v1390
  %v1392 = vsel %vm146, %v1327, 0.0
  %v1393 = vadd.f32 %v1391, %v1392
  %v1394 = vsel %vm146, %v1328, 0.0
  %v1395 = vadd.f32 %v1393, %v1394
  %v1396 = vsel %vm146, %v1329, 0.0
  %v1397 = vadd.f32 %v1395, %v1396
  %v1398 = vsel %vm146, %v1330, 0.0
  %v1399 = vadd.f32 %v1397, %v1398
  %v1400 = vsel %vm146, %v1331, 0.0
  %v1401 = vadd.f32 %v1399, %v1400
  %v1402 = vsel %vm146, %v1332, 0.0
  %v1403 = vadd.f32 %v1401, %v1402
  %v1404 = vsel %vm146, %v1333, 0.0
  %v1405 = vadd.f32 %v1403, %v1404
  %v1406 = vsel %vm146, %v1334, 0.0
  %v1407 = vadd.f32 %v1405, %v1406
  %v1408 = vsel %vm146, %v1335, 0.0
  %v1409 = vadd.f32 %v1407, %v1408
  %v1410 = vsel %vm146, %v1336, 0.0
  %v1411 = vadd.f32 %v1409, %v1410
  %v1412 = vsel %vm146, %v1337, 0.0
  %v1413 = vadd.f32 %v1411, %v1412
  %v1414 = vsel %vm146, %v1338, 0.0
  %v1415 = vadd.f32 %v1413, %v1414
  %v1416 = vsel %vm146, %v1339, 0.0
  %v1417 = vadd.f32 %v1415, %v1416
  %v1418 = vsel %vm146, %v1340, 0.0
  %v1419 = vadd.f32 %v1417, %v1418
  %v1420 = vsel %vm146, %v1341, 0.0
  %v1421 = vadd.f32 %v1419, %v1420
  %v1422 = vsel %vm146, %v1342, 0.0
  %v1423 = vadd.f32 %v1421, %v1422
  %v1424 = vsel %vm146, %v1343, 0.0
  %v1425 = vadd.f32 %v1423, %v1424
  %v1426 = vsel %vm146, %v1344, 0.0
  %v1427 = vadd.f32 %v1425, %v1426
  %v1428 = vsel %vm146, %v1345, 0.0
  %v1429 = vadd.f32 %v1427, %v1428
  %v1430 = vsel %vm146, %v1346, 0.0
  %v1431 = vadd.f32 %v1429, %v1430
  %v1432 = vsel %vm146, %v1347, 0.0
  %v1433 = vadd.f32 %v1431, %v1432
  %v1434 = vsel %vm146, %v1348, 0.0
  %v1435 = vadd.f32 %v1433, %v1434
  %v1436 = vsel %vm146, %v1349, 0.0
  %v1437 = vadd.f32 %v1435, %v1436
  %v1438 = vsel %vm146, %v1350, 0.0
  %v1439 = vadd.f32 %v1437, %v1438
  %v1440 = vsel %vm146, %v1351, 0.0
  %v1441 = vadd.f32 %v1439, %v1440
  %v1442 = vsel %vm146, %v1352, 0.0
  %v1443 = vadd.f32 %v1441, %v1442
  %v1444 = vsel %vm146, %v1353, 0.0
  %v1445 = vadd.f32 %v1443, %v1444
  %v1446 = vsel %vm146, %v1354, 0.0
  %v1447 = vadd.f32 %v1445, %v1446
  %v1448 = vsel %vm146, %v1355, 0.0
  %v1449 = vadd.f32 %v1447, %v1448
  %v1450 = vsel %vm146, %v1356, 0.0
  %v1451 = vadd.f32 %v1449, %v1450
  %v1452 = vsel %vm146, %v1357, 0.0
  %v1453 = vadd.f32 %v1451, %v1452
  %v1454 = vsel %vm146, %v1358, 0.0
  %v1455 = vadd.f32 %v1453, %v1454
  %v1456 = vsel %vm146, %v1359, 0.0
  %v1457 = vadd.f32 %v1455, %v1456
  %v1458 = vsel %vm146, %v1360, 0.0
  %v1459 = vadd.f32 %v1457, %v1458
  %v1460 = vsel %vm146, %v1361, 0.0
  %v1461 = vadd.f32 %v1459, %v1460
  %v1462 = vsel %vm146, %v1362, 0.0
  %v1463 = vadd.f32 %v1461, %v1462
  %v1464 = vsel %vm146, %v1363, 0.0
  %v1465 = vadd.f32 %v1463, %v1464
  %v1466 = vsel %vm146, %v1364, 0.0
  %v1467 = vadd.f32 %v1465, %v1466
  %v1468 = vsel %vm146, %v1365, 0.0
  %v1469 = vadd.f32 %v1467, %v1468
  %v1470 = vsel %vm146, %v1366, 0.0
  %v1471 = vadd.f32 %v1469, %v1470
  %v1472 = vsel %vm146, %v1367, 0.0
  %v1473 = vadd.f32 %v1471, %v1472
  %v1474 = vsel %vm146, %v1368, 0.0
  %v1475 = vadd.f32 %v1473, %v1474
  %v1476 = vsel %vm146, %v1369, 0.0
  %v1477 = vadd.f32 %v1475, %v1476
  %v1478 = vsel %vm146, %v1370, 0.0
  %v1479 = vadd.f32 %v1477, %v1478
  %v1480 = vsel %vm146, %v1371, 0.0
  %v1481 = vadd.f32 %v1479, %v1480
  %v1482 = vsel %vm146, %v1372, 0.0
  %v1483 = vadd.f32 %v1481, %v1482
  %v1484 = vsel %vm146, %v1373, 0.0
  %v1485 = vadd.f32 %v1483, %v1484
  %v1486 = vsel %vm836, %v1374, 0.0
  %v1487 = vadd.f32 %v1485, %v1486
  %v1488 = vrot.slane %v1487, 4
  %v1489 = vadd.f32 %v1487, %v1488
  %v1490 = vrot.slane %v1489, 2
  %v1491 = vadd.f32 %v1489, %v1490
  %v1492 = vrot.slane %v1491, 1
  %v1493 = vadd.f32 %v1491, %v1492
  %v1494 = vmul.f32 %v1317, 0.0022222223
  %v1495 = vmul.f32 %v1493, 0.0022222223
  %v1496 = vmul.f32 %v1494, %v1494
  %v1497 = vsub.f32 %v1495, %v1496
  %v1498 = vmax.f32 %v1497, 0.0
  %v1499 = vsub.f32 %v1142, %v1494
  %v1500 = vsub.f32 %v1143, %v1494
  %v1501 = vsub.f32 %v1144, %v1494
  %v1502 = vsub.f32 %v1145, %v1494
  %v1503 = vsub.f32 %v1146, %v1494
  %v1504 = vsub.f32 %v1147, %v1494
  %v1505 = vsub.f32 %v1148, %v1494
  %v1506 = vsub.f32 %v1149, %v1494
  %v1507 = vsub.f32 %v1150, %v1494
  %v1508 = vsub.f32 %v1151, %v1494
  %v1509 = vsub.f32 %v1152, %v1494
  %v1510 = vsub.f32 %v1153, %v1494
  %v1511 = vsub.f32 %v1154, %v1494
  %v1512 = vsub.f32 %v1155, %v1494
  %v1513 = vsub.f32 %v1156, %v1494
  %v1514 = vsub.f32 %v1157, %v1494
  %v1515 = vsub.f32 %v1158, %v1494
  %v1516 = vsub.f32 %v1159, %v1494
  %v1517 = vsub.f32 %v1160, %v1494
  %v1518 = vsub.f32 %v1161, %v1494
  %v1519 = vsub.f32 %v1162, %v1494
  %v1520 = vsub.f32 %v1163, %v1494
  %v1521 = vsub.f32 %v1164, %v1494
  %v1522 = vsub.f32 %v1165, %v1494
  %v1523 = vsub.f32 %v1166, %v1494
  %v1524 = vsub.f32 %v1167, %v1494
  %v1525 = vsub.f32 %v1168, %v1494
  %v1526 = vsub.f32 %v1169, %v1494
  %v1527 = vsub.f32 %v1170, %v1494
  %v1528 = vsub.f32 %v1171, %v1494
  %v1529 = vsub.f32 %v1172, %v1494
  %v1530 = vsub.f32 %v1173, %v1494
  %v1531 = vsub.f32 %v1174, %v1494
  %v1532 = vsub.f32 %v1175, %v1494
  %v1533 = vsub.f32 %v1176, %v1494
  %v1534 = vsub.f32 %v1177, %v1494
  %v1535 = vsub.f32 %v1178, %v1494
  %v1536 = vsub.f32 %v1179, %v1494
  %v1537 = vsub.f32 %v1180, %v1494
  %v1538 = vsub.f32 %v1181, %v1494
  %v1539 = vsub.f32 %v1182, %v1494
  %v1540 = vsub.f32 %v1183, %v1494
  %v1541 = vsub.f32 %v1184, %v1494
  %v1542 = vsub.f32 %v1185, %v1494
  %v1543 = vsub.f32 %v1186, %v1494
  %v1544 = vsub.f32 %v1187, %v1494
  %v1545 = vsub.f32 %v1188, %v1494
  %v1546 = vsub.f32 %v1189, %v1494
  %v1547 = vsub.f32 %v1190, %v1494
  %v1548 = vsub.f32 %v1191, %v1494
  %v1549 = vsub.f32 %v1192, %v1494
  %v1550 = vsub.f32 %v1193, %v1494
  %v1551 = vsub.f32 %v1194, %v1494
  %v1552 = vsub.f32 %v1195, %v1494
  %v1553 = vsub.f32 %v1196, %v1494
  %v1554 = vsub.f32 %v1197, %v1494
  %v1555 = vsub.f32 %v1198, %v1494
  %v1556 = vadd.f32 %v1498, 1e-05
  %v1557 = vrsqrt.pop %v1556
  %v1558 = vmul.f32 %v1499, %v1557
  %v1559 = vmul.f32 %v1500, %v1557
  %v1560 = vmul.f32 %v1501, %v1557
  %v1561 = vmul.f32 %v1502, %v1557
  %v1562 = vmul.f32 %v1503, %v1557
  %v1563 = vmul.f32 %v1504, %v1557
  %v1564 = vmul.f32 %v1505, %v1557
  %v1565 = vmul.f32 %v1506, %v1557
  %v1566 = vmul.f32 %v1507, %v1557
  %v1567 = vmul.f32 %v1508, %v1557
  %v1568 = vmul.f32 %v1509, %v1557
  %v1569 = vmul.f32 %v1510, %v1557
  %v1570 = vmul.f32 %v1511, %v1557
  %v1571 = vmul.f32 %v1512, %v1557
  %v1572 = vmul.f32 %v1513, %v1557
  %v1573 = vmul.f32 %v1514, %v1557
  %v1574 = vmul.f32 %v1515, %v1557
  %v1575 = vmul.f32 %v1516, %v1557
  %v1576 = vmul.f32 %v1517, %v1557
  %v1577 = vmul.f32 %v1518, %v1557
  %v1578 = vmul.f32 %v1519, %v1557
  %v1579 = vmul.f32 %v1520, %v1557
  %v1580 = vmul.f32 %v1521, %v1557
  %v1581 = vmul.f32 %v1522, %v1557
  %v1582 = vmul.f32 %v1523, %v1557
  %v1583 = vmul.f32 %v1524, %v1557
  %v1584 = vmul.f32 %v1525, %v1557
  %v1585 = vmul.f32 %v1526, %v1557
  %v1586 = vmul.f32 %v1527, %v1557
  %v1587 = vmul.f32 %v1528, %v1557
  %v1588 = vmul.f32 %v1529, %v1557
  %v1589 = vmul.f32 %v1530, %v1557
  %v1590 = vmul.f32 %v1531, %v1557
  %v1591 = vmul.f32 %v1532, %v1557
  %v1592 = vmul.f32 %v1533, %v1557
  %v1593 = vmul.f32 %v1534, %v1557
  %v1594 = vmul.f32 %v1535, %v1557
  %v1595 = vmul.f32 %v1536, %v1557
  %v1596 = vmul.f32 %v1537, %v1557
  %v1597 = vmul.f32 %v1538, %v1557
  %v1598 = vmul.f32 %v1539, %v1557
  %v1599 = vmul.f32 %v1540, %v1557
  %v1600 = vmul.f32 %v1541, %v1557
  %v1601 = vmul.f32 %v1542, %v1557
  %v1602 = vmul.f32 %v1543, %v1557
  %v1603 = vmul.f32 %v1544, %v1557
  %v1604 = vmul.f32 %v1545, %v1557
  %v1605 = vmul.f32 %v1546, %v1557
  %v1606 = vmul.f32 %v1547, %v1557
  %v1607 = vmul.f32 %v1548, %v1557
  %v1608 = vmul.f32 %v1549, %v1557
  %v1609 = vmul.f32 %v1550, %v1557
  %v1610 = vmul.f32 %v1551, %v1557
  %v1611 = vmul.f32 %v1552, %v1557
  %v1612 = vmul.f32 %v1553, %v1557
  %v1613 = vmul.f32 %v1554, %v1557
  %v1614 = vmul.f32 %v1555, %v1557
  %v1615 = vadd.f32 %v1142, %v1558
  %v1616 = vadd.f32 %v1143, %v1559
  %v1617 = vadd.f32 %v1144, %v1560
  %v1618 = vadd.f32 %v1145, %v1561
  %v1619 = vadd.f32 %v1146, %v1562
  %v1620 = vadd.f32 %v1147, %v1563
  %v1621 = vadd.f32 %v1148, %v1564
  %v1622 = vadd.f32 %v1149, %v1565
  %v1623 = vadd.f32 %v1150, %v1566
  %v1624 = vadd.f32 %v1151, %v1567
  %v1625 = vadd.f32 %v1152, %v1568
  %v1626 = vadd.f32 %v1153, %v1569
  %v1627 = vadd.f32 %v1154, %v1570
  %v1628 = vadd.f32 %v1155, %v1571
  %v1629 = vadd.f32 %v1156, %v1572
  %v1630 = vadd.f32 %v1157, %v1573
  %v1631 = vadd.f32 %v1158, %v1574
  %v1632 = vadd.f32 %v1159, %v1575
  %v1633 = vadd.f32 %v1160, %v1576
  %v1634 = vadd.f32 %v1161, %v1577
  %v1635 = vadd.f32 %v1162, %v1578
  %v1636 = vadd.f32 %v1163, %v1579
  %v1637 = vadd.f32 %v1164, %v1580
  %v1638 = vadd.f32 %v1165, %v1581
  %v1639 = vadd.f32 %v1166, %v1582
  %v1640 = vadd.f32 %v1167, %v1583
  %v1641 = vadd.f32 %v1168, %v1584
  %v1642 = vadd.f32 %v1169, %v1585
  %v1643 = vadd.f32 %v1170, %v1586
  %v1644 = vadd.f32 %v1171, %v1587
  %v1645 = vadd.f32 %v1172, %v1588
  %v1646 = vadd.f32 %v1173, %v1589
  %v1647 = vadd.f32 %v1174, %v1590
  %v1648 = vadd.f32 %v1175, %v1591
  %v1649 = vadd.f32 %v1176, %v1592
  %v1650 = vadd.f32 %v1177, %v1593
  %v1651 = vadd.f32 %v1178, %v1594
  %v1652 = vadd.f32 %v1179, %v1595
  %v1653 = vadd.f32 %v1180, %v1596
  %v1654 = vadd.f32 %v1181, %v1597
  %v1655 = vadd.f32 %v1182, %v1598
  %v1656 = vadd.f32 %v1183, %v1599
  %v1657 = vadd.f32 %v1184, %v1600
  %v1658 = vadd.f32 %v1185, %v1601
  %v1659 = vadd.f32 %v1186, %v1602
  %v1660 = vadd.f32 %v1187, %v1603
  %v1661 = vadd.f32 %v1188, %v1604
  %v1662 = vadd.f32 %v1189, %v1605
  %v1663 = vadd.f32 %v1190, %v1606
  %v1664 = vadd.f32 %v1191, %v1607
  %v1665 = vadd.f32 %v1192, %v1608
  %v1666 = vadd.f32 %v1193, %v1609
  %v1667 = vadd.f32 %v1194, %v1610
  %v1668 = vadd.f32 %v1195, %v1611
  %v1669 = vadd.f32 %v1196, %v1612
  %v1670 = vadd.f32 %v1197, %v1613
  %v1671 = vadd.f32 %v1198, %v1614
  %1672 = vst.msk [vmem:[%s3] sm:$0xff] %vm146, %v1615
  %1673 = vst.msk [vmem:[%s3 + $0x8] sm:$0xff] %vm146, %v1616
  %1674 = vst.msk [vmem:[%s3 + $0x10] sm:$0xff] %vm146, %v1617
  %1675 = vst.msk [vmem:[%s3 + $0x18] sm:$0xff] %vm146, %v1618
  %1676 = vst.msk [vmem:[%s3 + $0x20] sm:$0xff] %vm146, %v1619
  %1677 = vst.msk [vmem:[%s3 + $0x28] sm:$0xff] %vm146, %v1620
  %1678 = vst.msk [vmem:[%s3 + $0x30] sm:$0xff] %vm146, %v1621
  %1679 = vst.msk [vmem:[%s3 + $0x38] sm:$0xff] %vm146, %v1622
  %1680 = vst.msk [vmem:[%s3 + $0x40] sm:$0xff] %vm146, %v1623
  %1681 = vst.msk [vmem:[%s3 + $0x48] sm:$0xff] %vm146, %v1624
  %1682 = vst.msk [vmem:[%s3 + $0x50] sm:$0xff] %vm146, %v1625
  %1683 = vst.msk [vmem:[%s3 + $0x58] sm:$0xff] %vm146, %v1626
  %1684 = vst.msk [vmem:[%s3 + $0x60] sm:$0xff] %vm146, %v1627
  %1685 = vst.msk [vmem:[%s3 + $0x68] sm:$0xff] %vm146, %v1628
  %1686 = vst.msk [vmem:[%s3 + $0x70] sm:$0xff] %vm146, %v1629
  %1687 = vst.msk [vmem:[%s3 + $0x78] sm:$0xff] %vm146, %v1630
  %1688 = vst.msk [vmem:[%s3 + $0x80] sm:$0xff] %vm146, %v1631
  %1689 = vst.msk [vmem:[%s3 + $0x88] sm:$0xff] %vm146, %v1632
  %1690 = vst.msk [vmem:[%s3 + $0x90] sm:$0xff] %vm146, %v1633
  %1691 = vst.msk [vmem:[%s3 + $0x98] sm:$0xff] %vm146, %v1634
  %1692 = vst.msk [vmem:[%s3 + $0xa0] sm:$0xff] %vm146, %v1635
  %1693 = vst.msk [vmem:[%s3 + $0xa8] sm:$0xff] %vm146, %v1636
  %1694 = vst.msk [vmem:[%s3 + $0xb0] sm:$0xff] %vm146, %v1637
  %1695 = vst.msk [vmem:[%s3 + $0xb8] sm:$0xff] %vm146, %v1638
  %1696 = vst.msk [vmem:[%s3 + $0xc0] sm:$0xff] %vm146, %v1639
  %1697 = vst.msk [vmem:[%s3 + $0xc8] sm:$0xff] %vm146, %v1640
  %1698 = vst.msk [vmem:[%s3 + $0xd0] sm:$0xff] %vm146, %v1641
  %1699 = vst.msk [vmem:[%s3 + $0xd8] sm:$0xff] %vm146, %v1642
  %1700 = vst.msk [vmem:[%s3 + $0xe0] sm:$0xff] %vm146, %v1643
  %1701 = vst.msk [vmem:[%s3 + $0xe8] sm:$0xff] %vm146, %v1644
  %1702 = vst.msk [vmem:[%s3 + $0xf0] sm:$0xff] %vm146, %v1645
  %1703 = vst.msk [vmem:[%s3 + $0xf8] sm:$0xff] %vm146, %v1646
  %1704 = vst.msk [vmem:[%s3 + $0x100] sm:$0xff] %vm146, %v1647
  %1705 = vst.msk [vmem:[%s3 + $0x108] sm:$0xff] %vm146, %v1648
  %1706 = vst.msk [vmem:[%s3 + $0x110] sm:$0xff] %vm146, %v1649
  %1707 = vst.msk [vmem:[%s3 + $0x118] sm:$0xff] %vm146, %v1650
  %1708 = vst.msk [vmem:[%s3 + $0x120] sm:$0xff] %vm146, %v1651
  %1709 = vst.msk [vmem:[%s3 + $0x128] sm:$0xff] %vm146, %v1652
  %1710 = vst.msk [vmem:[%s3 + $0x130] sm:$0xff] %vm146, %v1653
  %1711 = vst.msk [vmem:[%s3 + $0x138] sm:$0xff] %vm146, %v1654
  %1712 = vst.msk [vmem:[%s3 + $0x140] sm:$0xff] %vm146, %v1655
  %1713 = vst.msk [vmem:[%s3 + $0x148] sm:$0xff] %vm146, %v1656
  %1714 = vst.msk [vmem:[%s3 + $0x150] sm:$0xff] %vm146, %v1657
  %1715 = vst.msk [vmem:[%s3 + $0x158] sm:$0xff] %vm146, %v1658
  %1716 = vst.msk [vmem:[%s3 + $0x160] sm:$0xff] %vm146, %v1659
  %1717 = vst.msk [vmem:[%s3 + $0x168] sm:$0xff] %vm146, %v1660
  %1718 = vst.msk [vmem:[%s3 + $0x170] sm:$0xff] %vm146, %v1661
  %1719 = vst.msk [vmem:[%s3 + $0x178] sm:$0xff] %vm146, %v1662
  %1720 = vst.msk [vmem:[%s3 + $0x180] sm:$0xff] %vm146, %v1663
  %1721 = vst.msk [vmem:[%s3 + $0x188] sm:$0xff] %vm146, %v1664
  %1722 = vst.msk [vmem:[%s3 + $0x190] sm:$0xff] %vm146, %v1665
  %1723 = vst.msk [vmem:[%s3 + $0x198] sm:$0xff] %vm146, %v1666
  %1724 = vst.msk [vmem:[%s3 + $0x1a0] sm:$0xff] %vm146, %v1667
  %1725 = vst.msk [vmem:[%s3 + $0x1a8] sm:$0xff] %vm146, %v1668
  %1726 = vst.msk [vmem:[%s3 + $0x1b0] sm:$0xff] %vm146, %v1669
  %1727 = vst.msk [vmem:[%s3 + $0x1b8] sm:$0xff] %vm146, %v1670
  %1728 = vst.msk [vmem:[%s3 + $0x1c0] sm:$0x3] %vm836, %v1671
  // Predicated region
  $region14: #{forward.8} parent=0 // pred_check
    _
  $region15: #{forward.8} parent=0 // pred_check_branch
    %1730 = sbr.rel (0) target = $region17
  $region16: #{forward.8} parent=0 // pred_region
    _
  $region17: #{forward.8} parent=0 // pred_fallthru
    _
  // Predicated region
  $region18: #{forward.8} parent=0 // pred_check
    _
  $region19: #{forward.8} parent=0 // pred_check_branch
    %1732 = sbr.rel (0) target = $region21
  $region20: #{forward.8} parent=0 // pred_region
    _
  $region21: #{forward.8} parent=0 // pred_fallthru
    _

</llo_original>
